<compile_context>
chip_gen: v6e
topology: v6e:2x2x1
jax: 0.10.0
libtpu: 0.0.40
codegen_flags: <defaults>
</compile_context>

<pallas_src>
import math

import jax
import jax.numpy as jnp
import numpy as np
from jax.experimental import pallas as pl
from jax.experimental.pallas import tpu as pltpu

THRESHOLD = 1.0


# ----------------------------------------------------------------------------
# Fused Pallas kernel: 3x (dual_exp_iir -> dense -> LIF), whole sequence
# ----------------------------------------------------------------------------
def _snn3_fused_kernel(x_ref, coeff_ref, w1_ref, w2_ref, w3_ref, out_ref):
    """x_ref: [T, BP, n_in] (BP = batch padded to 8).
    coeff_ref: [3, 4, BP, maxN] -- per layer rows (a1, a2, decay, bias),
               pre-broadcast over BP sublanes, zero-padded to maxN lanes.
    w{1,2,3}_ref: [n_in, n_out] dense weights.
    out_ref: [T, BP, n_out_last] spike outputs.
    """
    T, BP, _ = x_ref.shape

    def layer(x_ts, layer_idx, w_ref):
        n_in, n_out = w_ref.shape

        # per-layer coefficients: already full [BP, n] tiles, loaded once
        a1 = coeff_ref[layer_idx, 0][:, :n_in]
        a2 = coeff_ref[layer_idx, 1][:, :n_in]
        dec = coeff_ref[layer_idx, 2][:, :n_out]
        bias = coeff_ref[layer_idx, 3][:, :n_out]

        # (1) dual-exponential IIR synapse filter (sequential over t); state
        #     and per-t outputs stay in vregs -- no VMEM staging buffer.
        c1 = jnp.zeros((BP, n_in), jnp.float32)
        c2 = jnp.zeros((BP, n_in), jnp.float32)
        cs = []
        for t in range(T):
            c = a1 * c1 + a2 * c2 + x_ts[t]
            cs.append(c)
            c2 = c1
            c1 = c
        c_all = jnp.concatenate(cs, axis=0)          # [T*BP, n_in], 8-row aligned

        # (2) ONE dense projection for all timesteps (off the serial chain)
        i_all = jnp.dot(c_all, w_ref[...],
                        precision=jax.lax.Precision.HIGHEST,
                        preferred_element_type=jnp.float32)
        i_all = i_all.reshape(T, BP, n_out) + bias   # aligned [BP, n_out] tiles

        # (3) LIF membrane recurrence with multiplicative reset (sequential);
        #     state carried in vregs, spikes returned as per-t values.
        v = jnp.zeros((BP, n_out), jnp.float32)
        s = jnp.zeros((BP, n_out), jnp.float32)
        spikes = []
        for t in range(T):
            v = dec * v * (1.0 - s) + i_all[t]
            s = (v > THRESHOLD).astype(jnp.float32)
            spikes.append(s)
        return spikes

    x_ts = [x_ref[t] for t in range(T)]
    s1 = layer(x_ts, 0, w1_ref)
    # dropout(p=0.3) between layers is identity in inference mode
    s2 = layer(s1, 1, w2_ref)
    s3 = layer(s2, 2, w3_ref)

    # single slab store of the whole spike output
    out_ref[...] = jnp.stack(s3, axis=0)


def synthetic_snn_forward(inputs_bnt, params):
    """inputs_bnt: [batch, input_size, T] -> spikes [batch, output_size, T]."""
    w1 = params[0][2]
    w2 = params[1][2]
    w3 = params[2][2]
    B, _, T = inputs_bnt.shape
    n_out = w3.shape[1]

    BP = -(-B // 8) * 8  # pad batch to a full sublane tile
    max_n = max(w.shape[i] for w in (w1, w2, w3) for i in (0, 1))

    # time-major, batch-padded input: [T, BP, n_in]
    x = jnp.transpose(inputs_bnt, (2, 0, 1)).astype(jnp.float32)
    x = jnp.pad(x, ((0, 0), (0, BP - B), (0, 0)))

    # pack a1/a2/decay/bias of all 3 layers into one [3, 4, BP, max_n] array,
    # pre-broadcast over BP sublanes (all broadcasts hoisted out of the kernel)
    def row(p, n):
        r = jnp.broadcast_to(jnp.reshape(p.astype(jnp.float32), (1, n)), (BP, n))
        return jnp.pad(r, ((0, 0), (0, max_n - n)))

    per_layer = []
    for (a1, a2, w, b, dec) in params:
        ni, no = w.shape
        per_layer.append(jnp.stack([row(a1, ni), row(a2, ni),
                                    row(dec, no), row(b, no)]))
    coeff = jnp.stack(per_layer)                     # [3, 4, BP, max_n]

    vmem = pl.BlockSpec(memory_space=pltpu.MemorySpace.VMEM)
    out_tbn = pl.pallas_call(
        _snn3_fused_kernel,
        out_shape=jax.ShapeDtypeStruct((T, BP, n_out), jnp.float32),
        in_specs=[vmem] * 5,
        out_specs=vmem,
    )(x, coeff,
      w1.astype(jnp.float32), w2.astype(jnp.float32), w3.astype(jnp.float32))

    # drop batch padding, back to [B, output_size, T]
    return jnp.transpose(out_tbn[:, :B, :], (1, 2, 0))


# ----------------------------------------------------------------------------
# Parameter construction (deterministic, matches torch defaults/init)
# ----------------------------------------------------------------------------
def init_params(key, input_size, hidden_size, output_size, tau_m=4.0, tau_s=1.0):
    a_m = math.exp(-1.0 / tau_m)
    a_s = math.exp(-1.0 / tau_s)

    def axon_coeffs(n):
        return (jnp.full((1, n), a_m + a_s, jnp.float32),
                jnp.full((1, n), -a_m * a_s, jnp.float32))

    def linear(k, n_in, n_out):
        k1, k2 = jax.random.split(k)
        lim = 1.0 / math.sqrt(n_in)  # torch.nn.Linear default init
        w = jax.random.uniform(k1, (n_in, n_out), jnp.float32, -lim, lim)
        b = jax.random.uniform(k2, (1, n_out), jnp.float32, -lim, lim)
        return w, b

    sizes = [(input_size, hidden_size), (hidden_size, hidden_size),
             (hidden_size, output_size)]
    keys = jax.random.split(key, 3)
    params = []
    for k, (n_in, n_out) in zip(keys, sizes):
        a1, a2 = axon_coeffs(n_in)
        w, b = linear(k, n_in, n_out)
        decay = jnp.full((1, n_out), a_m, jnp.float32)
        params.append((a1, a2, w, b, decay))
    return params


# ----------------------------------------------------------------------------
# Pure-JAX reference (lax.scan) for the correctness check
# ----------------------------------------------------------------------------
def _snn_layer_ref(x_tbn, a1, a2, w, b, decay):
    B, n_in, n_out = x_tbn.shape[1], w.shape[0], w.shape[1]

    def step(carry, x_t):
        c1, c2, v, s = carry
        c = a1 * c1 + a2 * c2 + x_t
        i_t = jnp.dot(c, w, precision=jax.lax.Precision.HIGHEST,
                      preferred_element_type=jnp.float32) + b
        v_new = decay * v * (1.0 - s) + i_t
        s_new = (v_new > THRESHOLD).astype(jnp.float32)
        return (c, c1, v_new, s_new), s_new

    init = (jnp.zeros((B, n_in), jnp.float32), jnp.zeros((B, n_in), jnp.float32),
            jnp.zeros((B, n_out), jnp.float32), jnp.zeros((B, n_out), jnp.float32))
    _, out = jax.lax.scan(step, init, x_tbn)
    return out


def synthetic_snn_forward_ref(inputs_bnt, params):
    x = jnp.transpose(inputs_bnt, (2, 0, 1))
    for layer_params in params:
        x = _snn_layer_ref(x, *layer_params)
    return jnp.transpose(x, (1, 2, 0))


# ----------------------------------------------------------------------------
if __name__ == "__main__":
    batch_size = 2
    input_size = 16
    hidden_size = 32
    output_size = 8
    length = 8  # time steps

    key = jax.random.PRNGKey(0)
    k_in, k_par = jax.random.split(key)

    # synthetic input spike trains, shape [batch, input_size, t]
    inputs = (jax.random.uniform(k_in, (batch_size, input_size, length))
              < 0.3).astype(jnp.float32)

    params = init_params(k_par, input_size, hidden_size, output_size,
                         tau_m=4.0, tau_s=1.0)

    out = jax.jit(synthetic_snn_forward)(inputs, params)
    out = jax.block_until_ready(out)

    assert out.shape == (batch_size, output_size, length), out.shape
    assert out.dtype == jnp.float32
    out_np = np.asarray(out)
    assert np.all((out_np == 0.0) | (out_np == 1.0)), "outputs must be spikes"

    # correctness vs pure-JAX scan reference; matmul precision is pinned to
    # HIGHEST in both, so at most a rare hard-threshold flip is tolerated (1%)
    ref = np.asarray(jax.block_until_ready(
        jax.jit(synthetic_snn_forward_ref)(inputs, params)))
    mismatch_frac = float(np.mean(np.abs(out_np - ref)))
    assert mismatch_frac <= 0.01, f"mismatch fraction too high: {mismatch_frac}"

    print("KERNEL_OK")
</pallas_src>

<mosaic_0001>
module attributes {stable_mosaic.version = 11 : i64} {
  func.func @_snn3_fused_kernel(%arg0: memref<8x8x16xf32, #tpu.memory_space<vmem>>, %arg1: memref<3x4x8x32xf32, #tpu.memory_space<vmem>>, %arg2: memref<16x32xf32, #tpu.memory_space<vmem>>, %arg3: memref<32x32xf32, #tpu.memory_space<vmem>>, %arg4: memref<32x8xf32, #tpu.memory_space<vmem>>, %arg5: memref<8x8x8xf32, #tpu.memory_space<vmem>>) attributes {dimension_semantics = [], scalar_prefetch = 0 : i64, scratch_operands = 0 : i64, tpu.core_type = #tpu.core_type<tc>} {
    %c0 = arith.constant 0 : index
    %c0_0 = arith.constant 0 : index
    %c0_1 = arith.constant 0 : index
    %0 = vector.load %arg0[%c0, %c0_0, %c0_1] : memref<8x8x16xf32, #tpu.memory_space<vmem>>, vector<1x8x16xf32>
    %1 = vector.shape_cast %0 : vector<1x8x16xf32> to vector<8x16xf32>
    %c1 = arith.constant 1 : index
    %c0_2 = arith.constant 0 : index
    %c0_3 = arith.constant 0 : index
    %2 = vector.load %arg0[%c1, %c0_2, %c0_3] : memref<8x8x16xf32, #tpu.memory_space<vmem>>, vector<1x8x16xf32>
    %3 = vector.shape_cast %2 : vector<1x8x16xf32> to vector<8x16xf32>
    %c2 = arith.constant 2 : index
    %c0_4 = arith.constant 0 : index
    %c0_5 = arith.constant 0 : index
    %4 = vector.load %arg0[%c2, %c0_4, %c0_5] : memref<8x8x16xf32, #tpu.memory_space<vmem>>, vector<1x8x16xf32>
    %5 = vector.shape_cast %4 : vector<1x8x16xf32> to vector<8x16xf32>
    %c3 = arith.constant 3 : index
    %c0_6 = arith.constant 0 : index
    %c0_7 = arith.constant 0 : index
    %6 = vector.load %arg0[%c3, %c0_6, %c0_7] : memref<8x8x16xf32, #tpu.memory_space<vmem>>, vector<1x8x16xf32>
    %7 = vector.shape_cast %6 : vector<1x8x16xf32> to vector<8x16xf32>
    %c4 = arith.constant 4 : index
    %c0_8 = arith.constant 0 : index
    %c0_9 = arith.constant 0 : index
    %8 = vector.load %arg0[%c4, %c0_8, %c0_9] : memref<8x8x16xf32, #tpu.memory_space<vmem>>, vector<1x8x16xf32>
    %9 = vector.shape_cast %8 : vector<1x8x16xf32> to vector<8x16xf32>
    %c5 = arith.constant 5 : index
    %c0_10 = arith.constant 0 : index
    %c0_11 = arith.constant 0 : index
    %10 = vector.load %arg0[%c5, %c0_10, %c0_11] : memref<8x8x16xf32, #tpu.memory_space<vmem>>, vector<1x8x16xf32>
    %11 = vector.shape_cast %10 : vector<1x8x16xf32> to vector<8x16xf32>
    %c6 = arith.constant 6 : index
    %c0_12 = arith.constant 0 : index
    %c0_13 = arith.constant 0 : index
    %12 = vector.load %arg0[%c6, %c0_12, %c0_13] : memref<8x8x16xf32, #tpu.memory_space<vmem>>, vector<1x8x16xf32>
    %13 = vector.shape_cast %12 : vector<1x8x16xf32> to vector<8x16xf32>
    %c7 = arith.constant 7 : index
    %c0_14 = arith.constant 0 : index
    %c0_15 = arith.constant 0 : index
    %14 = vector.load %arg0[%c7, %c0_14, %c0_15] : memref<8x8x16xf32, #tpu.memory_space<vmem>>, vector<1x8x16xf32>
    %15 = vector.shape_cast %14 : vector<1x8x16xf32> to vector<8x16xf32>
    %c0_16 = arith.constant 0 : index
    %c0_17 = arith.constant 0 : index
    %c0_18 = arith.constant 0 : index
    %c0_19 = arith.constant 0 : index
    %16 = vector.load %arg1[%c0_16, %c0_17, %c0_18, %c0_19] : memref<3x4x8x32xf32, #tpu.memory_space<vmem>>, vector<1x1x8x32xf32>
    %17 = vector.shape_cast %16 : vector<1x1x8x32xf32> to vector<8x32xf32>
    %18 = vector.extract_strided_slice %17 {offsets = [0, 0], sizes = [8, 16], strides = [1, 1]} : vector<8x32xf32> to vector<8x16xf32>
    %c0_20 = arith.constant 0 : index
    %c1_21 = arith.constant 1 : index
    %c0_22 = arith.constant 0 : index
    %c0_23 = arith.constant 0 : index
    %19 = vector.load %arg1[%c0_20, %c1_21, %c0_22, %c0_23] : memref<3x4x8x32xf32, #tpu.memory_space<vmem>>, vector<1x1x8x32xf32>
    %20 = vector.shape_cast %19 : vector<1x1x8x32xf32> to vector<8x32xf32>
    %21 = vector.extract_strided_slice %20 {offsets = [0, 0], sizes = [8, 16], strides = [1, 1]} : vector<8x32xf32> to vector<8x16xf32>
    %c0_24 = arith.constant 0 : index
    %c2_25 = arith.constant 2 : index
    %c0_26 = arith.constant 0 : index
    %c0_27 = arith.constant 0 : index
    %22 = vector.load %arg1[%c0_24, %c2_25, %c0_26, %c0_27] : memref<3x4x8x32xf32, #tpu.memory_space<vmem>>, vector<1x1x8x32xf32>
    %23 = vector.shape_cast %22 : vector<1x1x8x32xf32> to vector<8x32xf32>
    %c0_28 = arith.constant 0 : index
    %c3_29 = arith.constant 3 : index
    %c0_30 = arith.constant 0 : index
    %c0_31 = arith.constant 0 : index
    %24 = vector.load %arg1[%c0_28, %c3_29, %c0_30, %c0_31] : memref<3x4x8x32xf32, #tpu.memory_space<vmem>>, vector<1x1x8x32xf32>
    %25 = vector.shape_cast %24 : vector<1x1x8x32xf32> to vector<8x32xf32>
    %cst = arith.constant 0.000000e+00 : f32
    %26 = vector.broadcast %cst : f32 to vector<8x16xf32>
    %cst_32 = arith.constant 0.000000e+00 : f32
    %27 = vector.broadcast %cst_32 : f32 to vector<8x16xf32>
    %28 = arith.mulf %18, %26 : vector<8x16xf32>
    %29 = arith.mulf %21, %27 : vector<8x16xf32>
    %30 = arith.addf %28, %29 : vector<8x16xf32>
    %31 = arith.addf %30, %1 : vector<8x16xf32>
    %32 = arith.mulf %18, %31 : vector<8x16xf32>
    %33 = arith.mulf %21, %26 : vector<8x16xf32>
    %34 = arith.addf %32, %33 : vector<8x16xf32>
    %35 = arith.addf %34, %3 : vector<8x16xf32>
    %36 = arith.mulf %18, %35 : vector<8x16xf32>
    %37 = arith.mulf %21, %31 : vector<8x16xf32>
    %38 = arith.addf %36, %37 : vector<8x16xf32>
    %39 = arith.addf %38, %5 : vector<8x16xf32>
    %40 = arith.mulf %18, %39 : vector<8x16xf32>
    %41 = arith.mulf %21, %35 : vector<8x16xf32>
    %42 = arith.addf %40, %41 : vector<8x16xf32>
    %43 = arith.addf %42, %7 : vector<8x16xf32>
    %44 = arith.mulf %18, %43 : vector<8x16xf32>
    %45 = arith.mulf %21, %39 : vector<8x16xf32>
    %46 = arith.addf %44, %45 : vector<8x16xf32>
    %47 = arith.addf %46, %9 : vector<8x16xf32>
    %48 = arith.mulf %18, %47 : vector<8x16xf32>
    %49 = arith.mulf %21, %43 : vector<8x16xf32>
    %50 = arith.addf %48, %49 : vector<8x16xf32>
    %51 = arith.addf %50, %11 : vector<8x16xf32>
    %52 = arith.mulf %18, %51 : vector<8x16xf32>
    %53 = arith.mulf %21, %47 : vector<8x16xf32>
    %54 = arith.addf %52, %53 : vector<8x16xf32>
    %55 = arith.addf %54, %13 : vector<8x16xf32>
    %56 = arith.mulf %18, %55 : vector<8x16xf32>
    %57 = arith.mulf %21, %51 : vector<8x16xf32>
    %58 = arith.addf %56, %57 : vector<8x16xf32>
    %59 = arith.addf %58, %15 : vector<8x16xf32>
    %60 = tpu.concatenate %31, %35, %39, %43, %47, %51, %55, %59 in 0 : vector<8x16xf32>, vector<8x16xf32>, vector<8x16xf32>, vector<8x16xf32>, vector<8x16xf32>, vector<8x16xf32>, vector<8x16xf32>, vector<8x16xf32> -> vector<64x16xf32>
    %c0_33 = arith.constant 0 : index
    %c0_34 = arith.constant 0 : index
    %61 = vector.load %arg2[%c0_33, %c0_34] : memref<16x32xf32, #tpu.memory_space<vmem>>, vector<16x32xf32>
    %cst_35 = arith.constant dense<0.000000e+00> : vector<64x32xf32>
    %62 = tpu.matmul %60, %61, %cst_35 {dimension_numbers = #tpu.dot_dimension_numbers<[1], [0], [0], [1], [0, 0, 1, 1], [], []>, precision = #tpu.contract_precision<fp32>} : vector<64x16xf32>, vector<16x32xf32>, vector<64x32xf32> -> vector<64x32xf32>
    %63 = vector.shape_cast %62 : vector<64x32xf32> to vector<8x8x32xf32>
    %64 = vector.shape_cast %25 : vector<8x32xf32> to vector<1x8x32xf32>
    %65 = vector.broadcast %64 : vector<1x8x32xf32> to vector<8x8x32xf32>
    %66 = arith.addf %63, %65 : vector<8x8x32xf32>
    %cst_36 = arith.constant 0.000000e+00 : f32
    %67 = vector.broadcast %cst_36 : f32 to vector<8x32xf32>
    %cst_37 = arith.constant 0.000000e+00 : f32
    %68 = vector.broadcast %cst_37 : f32 to vector<8x32xf32>
    %69 = arith.mulf %23, %67 : vector<8x32xf32>
    %cst_38 = arith.constant 1.000000e+00 : f32
    %70 = vector.broadcast %cst_38 : f32 to vector<8x32xf32>
    %71 = arith.subf %70, %68 : vector<8x32xf32>
    %72 = arith.mulf %69, %71 : vector<8x32xf32>
    %73 = vector.extract_strided_slice %66 {offsets = [0, 0, 0], sizes = [1, 8, 32], strides = [1, 1, 1]} : vector<8x8x32xf32> to vector<1x8x32xf32>
    %74 = vector.shape_cast %73 : vector<1x8x32xf32> to vector<8x32xf32>
    %75 = arith.addf %72, %74 : vector<8x32xf32>
    %cst_39 = arith.constant 1.000000e+00 : f32
    %76 = vector.broadcast %cst_39 : f32 to vector<8x32xf32>
    %77 = arith.cmpf ogt, %75, %76 : vector<8x32xf32>
    %78 = arith.extui %77 : vector<8x32xi1> to vector<8x32xi32>
    %79 = arith.sitofp %78 : vector<8x32xi32> to vector<8x32xf32>
    %80 = arith.mulf %23, %75 : vector<8x32xf32>
    %cst_40 = arith.constant 1.000000e+00 : f32
    %81 = vector.broadcast %cst_40 : f32 to vector<8x32xf32>
    %82 = arith.subf %81, %79 : vector<8x32xf32>
    %83 = arith.mulf %80, %82 : vector<8x32xf32>
    %84 = vector.extract_strided_slice %66 {offsets = [1, 0, 0], sizes = [1, 8, 32], strides = [1, 1, 1]} : vector<8x8x32xf32> to vector<1x8x32xf32>
    %85 = vector.shape_cast %84 : vector<1x8x32xf32> to vector<8x32xf32>
    %86 = arith.addf %83, %85 : vector<8x32xf32>
    %cst_41 = arith.constant 1.000000e+00 : f32
    %87 = vector.broadcast %cst_41 : f32 to vector<8x32xf32>
    %88 = arith.cmpf ogt, %86, %87 : vector<8x32xf32>
    %89 = arith.extui %88 : vector<8x32xi1> to vector<8x32xi32>
    %90 = arith.sitofp %89 : vector<8x32xi32> to vector<8x32xf32>
    %91 = arith.mulf %23, %86 : vector<8x32xf32>
    %cst_42 = arith.constant 1.000000e+00 : f32
    %92 = vector.broadcast %cst_42 : f32 to vector<8x32xf32>
    %93 = arith.subf %92, %90 : vector<8x32xf32>
    %94 = arith.mulf %91, %93 : vector<8x32xf32>
    %95 = vector.extract_strided_slice %66 {offsets = [2, 0, 0], sizes = [1, 8, 32], strides = [1, 1, 1]} : vector<8x8x32xf32> to vector<1x8x32xf32>
    %96 = vector.shape_cast %95 : vector<1x8x32xf32> to vector<8x32xf32>
    %97 = arith.addf %94, %96 : vector<8x32xf32>
    %cst_43 = arith.constant 1.000000e+00 : f32
    %98 = vector.broadcast %cst_43 : f32 to vector<8x32xf32>
    %99 = arith.cmpf ogt, %97, %98 : vector<8x32xf32>
    %100 = arith.extui %99 : vector<8x32xi1> to vector<8x32xi32>
    %101 = arith.sitofp %100 : vector<8x32xi32> to vector<8x32xf32>
    %102 = arith.mulf %23, %97 : vector<8x32xf32>
    %cst_44 = arith.constant 1.000000e+00 : f32
    %103 = vector.broadcast %cst_44 : f32 to vector<8x32xf32>
    %104 = arith.subf %103, %101 : vector<8x32xf32>
    %105 = arith.mulf %102, %104 : vector<8x32xf32>
    %106 = vector.extract_strided_slice %66 {offsets = [3, 0, 0], sizes = [1, 8, 32], strides = [1, 1, 1]} : vector<8x8x32xf32> to vector<1x8x32xf32>
    %107 = vector.shape_cast %106 : vector<1x8x32xf32> to vector<8x32xf32>
    %108 = arith.addf %105, %107 : vector<8x32xf32>
    %cst_45 = arith.constant 1.000000e+00 : f32
    %109 = vector.broadcast %cst_45 : f32 to vector<8x32xf32>
    %110 = arith.cmpf ogt, %108, %109 : vector<8x32xf32>
    %111 = arith.extui %110 : vector<8x32xi1> to vector<8x32xi32>
    %112 = arith.sitofp %111 : vector<8x32xi32> to vector<8x32xf32>
    %113 = arith.mulf %23, %108 : vector<8x32xf32>
    %cst_46 = arith.constant 1.000000e+00 : f32
    %114 = vector.broadcast %cst_46 : f32 to vector<8x32xf32>
    %115 = arith.subf %114, %112 : vector<8x32xf32>
    %116 = arith.mulf %113, %115 : vector<8x32xf32>
    %117 = vector.extract_strided_slice %66 {offsets = [4, 0, 0], sizes = [1, 8, 32], strides = [1, 1, 1]} : vector<8x8x32xf32> to vector<1x8x32xf32>
    %118 = vector.shape_cast %117 : vector<1x8x32xf32> to vector<8x32xf32>
    %119 = arith.addf %116, %118 : vector<8x32xf32>
    %cst_47 = arith.constant 1.000000e+00 : f32
    %120 = vector.broadcast %cst_47 : f32 to vector<8x32xf32>
    %121 = arith.cmpf ogt, %119, %120 : vector<8x32xf32>
    %122 = arith.extui %121 : vector<8x32xi1> to vector<8x32xi32>
    %123 = arith.sitofp %122 : vector<8x32xi32> to vector<8x32xf32>
    %124 = arith.mulf %23, %119 : vector<8x32xf32>
    %cst_48 = arith.constant 1.000000e+00 : f32
    %125 = vector.broadcast %cst_48 : f32 to vector<8x32xf32>
    %126 = arith.subf %125, %123 : vector<8x32xf32>
    %127 = arith.mulf %124, %126 : vector<8x32xf32>
    %128 = vector.extract_strided_slice %66 {offsets = [5, 0, 0], sizes = [1, 8, 32], strides = [1, 1, 1]} : vector<8x8x32xf32> to vector<1x8x32xf32>
    %129 = vector.shape_cast %128 : vector<1x8x32xf32> to vector<8x32xf32>
    %130 = arith.addf %127, %129 : vector<8x32xf32>
    %cst_49 = arith.constant 1.000000e+00 : f32
    %131 = vector.broadcast %cst_49 : f32 to vector<8x32xf32>
    %132 = arith.cmpf ogt, %130, %131 : vector<8x32xf32>
    %133 = arith.extui %132 : vector<8x32xi1> to vector<8x32xi32>
    %134 = arith.sitofp %133 : vector<8x32xi32> to vector<8x32xf32>
    %135 = arith.mulf %23, %130 : vector<8x32xf32>
    %cst_50 = arith.constant 1.000000e+00 : f32
    %136 = vector.broadcast %cst_50 : f32 to vector<8x32xf32>
    %137 = arith.subf %136, %134 : vector<8x32xf32>
    %138 = arith.mulf %135, %137 : vector<8x32xf32>
    %139 = vector.extract_strided_slice %66 {offsets = [6, 0, 0], sizes = [1, 8, 32], strides = [1, 1, 1]} : vector<8x8x32xf32> to vector<1x8x32xf32>
    %140 = vector.shape_cast %139 : vector<1x8x32xf32> to vector<8x32xf32>
    %141 = arith.addf %138, %140 : vector<8x32xf32>
    %cst_51 = arith.constant 1.000000e+00 : f32
    %142 = vector.broadcast %cst_51 : f32 to vector<8x32xf32>
    %143 = arith.cmpf ogt, %141, %142 : vector<8x32xf32>
    %144 = arith.extui %143 : vector<8x32xi1> to vector<8x32xi32>
    %145 = arith.sitofp %144 : vector<8x32xi32> to vector<8x32xf32>
    %146 = arith.mulf %23, %141 : vector<8x32xf32>
    %cst_52 = arith.constant 1.000000e+00 : f32
    %147 = vector.broadcast %cst_52 : f32 to vector<8x32xf32>
    %148 = arith.subf %147, %145 : vector<8x32xf32>
    %149 = arith.mulf %146, %148 : vector<8x32xf32>
    %150 = vector.extract_strided_slice %66 {offsets = [7, 0, 0], sizes = [1, 8, 32], strides = [1, 1, 1]} : vector<8x8x32xf32> to vector<1x8x32xf32>
    %151 = vector.shape_cast %150 : vector<1x8x32xf32> to vector<8x32xf32>
    %152 = arith.addf %149, %151 : vector<8x32xf32>
    %cst_53 = arith.constant 1.000000e+00 : f32
    %153 = vector.broadcast %cst_53 : f32 to vector<8x32xf32>
    %154 = arith.cmpf ogt, %152, %153 : vector<8x32xf32>
    %155 = arith.extui %154 : vector<8x32xi1> to vector<8x32xi32>
    %156 = arith.sitofp %155 : vector<8x32xi32> to vector<8x32xf32>
    %c1_54 = arith.constant 1 : index
    %c0_55 = arith.constant 0 : index
    %c0_56 = arith.constant 0 : index
    %c0_57 = arith.constant 0 : index
    %157 = vector.load %arg1[%c1_54, %c0_55, %c0_56, %c0_57] : memref<3x4x8x32xf32, #tpu.memory_space<vmem>>, vector<1x1x8x32xf32>
    %158 = vector.shape_cast %157 : vector<1x1x8x32xf32> to vector<8x32xf32>
    %c1_58 = arith.constant 1 : index
    %c1_59 = arith.constant 1 : index
    %c0_60 = arith.constant 0 : index
    %c0_61 = arith.constant 0 : index
    %159 = vector.load %arg1[%c1_58, %c1_59, %c0_60, %c0_61] : memref<3x4x8x32xf32, #tpu.memory_space<vmem>>, vector<1x1x8x32xf32>
    %160 = vector.shape_cast %159 : vector<1x1x8x32xf32> to vector<8x32xf32>
    %c1_62 = arith.constant 1 : index
    %c2_63 = arith.constant 2 : index
    %c0_64 = arith.constant 0 : index
    %c0_65 = arith.constant 0 : index
    %161 = vector.load %arg1[%c1_62, %c2_63, %c0_64, %c0_65] : memref<3x4x8x32xf32, #tpu.memory_space<vmem>>, vector<1x1x8x32xf32>
    %162 = vector.shape_cast %161 : vector<1x1x8x32xf32> to vector<8x32xf32>
    %c1_66 = arith.constant 1 : index
    %c3_67 = arith.constant 3 : index
    %c0_68 = arith.constant 0 : index
    %c0_69 = arith.constant 0 : index
    %163 = vector.load %arg1[%c1_66, %c3_67, %c0_68, %c0_69] : memref<3x4x8x32xf32, #tpu.memory_space<vmem>>, vector<1x1x8x32xf32>
    %164 = vector.shape_cast %163 : vector<1x1x8x32xf32> to vector<8x32xf32>
    %cst_70 = arith.constant 0.000000e+00 : f32
    %165 = vector.broadcast %cst_70 : f32 to vector<8x32xf32>
    %cst_71 = arith.constant 0.000000e+00 : f32
    %166 = vector.broadcast %cst_71 : f32 to vector<8x32xf32>
    %167 = arith.mulf %158, %165 : vector<8x32xf32>
    %168 = arith.mulf %160, %166 : vector<8x32xf32>
    %169 = arith.addf %167, %168 : vector<8x32xf32>
    %170 = arith.addf %169, %79 : vector<8x32xf32>
    %171 = arith.mulf %158, %170 : vector<8x32xf32>
    %172 = arith.mulf %160, %165 : vector<8x32xf32>
    %173 = arith.addf %171, %172 : vector<8x32xf32>
    %174 = arith.addf %173, %90 : vector<8x32xf32>
    %175 = arith.mulf %158, %174 : vector<8x32xf32>
    %176 = arith.mulf %160, %170 : vector<8x32xf32>
    %177 = arith.addf %175, %176 : vector<8x32xf32>
    %178 = arith.addf %177, %101 : vector<8x32xf32>
    %179 = arith.mulf %158, %178 : vector<8x32xf32>
    %180 = arith.mulf %160, %174 : vector<8x32xf32>
    %181 = arith.addf %179, %180 : vector<8x32xf32>
    %182 = arith.addf %181, %112 : vector<8x32xf32>
    %183 = arith.mulf %158, %182 : vector<8x32xf32>
    %184 = arith.mulf %160, %178 : vector<8x32xf32>
    %185 = arith.addf %183, %184 : vector<8x32xf32>
    %186 = arith.addf %185, %123 : vector<8x32xf32>
    %187 = arith.mulf %158, %186 : vector<8x32xf32>
    %188 = arith.mulf %160, %182 : vector<8x32xf32>
    %189 = arith.addf %187, %188 : vector<8x32xf32>
    %190 = arith.addf %189, %134 : vector<8x32xf32>
    %191 = arith.mulf %158, %190 : vector<8x32xf32>
    %192 = arith.mulf %160, %186 : vector<8x32xf32>
    %193 = arith.addf %191, %192 : vector<8x32xf32>
    %194 = arith.addf %193, %145 : vector<8x32xf32>
    %195 = arith.mulf %158, %194 : vector<8x32xf32>
    %196 = arith.mulf %160, %190 : vector<8x32xf32>
    %197 = arith.addf %195, %196 : vector<8x32xf32>
    %198 = arith.addf %197, %156 : vector<8x32xf32>
    %199 = tpu.concatenate %170, %174, %178, %182, %186, %190, %194, %198 in 0 : vector<8x32xf32>, vector<8x32xf32>, vector<8x32xf32>, vector<8x32xf32>, vector<8x32xf32>, vector<8x32xf32>, vector<8x32xf32>, vector<8x32xf32> -> vector<64x32xf32>
    %c0_72 = arith.constant 0 : index
    %c0_73 = arith.constant 0 : index
    %200 = vector.load %arg3[%c0_72, %c0_73] : memref<32x32xf32, #tpu.memory_space<vmem>>, vector<32x32xf32>
    %cst_74 = arith.constant dense<0.000000e+00> : vector<64x32xf32>
    %201 = tpu.matmul %199, %200, %cst_74 {dimension_numbers = #tpu.dot_dimension_numbers<[1], [0], [0], [1], [0, 0, 1, 1], [], []>, precision = #tpu.contract_precision<fp32>} : vector<64x32xf32>, vector<32x32xf32>, vector<64x32xf32> -> vector<64x32xf32>
    %202 = vector.shape_cast %201 : vector<64x32xf32> to vector<8x8x32xf32>
    %203 = vector.shape_cast %164 : vector<8x32xf32> to vector<1x8x32xf32>
    %204 = vector.broadcast %203 : vector<1x8x32xf32> to vector<8x8x32xf32>
    %205 = arith.addf %202, %204 : vector<8x8x32xf32>
    %cst_75 = arith.constant 0.000000e+00 : f32
    %206 = vector.broadcast %cst_75 : f32 to vector<8x32xf32>
    %cst_76 = arith.constant 0.000000e+00 : f32
    %207 = vector.broadcast %cst_76 : f32 to vector<8x32xf32>
    %208 = arith.mulf %162, %206 : vector<8x32xf32>
    %cst_77 = arith.constant 1.000000e+00 : f32
    %209 = vector.broadcast %cst_77 : f32 to vector<8x32xf32>
    %210 = arith.subf %209, %207 : vector<8x32xf32>
    %211 = arith.mulf %208, %210 : vector<8x32xf32>
    %212 = vector.extract_strided_slice %205 {offsets = [0, 0, 0], sizes = [1, 8, 32], strides = [1, 1, 1]} : vector<8x8x32xf32> to vector<1x8x32xf32>
    %213 = vector.shape_cast %212 : vector<1x8x32xf32> to vector<8x32xf32>
    %214 = arith.addf %211, %213 : vector<8x32xf32>
    %cst_78 = arith.constant 1.000000e+00 : f32
    %215 = vector.broadcast %cst_78 : f32 to vector<8x32xf32>
    %216 = arith.cmpf ogt, %214, %215 : vector<8x32xf32>
    %217 = arith.extui %216 : vector<8x32xi1> to vector<8x32xi32>
    %218 = arith.sitofp %217 : vector<8x32xi32> to vector<8x32xf32>
    %219 = arith.mulf %162, %214 : vector<8x32xf32>
    %cst_79 = arith.constant 1.000000e+00 : f32
    %220 = vector.broadcast %cst_79 : f32 to vector<8x32xf32>
    %221 = arith.subf %220, %218 : vector<8x32xf32>
    %222 = arith.mulf %219, %221 : vector<8x32xf32>
    %223 = vector.extract_strided_slice %205 {offsets = [1, 0, 0], sizes = [1, 8, 32], strides = [1, 1, 1]} : vector<8x8x32xf32> to vector<1x8x32xf32>
    %224 = vector.shape_cast %223 : vector<1x8x32xf32> to vector<8x32xf32>
    %225 = arith.addf %222, %224 : vector<8x32xf32>
    %cst_80 = arith.constant 1.000000e+00 : f32
    %226 = vector.broadcast %cst_80 : f32 to vector<8x32xf32>
    %227 = arith.cmpf ogt, %225, %226 : vector<8x32xf32>
    %228 = arith.extui %227 : vector<8x32xi1> to vector<8x32xi32>
    %229 = arith.sitofp %228 : vector<8x32xi32> to vector<8x32xf32>
    %230 = arith.mulf %162, %225 : vector<8x32xf32>
    %cst_81 = arith.constant 1.000000e+00 : f32
    %231 = vector.broadcast %cst_81 : f32 to vector<8x32xf32>
    %232 = arith.subf %231, %229 : vector<8x32xf32>
    %233 = arith.mulf %230, %232 : vector<8x32xf32>
    %234 = vector.extract_strided_slice %205 {offsets = [2, 0, 0], sizes = [1, 8, 32], strides = [1, 1, 1]} : vector<8x8x32xf32> to vector<1x8x32xf32>
    %235 = vector.shape_cast %234 : vector<1x8x32xf32> to vector<8x32xf32>
    %236 = arith.addf %233, %235 : vector<8x32xf32>
    %cst_82 = arith.constant 1.000000e+00 : f32
    %237 = vector.broadcast %cst_82 : f32 to vector<8x32xf32>
    %238 = arith.cmpf ogt, %236, %237 : vector<8x32xf32>
    %239 = arith.extui %238 : vector<8x32xi1> to vector<8x32xi32>
    %240 = arith.sitofp %239 : vector<8x32xi32> to vector<8x32xf32>
    %241 = arith.mulf %162, %236 : vector<8x32xf32>
    %cst_83 = arith.constant 1.000000e+00 : f32
    %242 = vector.broadcast %cst_83 : f32 to vector<8x32xf32>
    %243 = arith.subf %242, %240 : vector<8x32xf32>
    %244 = arith.mulf %241, %243 : vector<8x32xf32>
    %245 = vector.extract_strided_slice %205 {offsets = [3, 0, 0], sizes = [1, 8, 32], strides = [1, 1, 1]} : vector<8x8x32xf32> to vector<1x8x32xf32>
    %246 = vector.shape_cast %245 : vector<1x8x32xf32> to vector<8x32xf32>
    %247 = arith.addf %244, %246 : vector<8x32xf32>
    %cst_84 = arith.constant 1.000000e+00 : f32
    %248 = vector.broadcast %cst_84 : f32 to vector<8x32xf32>
    %249 = arith.cmpf ogt, %247, %248 : vector<8x32xf32>
    %250 = arith.extui %249 : vector<8x32xi1> to vector<8x32xi32>
    %251 = arith.sitofp %250 : vector<8x32xi32> to vector<8x32xf32>
    %252 = arith.mulf %162, %247 : vector<8x32xf32>
    %cst_85 = arith.constant 1.000000e+00 : f32
    %253 = vector.broadcast %cst_85 : f32 to vector<8x32xf32>
    %254 = arith.subf %253, %251 : vector<8x32xf32>
    %255 = arith.mulf %252, %254 : vector<8x32xf32>
    %256 = vector.extract_strided_slice %205 {offsets = [4, 0, 0], sizes = [1, 8, 32], strides = [1, 1, 1]} : vector<8x8x32xf32> to vector<1x8x32xf32>
    %257 = vector.shape_cast %256 : vector<1x8x32xf32> to vector<8x32xf32>
    %258 = arith.addf %255, %257 : vector<8x32xf32>
    %cst_86 = arith.constant 1.000000e+00 : f32
    %259 = vector.broadcast %cst_86 : f32 to vector<8x32xf32>
    %260 = arith.cmpf ogt, %258, %259 : vector<8x32xf32>
    %261 = arith.extui %260 : vector<8x32xi1> to vector<8x32xi32>
    %262 = arith.sitofp %261 : vector<8x32xi32> to vector<8x32xf32>
    %263 = arith.mulf %162, %258 : vector<8x32xf32>
    %cst_87 = arith.constant 1.000000e+00 : f32
    %264 = vector.broadcast %cst_87 : f32 to vector<8x32xf32>
    %265 = arith.subf %264, %262 : vector<8x32xf32>
    %266 = arith.mulf %263, %265 : vector<8x32xf32>
    %267 = vector.extract_strided_slice %205 {offsets = [5, 0, 0], sizes = [1, 8, 32], strides = [1, 1, 1]} : vector<8x8x32xf32> to vector<1x8x32xf32>
    %268 = vector.shape_cast %267 : vector<1x8x32xf32> to vector<8x32xf32>
    %269 = arith.addf %266, %268 : vector<8x32xf32>
    %cst_88 = arith.constant 1.000000e+00 : f32
    %270 = vector.broadcast %cst_88 : f32 to vector<8x32xf32>
    %271 = arith.cmpf ogt, %269, %270 : vector<8x32xf32>
    %272 = arith.extui %271 : vector<8x32xi1> to vector<8x32xi32>
    %273 = arith.sitofp %272 : vector<8x32xi32> to vector<8x32xf32>
    %274 = arith.mulf %162, %269 : vector<8x32xf32>
    %cst_89 = arith.constant 1.000000e+00 : f32
    %275 = vector.broadcast %cst_89 : f32 to vector<8x32xf32>
    %276 = arith.subf %275, %273 : vector<8x32xf32>
    %277 = arith.mulf %274, %276 : vector<8x32xf32>
    %278 = vector.extract_strided_slice %205 {offsets = [6, 0, 0], sizes = [1, 8, 32], strides = [1, 1, 1]} : vector<8x8x32xf32> to vector<1x8x32xf32>
    %279 = vector.shape_cast %278 : vector<1x8x32xf32> to vector<8x32xf32>
    %280 = arith.addf %277, %279 : vector<8x32xf32>
    %cst_90 = arith.constant 1.000000e+00 : f32
    %281 = vector.broadcast %cst_90 : f32 to vector<8x32xf32>
    %282 = arith.cmpf ogt, %280, %281 : vector<8x32xf32>
    %283 = arith.extui %282 : vector<8x32xi1> to vector<8x32xi32>
    %284 = arith.sitofp %283 : vector<8x32xi32> to vector<8x32xf32>
    %285 = arith.mulf %162, %280 : vector<8x32xf32>
    %cst_91 = arith.constant 1.000000e+00 : f32
    %286 = vector.broadcast %cst_91 : f32 to vector<8x32xf32>
    %287 = arith.subf %286, %284 : vector<8x32xf32>
    %288 = arith.mulf %285, %287 : vector<8x32xf32>
    %289 = vector.extract_strided_slice %205 {offsets = [7, 0, 0], sizes = [1, 8, 32], strides = [1, 1, 1]} : vector<8x8x32xf32> to vector<1x8x32xf32>
    %290 = vector.shape_cast %289 : vector<1x8x32xf32> to vector<8x32xf32>
    %291 = arith.addf %288, %290 : vector<8x32xf32>
    %cst_92 = arith.constant 1.000000e+00 : f32
    %292 = vector.broadcast %cst_92 : f32 to vector<8x32xf32>
    %293 = arith.cmpf ogt, %291, %292 : vector<8x32xf32>
    %294 = arith.extui %293 : vector<8x32xi1> to vector<8x32xi32>
    %295 = arith.sitofp %294 : vector<8x32xi32> to vector<8x32xf32>
    %c2_93 = arith.constant 2 : index
    %c0_94 = arith.constant 0 : index
    %c0_95 = arith.constant 0 : index
    %c0_96 = arith.constant 0 : index
    %296 = vector.load %arg1[%c2_93, %c0_94, %c0_95, %c0_96] : memref<3x4x8x32xf32, #tpu.memory_space<vmem>>, vector<1x1x8x32xf32>
    %297 = vector.shape_cast %296 : vector<1x1x8x32xf32> to vector<8x32xf32>
    %c2_97 = arith.constant 2 : index
    %c1_98 = arith.constant 1 : index
    %c0_99 = arith.constant 0 : index
    %c0_100 = arith.constant 0 : index
    %298 = vector.load %arg1[%c2_97, %c1_98, %c0_99, %c0_100] : memref<3x4x8x32xf32, #tpu.memory_space<vmem>>, vector<1x1x8x32xf32>
    %299 = vector.shape_cast %298 : vector<1x1x8x32xf32> to vector<8x32xf32>
    %c2_101 = arith.constant 2 : index
    %c2_102 = arith.constant 2 : index
    %c0_103 = arith.constant 0 : index
    %c0_104 = arith.constant 0 : index
    %300 = vector.load %arg1[%c2_101, %c2_102, %c0_103, %c0_104] : memref<3x4x8x32xf32, #tpu.memory_space<vmem>>, vector<1x1x8x32xf32>
    %301 = vector.shape_cast %300 : vector<1x1x8x32xf32> to vector<8x32xf32>
    %302 = vector.extract_strided_slice %301 {offsets = [0, 0], sizes = [8, 8], strides = [1, 1]} : vector<8x32xf32> to vector<8x8xf32>
    %c2_105 = arith.constant 2 : index
    %c3_106 = arith.constant 3 : index
    %c0_107 = arith.constant 0 : index
    %c0_108 = arith.constant 0 : index
    %303 = vector.load %arg1[%c2_105, %c3_106, %c0_107, %c0_108] : memref<3x4x8x32xf32, #tpu.memory_space<vmem>>, vector<1x1x8x32xf32>
    %304 = vector.shape_cast %303 : vector<1x1x8x32xf32> to vector<8x32xf32>
    %305 = vector.extract_strided_slice %304 {offsets = [0, 0], sizes = [8, 8], strides = [1, 1]} : vector<8x32xf32> to vector<8x8xf32>
    %cst_109 = arith.constant 0.000000e+00 : f32
    %306 = vector.broadcast %cst_109 : f32 to vector<8x32xf32>
    %cst_110 = arith.constant 0.000000e+00 : f32
    %307 = vector.broadcast %cst_110 : f32 to vector<8x32xf32>
    %308 = arith.mulf %297, %306 : vector<8x32xf32>
    %309 = arith.mulf %299, %307 : vector<8x32xf32>
    %310 = arith.addf %308, %309 : vector<8x32xf32>
    %311 = arith.addf %310, %218 : vector<8x32xf32>
    %312 = arith.mulf %297, %311 : vector<8x32xf32>
    %313 = arith.mulf %299, %306 : vector<8x32xf32>
    %314 = arith.addf %312, %313 : vector<8x32xf32>
    %315 = arith.addf %314, %229 : vector<8x32xf32>
    %316 = arith.mulf %297, %315 : vector<8x32xf32>
    %317 = arith.mulf %299, %311 : vector<8x32xf32>
    %318 = arith.addf %316, %317 : vector<8x32xf32>
    %319 = arith.addf %318, %240 : vector<8x32xf32>
    %320 = arith.mulf %297, %319 : vector<8x32xf32>
    %321 = arith.mulf %299, %315 : vector<8x32xf32>
    %322 = arith.addf %320, %321 : vector<8x32xf32>
    %323 = arith.addf %322, %251 : vector<8x32xf32>
    %324 = arith.mulf %297, %323 : vector<8x32xf32>
    %325 = arith.mulf %299, %319 : vector<8x32xf32>
    %326 = arith.addf %324, %325 : vector<8x32xf32>
    %327 = arith.addf %326, %262 : vector<8x32xf32>
    %328 = arith.mulf %297, %327 : vector<8x32xf32>
    %329 = arith.mulf %299, %323 : vector<8x32xf32>
    %330 = arith.addf %328, %329 : vector<8x32xf32>
    %331 = arith.addf %330, %273 : vector<8x32xf32>
    %332 = arith.mulf %297, %331 : vector<8x32xf32>
    %333 = arith.mulf %299, %327 : vector<8x32xf32>
    %334 = arith.addf %332, %333 : vector<8x32xf32>
    %335 = arith.addf %334, %284 : vector<8x32xf32>
    %336 = arith.mulf %297, %335 : vector<8x32xf32>
    %337 = arith.mulf %299, %331 : vector<8x32xf32>
    %338 = arith.addf %336, %337 : vector<8x32xf32>
    %339 = arith.addf %338, %295 : vector<8x32xf32>
    %340 = tpu.concatenate %311, %315, %319, %323, %327, %331, %335, %339 in 0 : vector<8x32xf32>, vector<8x32xf32>, vector<8x32xf32>, vector<8x32xf32>, vector<8x32xf32>, vector<8x32xf32>, vector<8x32xf32>, vector<8x32xf32> -> vector<64x32xf32>
    %c0_111 = arith.constant 0 : index
    %c0_112 = arith.constant 0 : index
    %341 = vector.load %arg4[%c0_111, %c0_112] : memref<32x8xf32, #tpu.memory_space<vmem>>, vector<32x8xf32>
    %cst_113 = arith.constant dense<0.000000e+00> : vector<64x8xf32>
    %342 = tpu.matmul %340, %341, %cst_113 {dimension_numbers = #tpu.dot_dimension_numbers<[1], [0], [0], [1], [0, 0, 1, 1], [], []>, precision = #tpu.contract_precision<fp32>} : vector<64x32xf32>, vector<32x8xf32>, vector<64x8xf32> -> vector<64x8xf32>
    %343 = vector.shape_cast %342 : vector<64x8xf32> to vector<8x8x8xf32>
    %344 = vector.shape_cast %305 : vector<8x8xf32> to vector<1x8x8xf32>
    %345 = vector.broadcast %344 : vector<1x8x8xf32> to vector<8x8x8xf32>
    %346 = arith.addf %343, %345 : vector<8x8x8xf32>
    %cst_114 = arith.constant 0.000000e+00 : f32
    %347 = vector.broadcast %cst_114 : f32 to vector<8x8xf32>
    %cst_115 = arith.constant 0.000000e+00 : f32
    %348 = vector.broadcast %cst_115 : f32 to vector<8x8xf32>
    %349 = arith.mulf %302, %347 : vector<8x8xf32>
    %cst_116 = arith.constant 1.000000e+00 : f32
    %350 = vector.broadcast %cst_116 : f32 to vector<8x8xf32>
    %351 = arith.subf %350, %348 : vector<8x8xf32>
    %352 = arith.mulf %349, %351 : vector<8x8xf32>
    %353 = vector.extract_strided_slice %346 {offsets = [0, 0, 0], sizes = [1, 8, 8], strides = [1, 1, 1]} : vector<8x8x8xf32> to vector<1x8x8xf32>
    %354 = vector.shape_cast %353 : vector<1x8x8xf32> to vector<8x8xf32>
    %355 = arith.addf %352, %354 : vector<8x8xf32>
    %cst_117 = arith.constant 1.000000e+00 : f32
    %356 = vector.broadcast %cst_117 : f32 to vector<8x8xf32>
    %357 = arith.cmpf ogt, %355, %356 : vector<8x8xf32>
    %358 = arith.extui %357 : vector<8x8xi1> to vector<8x8xi32>
    %359 = arith.sitofp %358 : vector<8x8xi32> to vector<8x8xf32>
    %360 = arith.mulf %302, %355 : vector<8x8xf32>
    %cst_118 = arith.constant 1.000000e+00 : f32
    %361 = vector.broadcast %cst_118 : f32 to vector<8x8xf32>
    %362 = arith.subf %361, %359 : vector<8x8xf32>
    %363 = arith.mulf %360, %362 : vector<8x8xf32>
    %364 = vector.extract_strided_slice %346 {offsets = [1, 0, 0], sizes = [1, 8, 8], strides = [1, 1, 1]} : vector<8x8x8xf32> to vector<1x8x8xf32>
    %365 = vector.shape_cast %364 : vector<1x8x8xf32> to vector<8x8xf32>
    %366 = arith.addf %363, %365 : vector<8x8xf32>
    %cst_119 = arith.constant 1.000000e+00 : f32
    %367 = vector.broadcast %cst_119 : f32 to vector<8x8xf32>
    %368 = arith.cmpf ogt, %366, %367 : vector<8x8xf32>
    %369 = arith.extui %368 : vector<8x8xi1> to vector<8x8xi32>
    %370 = arith.sitofp %369 : vector<8x8xi32> to vector<8x8xf32>
    %371 = arith.mulf %302, %366 : vector<8x8xf32>
    %cst_120 = arith.constant 1.000000e+00 : f32
    %372 = vector.broadcast %cst_120 : f32 to vector<8x8xf32>
    %373 = arith.subf %372, %370 : vector<8x8xf32>
    %374 = arith.mulf %371, %373 : vector<8x8xf32>
    %375 = vector.extract_strided_slice %346 {offsets = [2, 0, 0], sizes = [1, 8, 8], strides = [1, 1, 1]} : vector<8x8x8xf32> to vector<1x8x8xf32>
    %376 = vector.shape_cast %375 : vector<1x8x8xf32> to vector<8x8xf32>
    %377 = arith.addf %374, %376 : vector<8x8xf32>
    %cst_121 = arith.constant 1.000000e+00 : f32
    %378 = vector.broadcast %cst_121 : f32 to vector<8x8xf32>
    %379 = arith.cmpf ogt, %377, %378 : vector<8x8xf32>
    %380 = arith.extui %379 : vector<8x8xi1> to vector<8x8xi32>
    %381 = arith.sitofp %380 : vector<8x8xi32> to vector<8x8xf32>
    %382 = arith.mulf %302, %377 : vector<8x8xf32>
    %cst_122 = arith.constant 1.000000e+00 : f32
    %383 = vector.broadcast %cst_122 : f32 to vector<8x8xf32>
    %384 = arith.subf %383, %381 : vector<8x8xf32>
    %385 = arith.mulf %382, %384 : vector<8x8xf32>
    %386 = vector.extract_strided_slice %346 {offsets = [3, 0, 0], sizes = [1, 8, 8], strides = [1, 1, 1]} : vector<8x8x8xf32> to vector<1x8x8xf32>
    %387 = vector.shape_cast %386 : vector<1x8x8xf32> to vector<8x8xf32>
    %388 = arith.addf %385, %387 : vector<8x8xf32>
    %cst_123 = arith.constant 1.000000e+00 : f32
    %389 = vector.broadcast %cst_123 : f32 to vector<8x8xf32>
    %390 = arith.cmpf ogt, %388, %389 : vector<8x8xf32>
    %391 = arith.extui %390 : vector<8x8xi1> to vector<8x8xi32>
    %392 = arith.sitofp %391 : vector<8x8xi32> to vector<8x8xf32>
    %393 = arith.mulf %302, %388 : vector<8x8xf32>
    %cst_124 = arith.constant 1.000000e+00 : f32
    %394 = vector.broadcast %cst_124 : f32 to vector<8x8xf32>
    %395 = arith.subf %394, %392 : vector<8x8xf32>
    %396 = arith.mulf %393, %395 : vector<8x8xf32>
    %397 = vector.extract_strided_slice %346 {offsets = [4, 0, 0], sizes = [1, 8, 8], strides = [1, 1, 1]} : vector<8x8x8xf32> to vector<1x8x8xf32>
    %398 = vector.shape_cast %397 : vector<1x8x8xf32> to vector<8x8xf32>
    %399 = arith.addf %396, %398 : vector<8x8xf32>
    %cst_125 = arith.constant 1.000000e+00 : f32
    %400 = vector.broadcast %cst_125 : f32 to vector<8x8xf32>
    %401 = arith.cmpf ogt, %399, %400 : vector<8x8xf32>
    %402 = arith.extui %401 : vector<8x8xi1> to vector<8x8xi32>
    %403 = arith.sitofp %402 : vector<8x8xi32> to vector<8x8xf32>
    %404 = arith.mulf %302, %399 : vector<8x8xf32>
    %cst_126 = arith.constant 1.000000e+00 : f32
    %405 = vector.broadcast %cst_126 : f32 to vector<8x8xf32>
    %406 = arith.subf %405, %403 : vector<8x8xf32>
    %407 = arith.mulf %404, %406 : vector<8x8xf32>
    %408 = vector.extract_strided_slice %346 {offsets = [5, 0, 0], sizes = [1, 8, 8], strides = [1, 1, 1]} : vector<8x8x8xf32> to vector<1x8x8xf32>
    %409 = vector.shape_cast %408 : vector<1x8x8xf32> to vector<8x8xf32>
    %410 = arith.addf %407, %409 : vector<8x8xf32>
    %cst_127 = arith.constant 1.000000e+00 : f32
    %411 = vector.broadcast %cst_127 : f32 to vector<8x8xf32>
    %412 = arith.cmpf ogt, %410, %411 : vector<8x8xf32>
    %413 = arith.extui %412 : vector<8x8xi1> to vector<8x8xi32>
    %414 = arith.sitofp %413 : vector<8x8xi32> to vector<8x8xf32>
    %415 = arith.mulf %302, %410 : vector<8x8xf32>
    %cst_128 = arith.constant 1.000000e+00 : f32
    %416 = vector.broadcast %cst_128 : f32 to vector<8x8xf32>
    %417 = arith.subf %416, %414 : vector<8x8xf32>
    %418 = arith.mulf %415, %417 : vector<8x8xf32>
    %419 = vector.extract_strided_slice %346 {offsets = [6, 0, 0], sizes = [1, 8, 8], strides = [1, 1, 1]} : vector<8x8x8xf32> to vector<1x8x8xf32>
    %420 = vector.shape_cast %419 : vector<1x8x8xf32> to vector<8x8xf32>
    %421 = arith.addf %418, %420 : vector<8x8xf32>
    %cst_129 = arith.constant 1.000000e+00 : f32
    %422 = vector.broadcast %cst_129 : f32 to vector<8x8xf32>
    %423 = arith.cmpf ogt, %421, %422 : vector<8x8xf32>
    %424 = arith.extui %423 : vector<8x8xi1> to vector<8x8xi32>
    %425 = arith.sitofp %424 : vector<8x8xi32> to vector<8x8xf32>
    %426 = arith.mulf %302, %421 : vector<8x8xf32>
    %cst_130 = arith.constant 1.000000e+00 : f32
    %427 = vector.broadcast %cst_130 : f32 to vector<8x8xf32>
    %428 = arith.subf %427, %425 : vector<8x8xf32>
    %429 = arith.mulf %426, %428 : vector<8x8xf32>
    %430 = vector.extract_strided_slice %346 {offsets = [7, 0, 0], sizes = [1, 8, 8], strides = [1, 1, 1]} : vector<8x8x8xf32> to vector<1x8x8xf32>
    %431 = vector.shape_cast %430 : vector<1x8x8xf32> to vector<8x8xf32>
    %432 = arith.addf %429, %431 : vector<8x8xf32>
    %cst_131 = arith.constant 1.000000e+00 : f32
    %433 = vector.broadcast %cst_131 : f32 to vector<8x8xf32>
    %434 = arith.cmpf ogt, %432, %433 : vector<8x8xf32>
    %435 = arith.extui %434 : vector<8x8xi1> to vector<8x8xi32>
    %436 = arith.sitofp %435 : vector<8x8xi32> to vector<8x8xf32>
    %437 = vector.shape_cast %359 : vector<8x8xf32> to vector<1x8x8xf32>
    %438 = vector.shape_cast %370 : vector<8x8xf32> to vector<1x8x8xf32>
    %439 = vector.shape_cast %381 : vector<8x8xf32> to vector<1x8x8xf32>
    %440 = vector.shape_cast %392 : vector<8x8xf32> to vector<1x8x8xf32>
    %441 = vector.shape_cast %403 : vector<8x8xf32> to vector<1x8x8xf32>
    %442 = vector.shape_cast %414 : vector<8x8xf32> to vector<1x8x8xf32>
    %443 = vector.shape_cast %425 : vector<8x8xf32> to vector<1x8x8xf32>
    %444 = vector.shape_cast %436 : vector<8x8xf32> to vector<1x8x8xf32>
    %445 = tpu.concatenate %437, %438, %439, %440, %441, %442, %443, %444 in 0 : vector<1x8x8xf32>, vector<1x8x8xf32>, vector<1x8x8xf32>, vector<1x8x8xf32>, vector<1x8x8xf32>, vector<1x8x8xf32>, vector<1x8x8xf32>, vector<1x8x8xf32> -> vector<8x8x8xf32>
    %c0_132 = arith.constant 0 : index
    %c0_133 = arith.constant 0 : index
    %c0_134 = arith.constant 0 : index
    %446 = vector.load %arg5[%c0_132, %c0_133, %c0_134] : memref<8x8x8xf32, #tpu.memory_space<vmem>>, vector<8x8x8xf32>
    tpu.vector_store %arg5[%c0_132, %c0_133, %c0_134], %445 {strides = array<i32>} : memref<8x8x8xf32, #tpu.memory_space<vmem>>, vector<8x8x8xf32>,
    return
  }
}

</mosaic_0001>

<llo_original>
// kernel: synthetic_snn_forward.1
$region0: #{synthetic_snn_forward.1}
  #allocation0 [shape = 'u32[]', space=smem, size = 0x4, offset = 0x4, fixed_abs, tag = 'smem constant byte address 0x4 - core index']
  #allocation1 [shape = 'u32[144,128]{1,0:T(1,128)}', space=vmem, size = 0x12000, scoped, tag = 'internal scratch']
  %s0 = inlined_call_operand.vmem [shape: f32[8,8,16], index: 0, kind: input, shape index: {}]
  %s1 = inlined_call_operand.vmem [shape: f32[3,4,8,32], index: 1, kind: input, shape index: {}]
  %s2 = inlined_call_operand.vmem [shape: f32[16,32], index: 2, kind: input, shape index: {}]
  %s3 = inlined_call_operand.vmem [shape: f32[32,32], index: 3, kind: input, shape index: {}]
  %s4 = inlined_call_operand.vmem [shape: f32[32,8], index: 4, kind: input, shape index: {}]
  %s5 = inlined_call_operand.vmem [shape: f32[8,8,8], index: 5, kind: output, shape index: {}]
  %s6 = sld [smem:[#allocation0]]
  $region30: #{synthetic_snn_forward.1} parent=0
    _
  %s8 = ssub.s32 1, %s6
  %s9 = scalar_select 0, %s8, %s6
  // Predicated region
  $region2: #{synthetic_snn_forward.1} parent=0 // pred_check
    _
  $region3: #{synthetic_snn_forward.1} parent=0 // pred_check_branch
    %11 = sbr.rel (0) target = $region5
  $region4: #{synthetic_snn_forward.1} parent=0 // pred_region
    _
  $region5: #{synthetic_snn_forward.1} parent=0 // pred_fallthru
    _
  // Predicated region
  $region6: #{synthetic_snn_forward.1} parent=0 // pred_check
    _
  $region7: #{synthetic_snn_forward.1} parent=0 // pred_check_branch
    %13 = sbr.rel (0) target = $region9
  $region8: #{synthetic_snn_forward.1} parent=0 // pred_region
    _
  $region9: #{synthetic_snn_forward.1} parent=0 // pred_fallthru
    _
  // Predicated region
  $region10: #{synthetic_snn_forward.1} parent=0 // pred_check
    _
  $region11: #{synthetic_snn_forward.1} parent=0 // pred_check_branch
    %15 = sbr.rel (0) target = $region13
  $region12: #{synthetic_snn_forward.1} parent=0 // pred_region
    _
  $region13: #{synthetic_snn_forward.1} parent=0 // pred_fallthru
    _
  // Predicated region
  $region14: #{synthetic_snn_forward.1} parent=0 // pred_check
    _
  $region15: #{synthetic_snn_forward.1} parent=0 // pred_check_branch
    %17 = sbr.rel (0) target = $region17
  $region16: #{synthetic_snn_forward.1} parent=0 // pred_region
    _
  $region17: #{synthetic_snn_forward.1} parent=0 // pred_fallthru
    _
  // Predicated region
  $region18: #{synthetic_snn_forward.1} parent=0 // pred_check
    _
  $region19: #{synthetic_snn_forward.1} parent=0 // pred_check_branch
    %19 = sbr.rel (0) target = $region21
  $region20: #{synthetic_snn_forward.1} parent=0 // pred_region
    _
  $region21: #{synthetic_snn_forward.1} parent=0 // pred_fallthru
    _
  %v20 = vld [vmem:[%s0] sm:$0xff]
  %s21 = scalar_lea.vmem %s0, 8
  %v22 = vld [vmem:[%s21] sm:$0xff]
  %s23 = scalar_lea.vmem %s0, 16
  %v24 = vld [vmem:[%s23] sm:$0xff]
  %s25 = scalar_lea.vmem %s0, 24
  %v26 = vld [vmem:[%s25] sm:$0xff]
  %s27 = scalar_lea.vmem %s0, 32
  %v28 = vld [vmem:[%s27] sm:$0xff]
  %s29 = scalar_lea.vmem %s0, 40
  %v30 = vld [vmem:[%s29] sm:$0xff]
  %s31 = scalar_lea.vmem %s0, 48
  %v32 = vld [vmem:[%s31] sm:$0xff]
  %s33 = scalar_lea.vmem %s0, 56
  %v34 = vld [vmem:[%s33] sm:$0xff]
  %v35 = vld [vmem:[%s1] sm:$0xff]
  %s36 = scalar_lea.vmem %s1, 8
  %v37 = vld [vmem:[%s36] sm:$0xff]
  %s38 = scalar_lea.vmem %s1, 16
  %v39 = vld [vmem:[%s38] sm:$0xff]
  %s40 = scalar_lea.vmem %s1, 24
  %v41 = vld [vmem:[%s40] sm:$0xff]
  %v42 = vmul.f32 %v35, 0.0
  %v43 = vmul.f32 %v37, 0.0
  %v44 = vadd.f32 %v42, %v43
  %v45 = vadd.f32 %v44, %v20
  %v46 = vmul.f32 %v35, %v45
  %v47 = vadd.f32 %v46, %v43
  %v48 = vadd.f32 %v47, %v22
  %v49 = vmul.f32 %v35, %v48
  %v50 = vmul.f32 %v37, %v45
  %v51 = vadd.f32 %v49, %v50
  %v52 = vadd.f32 %v51, %v24
  %v53 = vmul.f32 %v35, %v52
  %v54 = vmul.f32 %v37, %v48
  %v55 = vadd.f32 %v53, %v54
  %v56 = vadd.f32 %v55, %v26
  %v57 = vmul.f32 %v35, %v56
  %v58 = vmul.f32 %v37, %v52
  %v59 = vadd.f32 %v57, %v58
  %v60 = vadd.f32 %v59, %v28
  %v61 = vmul.f32 %v35, %v60
  %v62 = vmul.f32 %v37, %v56
  %v63 = vadd.f32 %v61, %v62
  %v64 = vadd.f32 %v63, %v30
  %v65 = vmul.f32 %v35, %v64
  %v66 = vmul.f32 %v37, %v60
  %v67 = vadd.f32 %v65, %v66
  %v68 = vadd.f32 %v67, %v32
  %v69 = vmul.f32 %v35, %v68
  %v70 = vmul.f32 %v37, %v64
  %v71 = vadd.f32 %v69, %v70
  %v72 = vadd.f32 %v71, %v34
  %v73 = vld [vmem:[%s2] sm:$0xff]
  %v74 = vld [vmem:[%s2 + $0x8] sm:$0xff]
  %vm75 = vcmask 130048
  %v77 = vsel %vm75, %v45, 0
  %v80 = vsel %vm75, %v48, 0
  %v83 = vsel %vm75, %v52, 0
  %v86 = vsel %vm75, %v56, 0
  %v89 = vsel %vm75, %v60, 0
  %v92 = vsel %vm75, %v64, 0
  %v95 = vsel %vm75, %v68, 0
  %v98 = vsel %vm75, %v72, 0
  %100 = vmatprep.subr.mxu0 0.0
  %101 = vmatpush1.msra.mxu0 0.0
  %102 = vmatprep.subr.mxu0 0.0
  %103 = vmatpush1.msra.mxu0 0.0
  %104 = vmatprep.subr.mxu0 0.0
  %105 = vmatpush1.msra.mxu0 0.0
  %106 = vmatprep.subr.mxu0 0.0
  %107 = vmatpush1.msra.mxu0 0.0
  %108 = vmatprep.subr.mxu0 0.0
  %109 = vmatpush1.msra.mxu0 0.0
  %110 = vmatprep.subr.mxu0 0.0
  %111 = vmatpush1.msra.mxu0 0.0
  %112 = vmatprep.subr.mxu0 0.0
  %113 = vmatpush1.msra.mxu0 0.0
  %114 = vmatprep.subr.mxu0 0.0
  %115 = vmatpush1.msra.mxu0 0.0
  %116 = vmatprep.subr.mxu0 0.0
  %117 = vmatpush1.msra.mxu0 0.0
  %118 = vmatprep.subr.mxu0 0.0
  %119 = vmatpush1.msra.mxu0 0.0
  %120 = vmatprep.subr.mxu0 0.0
  %121 = vmatpush1.msra.mxu0 0.0
  %122 = vmatprep.subr.mxu0 0.0
  %123 = vmatpush1.msra.mxu0 0.0
  %124 = vmatprep.subr.mxu0 0.0
  %125 = vmatpush1.msra.mxu0 0.0
  %126 = vmatprep.subr.mxu0 0.0
  %127 = vmatpush1.msra.mxu0 0.0
  %128 = vmatprep.subr.mxu0 0.0
  %v129 = vand.u32 %v74, 4294901760
  %130 = vmatpush1.msra.mxu0 %v129
  %131 = vmatprep.subr.mxu0 0.0
  %v132 = vand.u32 %v73, 4294901760
  %133 = vmatpush1.msra.mxu0 %v132
  %134 = vmatprep.subr.mxu0 0.0
  %135 = vmatpush2.msra.mxu0 0.0
  %136 = vmatprep.subr.mxu0 0.0
  %137 = vmatpush2.msra.mxu0 0.0
  %138 = vmatprep.subr.mxu0 0.0
  %139 = vmatpush2.msra.mxu0 0.0
  %140 = vmatprep.subr.mxu0 0.0
  %141 = vmatpush2.msra.mxu0 0.0
  %142 = vmatprep.subr.mxu0 0.0
  %143 = vmatpush2.msra.mxu0 0.0
  %144 = vmatprep.subr.mxu0 0.0
  %145 = vmatpush2.msra.mxu0 0.0
  %146 = vmatprep.subr.mxu0 0.0
  %147 = vmatpush2.msra.mxu0 0.0
  %148 = vmatprep.subr.mxu0 0.0
  %149 = vmatpush2.msra.mxu0 0.0
  %150 = vmatprep.subr.mxu0 0.0
  %151 = vmatpush2.msra.mxu0 0.0
  %152 = vmatprep.subr.mxu0 0.0
  %153 = vmatpush2.msra.mxu0 0.0
  %154 = vmatprep.subr.mxu0 0.0
  %155 = vmatpush2.msra.mxu0 0.0
  %156 = vmatprep.subr.mxu0 0.0
  %157 = vmatpush2.msra.mxu0 0.0
  %158 = vmatprep.subr.mxu0 0.0
  %159 = vmatpush2.msra.mxu0 0.0
  %160 = vmatprep.subr.mxu0 0.0
  %161 = vmatpush2.msra.mxu0 0.0
  %162 = vmatprep.subr.mxu0 0.0
  %163 = vmatpush2.msra.mxu0 0.0
  %164 = vmatprep.subr.mxu0 0.0
  %165 = vmatpush2.msra.mxu0 0.0
  %166 = vmatprep.mubr.f32.mxu0 0.0
  %v167 = vand.u32 %v77, 4294901760
  %v168 = vsub.f32 %v77, %v167
  %v169 = vand.u32 %v168, 4294901760
  %v170 = vsub.f32 %v168, %v169
  %v171 = vand.u32 %v170, 4294901760
  %172 = vmatmul.mubr.f32.gmra.mxu0 %v171
  %v173 = vpop.f32.mrf.mxu0
  %v174 = vadd.f32 0.0, %v173
  %v175 = vpop.f32.mrf.mxu0
  %176 = vmatprep.mubr.f32.mxu0 0.0
  %v177 = vand.u32 %v80, 4294901760
  %v178 = vsub.f32 %v80, %v177
  %v179 = vand.u32 %v178, 4294901760
  %v180 = vsub.f32 %v178, %v179
  %v181 = vand.u32 %v180, 4294901760
  %182 = vmatmul.mubr.f32.gmra.mxu0 %v181
  %v183 = vpop.f32.mrf.mxu0
  %v184 = vadd.f32 0.0, %v183
  %v185 = vpop.f32.mrf.mxu0
  %186 = vmatprep.mubr.f32.mxu0 0.0
  %v187 = vand.u32 %v83, 4294901760
  %v188 = vsub.f32 %v83, %v187
  %v189 = vand.u32 %v188, 4294901760
  %v190 = vsub.f32 %v188, %v189
  %v191 = vand.u32 %v190, 4294901760
  %192 = vmatmul.mubr.f32.gmra.mxu0 %v191
  %v193 = vpop.f32.mrf.mxu0
  %v194 = vadd.f32 0.0, %v193
  %v195 = vpop.f32.mrf.mxu0
  %196 = vmatprep.mubr.f32.mxu0 0.0
  %v197 = vand.u32 %v86, 4294901760
  %v198 = vsub.f32 %v86, %v197
  %v199 = vand.u32 %v198, 4294901760
  %v200 = vsub.f32 %v198, %v199
  %v201 = vand.u32 %v200, 4294901760
  %202 = vmatmul.mubr.f32.gmra.mxu0 %v201
  %v203 = vpop.f32.mrf.mxu0
  %v204 = vadd.f32 0.0, %v203
  %v205 = vpop.f32.mrf.mxu0
  %206 = vmatprep.mubr.f32.mxu0 0.0
  %v207 = vand.u32 %v89, 4294901760
  %v208 = vsub.f32 %v89, %v207
  %v209 = vand.u32 %v208, 4294901760
  %v210 = vsub.f32 %v208, %v209
  %v211 = vand.u32 %v210, 4294901760
  %212 = vmatmul.mubr.f32.gmra.mxu0 %v211
  %v213 = vpop.f32.mrf.mxu0
  %v214 = vadd.f32 0.0, %v213
  %v215 = vpop.f32.mrf.mxu0
  %216 = vmatprep.mubr.f32.mxu0 0.0
  %v217 = vand.u32 %v92, 4294901760
  %v218 = vsub.f32 %v92, %v217
  %v219 = vand.u32 %v218, 4294901760
  %v220 = vsub.f32 %v218, %v219
  %v221 = vand.u32 %v220, 4294901760
  %222 = vmatmul.mubr.f32.gmra.mxu0 %v221
  %v223 = vpop.f32.mrf.mxu0
  %v224 = vadd.f32 0.0, %v223
  %v225 = vpop.f32.mrf.mxu0
  %226 = vmatprep.mubr.f32.mxu0 0.0
  %v227 = vand.u32 %v95, 4294901760
  %v228 = vsub.f32 %v95, %v227
  %v229 = vand.u32 %v228, 4294901760
  %v230 = vsub.f32 %v228, %v229
  %v231 = vand.u32 %v230, 4294901760
  %232 = vmatmul.mubr.f32.gmra.mxu0 %v231
  %v233 = vpop.f32.mrf.mxu0
  %v234 = vadd.f32 0.0, %v233
  %v235 = vpop.f32.mrf.mxu0
  %236 = vmatprep.mubr.f32.mxu0 0.0
  %v237 = vand.u32 %v98, 4294901760
  %v238 = vsub.f32 %v98, %v237
  %v239 = vand.u32 %v238, 4294901760
  %v240 = vsub.f32 %v238, %v239
  %v241 = vand.u32 %v240, 4294901760
  %242 = vmatmul.mubr.f32.gmra.mxu0 %v241
  %v243 = vpop.f32.mrf.mxu0
  %v244 = vadd.f32 0.0, %v243
  %v245 = vpop.f32.mrf.mxu0
  %246 = vdwg.mxu0
  %247 = vmatprep.subr.mxu0 0.0
  %248 = vmatpush1.msra.mxu0 0.0
  %249 = vmatprep.subr.mxu0 0.0
  %250 = vmatpush1.msra.mxu0 0.0
  %251 = vmatprep.subr.mxu0 0.0
  %252 = vmatpush1.msra.mxu0 0.0
  %253 = vmatprep.subr.mxu0 0.0
  %254 = vmatpush1.msra.mxu0 0.0
  %255 = vmatprep.subr.mxu0 0.0
  %256 = vmatpush1.msra.mxu0 0.0
  %257 = vmatprep.subr.mxu0 0.0
  %258 = vmatpush1.msra.mxu0 0.0
  %259 = vmatprep.subr.mxu0 0.0
  %260 = vmatpush1.msra.mxu0 0.0
  %261 = vmatprep.subr.mxu0 0.0
  %262 = vmatpush1.msra.mxu0 0.0
  %263 = vmatprep.subr.mxu0 0.0
  %264 = vmatpush1.msra.mxu0 0.0
  %265 = vmatprep.subr.mxu0 0.0
  %266 = vmatpush1.msra.mxu0 0.0
  %267 = vmatprep.subr.mxu0 0.0
  %268 = vmatpush1.msra.mxu0 0.0
  %269 = vmatprep.subr.mxu0 0.0
  %270 = vmatpush1.msra.mxu0 0.0
  %271 = vmatprep.subr.mxu0 0.0
  %272 = vmatpush1.msra.mxu0 0.0
  %273 = vmatprep.subr.mxu0 0.0
  %274 = vmatpush1.msra.mxu0 0.0
  %275 = vmatprep.subr.mxu0 0.0
  %v276 = vand.u32 %v74, 4294901760
  %v277 = vsub.f32 %v74, %v276
  %v278 = vand.u32 %v277, 4294901760
  %v279 = vsub.f32 %v277, %v278
  %v280 = vand.u32 %v279, 4294901760
  %281 = vmatpush1.msra.mxu0 %v280
  %282 = vmatprep.subr.mxu0 0.0
  %v283 = vand.u32 %v73, 4294901760
  %v284 = vsub.f32 %v73, %v283
  %v285 = vand.u32 %v284, 4294901760
  %v286 = vsub.f32 %v284, %v285
  %v287 = vand.u32 %v286, 4294901760
  %288 = vmatpush1.msra.mxu0 %v287
  %289 = vmatprep.subr.mxu0 0.0
  %290 = vmatpush2.msra.mxu0 0.0
  %291 = vmatprep.subr.mxu0 0.0
  %292 = vmatpush2.msra.mxu0 0.0
  %293 = vmatprep.subr.mxu0 0.0
  %294 = vmatpush2.msra.mxu0 0.0
  %295 = vmatprep.subr.mxu0 0.0
  %296 = vmatpush2.msra.mxu0 0.0
  %297 = vmatprep.subr.mxu0 0.0
  %298 = vmatpush2.msra.mxu0 0.0
  %299 = vmatprep.subr.mxu0 0.0
  %300 = vmatpush2.msra.mxu0 0.0
  %301 = vmatprep.subr.mxu0 0.0
  %302 = vmatpush2.msra.mxu0 0.0
  %303 = vmatprep.subr.mxu0 0.0
  %304 = vmatpush2.msra.mxu0 0.0
  %305 = vmatprep.subr.mxu0 0.0
  %306 = vmatpush2.msra.mxu0 0.0
  %307 = vmatprep.subr.mxu0 0.0
  %308 = vmatpush2.msra.mxu0 0.0
  %309 = vmatprep.subr.mxu0 0.0
  %310 = vmatpush2.msra.mxu0 0.0
  %311 = vmatprep.subr.mxu0 0.0
  %312 = vmatpush2.msra.mxu0 0.0
  %313 = vmatprep.subr.mxu0 0.0
  %314 = vmatpush2.msra.mxu0 0.0
  %315 = vmatprep.subr.mxu0 0.0
  %316 = vmatpush2.msra.mxu0 0.0
  %317 = vmatprep.subr.mxu0 0.0
  %318 = vmatpush2.msra.mxu0 0.0
  %319 = vmatprep.subr.mxu0 0.0
  %320 = vmatpush2.msra.mxu0 0.0
  %321 = vmatprep.mubr.f32.mxu0 0.0
  %v322 = vand.u32 %v77, 4294901760
  %323 = vmatmul.mubr.f32.gmra.mxu0 %v322
  %v324 = vpop.f32.mrf.mxu0
  %v325 = vadd.f32 %v174, %v324
  %v326 = vpop.f32.mrf.mxu0
  %327 = vmatprep.mubr.f32.mxu0 0.0
  %v328 = vand.u32 %v80, 4294901760
  %329 = vmatmul.mubr.f32.gmra.mxu0 %v328
  %v330 = vpop.f32.mrf.mxu0
  %v331 = vadd.f32 %v184, %v330
  %v332 = vpop.f32.mrf.mxu0
  %333 = vmatprep.mubr.f32.mxu0 0.0
  %v334 = vand.u32 %v83, 4294901760
  %335 = vmatmul.mubr.f32.gmra.mxu0 %v334
  %v336 = vpop.f32.mrf.mxu0
  %v337 = vadd.f32 %v194, %v336
  %v338 = vpop.f32.mrf.mxu0
  %339 = vmatprep.mubr.f32.mxu0 0.0
  %v340 = vand.u32 %v86, 4294901760
  %341 = vmatmul.mubr.f32.gmra.mxu0 %v340
  %v342 = vpop.f32.mrf.mxu0
  %v343 = vadd.f32 %v204, %v342
  %v344 = vpop.f32.mrf.mxu0
  %345 = vmatprep.mubr.f32.mxu0 0.0
  %v346 = vand.u32 %v89, 4294901760
  %347 = vmatmul.mubr.f32.gmra.mxu0 %v346
  %v348 = vpop.f32.mrf.mxu0
  %v349 = vadd.f32 %v214, %v348
  %v350 = vpop.f32.mrf.mxu0
  %351 = vmatprep.mubr.f32.mxu0 0.0
  %v352 = vand.u32 %v92, 4294901760
  %353 = vmatmul.mubr.f32.gmra.mxu0 %v352
  %v354 = vpop.f32.mrf.mxu0
  %v355 = vadd.f32 %v224, %v354
  %v356 = vpop.f32.mrf.mxu0
  %357 = vmatprep.mubr.f32.mxu0 0.0
  %v358 = vand.u32 %v95, 4294901760
  %359 = vmatmul.mubr.f32.gmra.mxu0 %v358
  %v360 = vpop.f32.mrf.mxu0
  %v361 = vadd.f32 %v234, %v360
  %v362 = vpop.f32.mrf.mxu0
  %363 = vmatprep.mubr.f32.mxu0 0.0
  %v364 = vand.u32 %v98, 4294901760
  %365 = vmatmul.mubr.f32.gmra.mxu0 %v364
  %v366 = vpop.f32.mrf.mxu0
  %v367 = vadd.f32 %v244, %v366
  %v368 = vpop.f32.mrf.mxu0
  %369 = vdwg.mxu0
  %370 = vmatprep.subr.mxu0 0.0
  %371 = vmatpush1.msra.mxu0 0.0
  %372 = vmatprep.subr.mxu0 0.0
  %373 = vmatpush1.msra.mxu0 0.0
  %374 = vmatprep.subr.mxu0 0.0
  %375 = vmatpush1.msra.mxu0 0.0
  %376 = vmatprep.subr.mxu0 0.0
  %377 = vmatpush1.msra.mxu0 0.0
  %378 = vmatprep.subr.mxu0 0.0
  %379 = vmatpush1.msra.mxu0 0.0
  %380 = vmatprep.subr.mxu0 0.0
  %381 = vmatpush1.msra.mxu0 0.0
  %382 = vmatprep.subr.mxu0 0.0
  %383 = vmatpush1.msra.mxu0 0.0
  %384 = vmatprep.subr.mxu0 0.0
  %385 = vmatpush1.msra.mxu0 0.0
  %386 = vmatprep.subr.mxu0 0.0
  %387 = vmatpush1.msra.mxu0 0.0
  %388 = vmatprep.subr.mxu0 0.0
  %389 = vmatpush1.msra.mxu0 0.0
  %390 = vmatprep.subr.mxu0 0.0
  %391 = vmatpush1.msra.mxu0 0.0
  %392 = vmatprep.subr.mxu0 0.0
  %393 = vmatpush1.msra.mxu0 0.0
  %394 = vmatprep.subr.mxu0 0.0
  %395 = vmatpush1.msra.mxu0 0.0
  %396 = vmatprep.subr.mxu0 0.0
  %397 = vmatpush1.msra.mxu0 0.0
  %398 = vmatprep.subr.mxu0 0.0
  %v399 = vand.u32 %v74, 4294901760
  %v400 = vsub.f32 %v74, %v399
  %401 = vmatpush1.msra.mxu0 %v400
  %402 = vmatprep.subr.mxu0 0.0
  %v403 = vand.u32 %v73, 4294901760
  %v404 = vsub.f32 %v73, %v403
  %405 = vmatpush1.msra.mxu0 %v404
  %406 = vmatprep.subr.mxu0 0.0
  %407 = vmatpush2.msra.mxu0 0.0
  %408 = vmatprep.subr.mxu0 0.0
  %409 = vmatpush2.msra.mxu0 0.0
  %410 = vmatprep.subr.mxu0 0.0
  %411 = vmatpush2.msra.mxu0 0.0
  %412 = vmatprep.subr.mxu0 0.0
  %413 = vmatpush2.msra.mxu0 0.0
  %414 = vmatprep.subr.mxu0 0.0
  %415 = vmatpush2.msra.mxu0 0.0
  %416 = vmatprep.subr.mxu0 0.0
  %417 = vmatpush2.msra.mxu0 0.0
  %418 = vmatprep.subr.mxu0 0.0
  %419 = vmatpush2.msra.mxu0 0.0
  %420 = vmatprep.subr.mxu0 0.0
  %421 = vmatpush2.msra.mxu0 0.0
  %422 = vmatprep.subr.mxu0 0.0
  %423 = vmatpush2.msra.mxu0 0.0
  %424 = vmatprep.subr.mxu0 0.0
  %425 = vmatpush2.msra.mxu0 0.0
  %426 = vmatprep.subr.mxu0 0.0
  %427 = vmatpush2.msra.mxu0 0.0
  %428 = vmatprep.subr.mxu0 0.0
  %429 = vmatpush2.msra.mxu0 0.0
  %430 = vmatprep.subr.mxu0 0.0
  %431 = vmatpush2.msra.mxu0 0.0
  %432 = vmatprep.subr.mxu0 0.0
  %433 = vmatpush2.msra.mxu0 0.0
  %434 = vmatprep.subr.mxu0 0.0
  %435 = vmatpush2.msra.mxu0 0.0
  %436 = vmatprep.subr.mxu0 0.0
  %437 = vmatpush2.msra.mxu0 0.0
  %438 = vmatprep.mubr.f32.mxu0 0.0
  %v439 = vand.u32 %v77, 4294901760
  %v440 = vsub.f32 %v77, %v439
  %441 = vmatmul.mubr.f32.gmra.mxu0 %v440
  %v442 = vpop.f32.mrf.mxu0
  %v443 = vadd.f32 %v325, %v442
  %v444 = vpop.f32.mrf.mxu0
  %445 = vmatprep.mubr.f32.mxu0 0.0
  %v446 = vand.u32 %v80, 4294901760
  %v447 = vsub.f32 %v80, %v446
  %448 = vmatmul.mubr.f32.gmra.mxu0 %v447
  %v449 = vpop.f32.mrf.mxu0
  %v450 = vadd.f32 %v331, %v449
  %v451 = vpop.f32.mrf.mxu0
  %452 = vmatprep.mubr.f32.mxu0 0.0
  %v453 = vand.u32 %v83, 4294901760
  %v454 = vsub.f32 %v83, %v453
  %455 = vmatmul.mubr.f32.gmra.mxu0 %v454
  %v456 = vpop.f32.mrf.mxu0
  %v457 = vadd.f32 %v337, %v456
  %v458 = vpop.f32.mrf.mxu0
  %459 = vmatprep.mubr.f32.mxu0 0.0
  %v460 = vand.u32 %v86, 4294901760
  %v461 = vsub.f32 %v86, %v460
  %462 = vmatmul.mubr.f32.gmra.mxu0 %v461
  %v463 = vpop.f32.mrf.mxu0
  %v464 = vadd.f32 %v343, %v463
  %v465 = vpop.f32.mrf.mxu0
  %466 = vmatprep.mubr.f32.mxu0 0.0
  %v467 = vand.u32 %v89, 4294901760
  %v468 = vsub.f32 %v89, %v467
  %469 = vmatmul.mubr.f32.gmra.mxu0 %v468
  %v470 = vpop.f32.mrf.mxu0
  %v471 = vadd.f32 %v349, %v470
  %v472 = vpop.f32.mrf.mxu0
  %473 = vmatprep.mubr.f32.mxu0 0.0
  %v474 = vand.u32 %v92, 4294901760
  %v475 = vsub.f32 %v92, %v474
  %476 = vmatmul.mubr.f32.gmra.mxu0 %v475
  %v477 = vpop.f32.mrf.mxu0
  %v478 = vadd.f32 %v355, %v477
  %v479 = vpop.f32.mrf.mxu0
  %480 = vmatprep.mubr.f32.mxu0 0.0
  %v481 = vand.u32 %v95, 4294901760
  %v482 = vsub.f32 %v95, %v481
  %483 = vmatmul.mubr.f32.gmra.mxu0 %v482
  %v484 = vpop.f32.mrf.mxu0
  %v485 = vadd.f32 %v361, %v484
  %v486 = vpop.f32.mrf.mxu0
  %487 = vmatprep.mubr.f32.mxu0 0.0
  %v488 = vand.u32 %v98, 4294901760
  %v489 = vsub.f32 %v98, %v488
  %490 = vmatmul.mubr.f32.gmra.mxu0 %v489
  %v491 = vpop.f32.mrf.mxu0
  %v492 = vadd.f32 %v367, %v491
  %v493 = vpop.f32.mrf.mxu0
  %494 = vdwg.mxu0
  %495 = vmatprep.subr.mxu0 0.0
  %496 = vmatpush1.msra.mxu0 0.0
  %497 = vmatprep.subr.mxu0 0.0
  %498 = vmatpush1.msra.mxu0 0.0
  %499 = vmatprep.subr.mxu0 0.0
  %500 = vmatpush1.msra.mxu0 0.0
  %501 = vmatprep.subr.mxu0 0.0
  %502 = vmatpush1.msra.mxu0 0.0
  %503 = vmatprep.subr.mxu0 0.0
  %504 = vmatpush1.msra.mxu0 0.0
  %505 = vmatprep.subr.mxu0 0.0
  %506 = vmatpush1.msra.mxu0 0.0
  %507 = vmatprep.subr.mxu0 0.0
  %508 = vmatpush1.msra.mxu0 0.0
  %509 = vmatprep.subr.mxu0 0.0
  %510 = vmatpush1.msra.mxu0 0.0
  %511 = vmatprep.subr.mxu0 0.0
  %512 = vmatpush1.msra.mxu0 0.0
  %513 = vmatprep.subr.mxu0 0.0
  %514 = vmatpush1.msra.mxu0 0.0
  %515 = vmatprep.subr.mxu0 0.0
  %516 = vmatpush1.msra.mxu0 0.0
  %517 = vmatprep.subr.mxu0 0.0
  %518 = vmatpush1.msra.mxu0 0.0
  %519 = vmatprep.subr.mxu0 0.0
  %520 = vmatpush1.msra.mxu0 0.0
  %521 = vmatprep.subr.mxu0 0.0
  %522 = vmatpush1.msra.mxu0 0.0
  %523 = vmatprep.subr.mxu0 0.0
  %v524 = vand.u32 %v74, 4294901760
  %525 = vmatpush1.msra.mxu0 %v524
  %526 = vmatprep.subr.mxu0 0.0
  %v527 = vand.u32 %v73, 4294901760
  %528 = vmatpush1.msra.mxu0 %v527
  %529 = vmatprep.subr.mxu0 0.0
  %530 = vmatpush2.msra.mxu0 0.0
  %531 = vmatprep.subr.mxu0 0.0
  %532 = vmatpush2.msra.mxu0 0.0
  %533 = vmatprep.subr.mxu0 0.0
  %534 = vmatpush2.msra.mxu0 0.0
  %535 = vmatprep.subr.mxu0 0.0
  %536 = vmatpush2.msra.mxu0 0.0
  %537 = vmatprep.subr.mxu0 0.0
  %538 = vmatpush2.msra.mxu0 0.0
  %539 = vmatprep.subr.mxu0 0.0
  %540 = vmatpush2.msra.mxu0 0.0
  %541 = vmatprep.subr.mxu0 0.0
  %542 = vmatpush2.msra.mxu0 0.0
  %543 = vmatprep.subr.mxu0 0.0
  %544 = vmatpush2.msra.mxu0 0.0
  %545 = vmatprep.subr.mxu0 0.0
  %546 = vmatpush2.msra.mxu0 0.0
  %547 = vmatprep.subr.mxu0 0.0
  %548 = vmatpush2.msra.mxu0 0.0
  %549 = vmatprep.subr.mxu0 0.0
  %550 = vmatpush2.msra.mxu0 0.0
  %551 = vmatprep.subr.mxu0 0.0
  %552 = vmatpush2.msra.mxu0 0.0
  %553 = vmatprep.subr.mxu0 0.0
  %554 = vmatpush2.msra.mxu0 0.0
  %555 = vmatprep.subr.mxu0 0.0
  %556 = vmatpush2.msra.mxu0 0.0
  %557 = vmatprep.subr.mxu0 0.0
  %558 = vmatpush2.msra.mxu0 0.0
  %559 = vmatprep.subr.mxu0 0.0
  %560 = vmatpush2.msra.mxu0 0.0
  %561 = vmatprep.mubr.f32.mxu0 0.0
  %v562 = vand.u32 %v77, 4294901760
  %v563 = vsub.f32 %v77, %v562
  %v564 = vand.u32 %v563, 4294901760
  %565 = vmatmul.mubr.f32.gmra.mxu0 %v564
  %v566 = vpop.f32.mrf.mxu0
  %v567 = vadd.f32 %v443, %v566
  %v568 = vpop.f32.mrf.mxu0
  %569 = vmatprep.mubr.f32.mxu0 0.0
  %v570 = vand.u32 %v80, 4294901760
  %v571 = vsub.f32 %v80, %v570
  %v572 = vand.u32 %v571, 4294901760
  %573 = vmatmul.mubr.f32.gmra.mxu0 %v572
  %v574 = vpop.f32.mrf.mxu0
  %v575 = vadd.f32 %v450, %v574
  %v576 = vpop.f32.mrf.mxu0
  %577 = vmatprep.mubr.f32.mxu0 0.0
  %v578 = vand.u32 %v83, 4294901760
  %v579 = vsub.f32 %v83, %v578
  %v580 = vand.u32 %v579, 4294901760
  %581 = vmatmul.mubr.f32.gmra.mxu0 %v580
  %v582 = vpop.f32.mrf.mxu0
  %v583 = vadd.f32 %v457, %v582
  %v584 = vpop.f32.mrf.mxu0
  %585 = vmatprep.mubr.f32.mxu0 0.0
  %v586 = vand.u32 %v86, 4294901760
  %v587 = vsub.f32 %v86, %v586
  %v588 = vand.u32 %v587, 4294901760
  %589 = vmatmul.mubr.f32.gmra.mxu0 %v588
  %v590 = vpop.f32.mrf.mxu0
  %v591 = vadd.f32 %v464, %v590
  %v592 = vpop.f32.mrf.mxu0
  %593 = vmatprep.mubr.f32.mxu0 0.0
  %v594 = vand.u32 %v89, 4294901760
  %v595 = vsub.f32 %v89, %v594
  %v596 = vand.u32 %v595, 4294901760
  %597 = vmatmul.mubr.f32.gmra.mxu0 %v596
  %v598 = vpop.f32.mrf.mxu0
  %v599 = vadd.f32 %v471, %v598
  %v600 = vpop.f32.mrf.mxu0
  %601 = vmatprep.mubr.f32.mxu0 0.0
  %v602 = vand.u32 %v92, 4294901760
  %v603 = vsub.f32 %v92, %v602
  %v604 = vand.u32 %v603, 4294901760
  %605 = vmatmul.mubr.f32.gmra.mxu0 %v604
  %v606 = vpop.f32.mrf.mxu0
  %v607 = vadd.f32 %v478, %v606
  %v608 = vpop.f32.mrf.mxu0
  %609 = vmatprep.mubr.f32.mxu0 0.0
  %v610 = vand.u32 %v95, 4294901760
  %v611 = vsub.f32 %v95, %v610
  %v612 = vand.u32 %v611, 4294901760
  %613 = vmatmul.mubr.f32.gmra.mxu0 %v612
  %v614 = vpop.f32.mrf.mxu0
  %v615 = vadd.f32 %v485, %v614
  %v616 = vpop.f32.mrf.mxu0
  %617 = vmatprep.mubr.f32.mxu0 0.0
  %v618 = vand.u32 %v98, 4294901760
  %v619 = vsub.f32 %v98, %v618
  %v620 = vand.u32 %v619, 4294901760
  %621 = vmatmul.mubr.f32.gmra.mxu0 %v620
  %v622 = vpop.f32.mrf.mxu0
  %v623 = vadd.f32 %v492, %v622
  %v624 = vpop.f32.mrf.mxu0
  %625 = vdwg.mxu0
  %626 = vmatprep.subr.mxu0 0.0
  %627 = vmatpush1.msra.mxu0 0.0
  %628 = vmatprep.subr.mxu0 0.0
  %629 = vmatpush1.msra.mxu0 0.0
  %630 = vmatprep.subr.mxu0 0.0
  %631 = vmatpush1.msra.mxu0 0.0
  %632 = vmatprep.subr.mxu0 0.0
  %633 = vmatpush1.msra.mxu0 0.0
  %634 = vmatprep.subr.mxu0 0.0
  %635 = vmatpush1.msra.mxu0 0.0
  %636 = vmatprep.subr.mxu0 0.0
  %637 = vmatpush1.msra.mxu0 0.0
  %638 = vmatprep.subr.mxu0 0.0
  %639 = vmatpush1.msra.mxu0 0.0
  %640 = vmatprep.subr.mxu0 0.0
  %641 = vmatpush1.msra.mxu0 0.0
  %642 = vmatprep.subr.mxu0 0.0
  %643 = vmatpush1.msra.mxu0 0.0
  %644 = vmatprep.subr.mxu0 0.0
  %645 = vmatpush1.msra.mxu0 0.0
  %646 = vmatprep.subr.mxu0 0.0
  %647 = vmatpush1.msra.mxu0 0.0
  %648 = vmatprep.subr.mxu0 0.0
  %649 = vmatpush1.msra.mxu0 0.0
  %650 = vmatprep.subr.mxu0 0.0
  %651 = vmatpush1.msra.mxu0 0.0
  %652 = vmatprep.subr.mxu0 0.0
  %653 = vmatpush1.msra.mxu0 0.0
  %654 = vmatprep.subr.mxu0 0.0
  %v655 = vand.u32 %v74, 4294901760
  %v656 = vsub.f32 %v74, %v655
  %v657 = vand.u32 %v656, 4294901760
  %658 = vmatpush1.msra.mxu0 %v657
  %659 = vmatprep.subr.mxu0 0.0
  %v660 = vand.u32 %v73, 4294901760
  %v661 = vsub.f32 %v73, %v660
  %v662 = vand.u32 %v661, 4294901760
  %663 = vmatpush1.msra.mxu0 %v662
  %664 = vmatprep.subr.mxu0 0.0
  %665 = vmatpush2.msra.mxu0 0.0
  %666 = vmatprep.subr.mxu0 0.0
  %667 = vmatpush2.msra.mxu0 0.0
  %668 = vmatprep.subr.mxu0 0.0
  %669 = vmatpush2.msra.mxu0 0.0
  %670 = vmatprep.subr.mxu0 0.0
  %671 = vmatpush2.msra.mxu0 0.0
  %672 = vmatprep.subr.mxu0 0.0
  %673 = vmatpush2.msra.mxu0 0.0
  %674 = vmatprep.subr.mxu0 0.0
  %675 = vmatpush2.msra.mxu0 0.0
  %676 = vmatprep.subr.mxu0 0.0
  %677 = vmatpush2.msra.mxu0 0.0
  %678 = vmatprep.subr.mxu0 0.0
  %679 = vmatpush2.msra.mxu0 0.0
  %680 = vmatprep.subr.mxu0 0.0
  %681 = vmatpush2.msra.mxu0 0.0
  %682 = vmatprep.subr.mxu0 0.0
  %683 = vmatpush2.msra.mxu0 0.0
  %684 = vmatprep.subr.mxu0 0.0
  %685 = vmatpush2.msra.mxu0 0.0
  %686 = vmatprep.subr.mxu0 0.0
  %687 = vmatpush2.msra.mxu0 0.0
  %688 = vmatprep.subr.mxu0 0.0
  %689 = vmatpush2.msra.mxu0 0.0
  %690 = vmatprep.subr.mxu0 0.0
  %691 = vmatpush2.msra.mxu0 0.0
  %692 = vmatprep.subr.mxu0 0.0
  %693 = vmatpush2.msra.mxu0 0.0
  %694 = vmatprep.subr.mxu0 0.0
  %695 = vmatpush2.msra.mxu0 0.0
  %696 = vmatprep.mubr.f32.mxu0 0.0
  %v697 = vand.u32 %v77, 4294901760
  %698 = vmatmul.mubr.f32.gmra.mxu0 %v697
  %v699 = vpop.f32.mrf.mxu0
  %v700 = vadd.f32 %v567, %v699
  %v701 = vpop.f32.mrf.mxu0
  %702 = vmatprep.mubr.f32.mxu0 0.0
  %v703 = vand.u32 %v80, 4294901760
  %704 = vmatmul.mubr.f32.gmra.mxu0 %v703
  %v705 = vpop.f32.mrf.mxu0
  %v706 = vadd.f32 %v575, %v705
  %v707 = vpop.f32.mrf.mxu0
  %708 = vmatprep.mubr.f32.mxu0 0.0
  %v709 = vand.u32 %v83, 4294901760
  %710 = vmatmul.mubr.f32.gmra.mxu0 %v709
  %v711 = vpop.f32.mrf.mxu0
  %v712 = vadd.f32 %v583, %v711
  %v713 = vpop.f32.mrf.mxu0
  %714 = vmatprep.mubr.f32.mxu0 0.0
  %v715 = vand.u32 %v86, 4294901760
  %716 = vmatmul.mubr.f32.gmra.mxu0 %v715
  %v717 = vpop.f32.mrf.mxu0
  %v718 = vadd.f32 %v591, %v717
  %v719 = vpop.f32.mrf.mxu0
  %720 = vmatprep.mubr.f32.mxu0 0.0
  %v721 = vand.u32 %v89, 4294901760
  %722 = vmatmul.mubr.f32.gmra.mxu0 %v721
  %v723 = vpop.f32.mrf.mxu0
  %v724 = vadd.f32 %v599, %v723
  %v725 = vpop.f32.mrf.mxu0
  %726 = vmatprep.mubr.f32.mxu0 0.0
  %v727 = vand.u32 %v92, 4294901760
  %728 = vmatmul.mubr.f32.gmra.mxu0 %v727
  %v729 = vpop.f32.mrf.mxu0
  %v730 = vadd.f32 %v607, %v729
  %v731 = vpop.f32.mrf.mxu0
  %732 = vmatprep.mubr.f32.mxu0 0.0
  %v733 = vand.u32 %v95, 4294901760
  %734 = vmatmul.mubr.f32.gmra.mxu0 %v733
  %v735 = vpop.f32.mrf.mxu0
  %v736 = vadd.f32 %v615, %v735
  %v737 = vpop.f32.mrf.mxu0
  %738 = vmatprep.mubr.f32.mxu0 0.0
  %v739 = vand.u32 %v98, 4294901760
  %740 = vmatmul.mubr.f32.gmra.mxu0 %v739
  %v741 = vpop.f32.mrf.mxu0
  %v742 = vadd.f32 %v623, %v741
  %v743 = vpop.f32.mrf.mxu0
  %744 = vdwg.mxu0
  %745 = vmatprep.subr.mxu0 0.0
  %746 = vmatpush1.msra.mxu0 0.0
  %747 = vmatprep.subr.mxu0 0.0
  %748 = vmatpush1.msra.mxu0 0.0
  %749 = vmatprep.subr.mxu0 0.0
  %750 = vmatpush1.msra.mxu0 0.0
  %751 = vmatprep.subr.mxu0 0.0
  %752 = vmatpush1.msra.mxu0 0.0
  %753 = vmatprep.subr.mxu0 0.0
  %754 = vmatpush1.msra.mxu0 0.0
  %755 = vmatprep.subr.mxu0 0.0
  %756 = vmatpush1.msra.mxu0 0.0
  %757 = vmatprep.subr.mxu0 0.0
  %758 = vmatpush1.msra.mxu0 0.0
  %759 = vmatprep.subr.mxu0 0.0
  %760 = vmatpush1.msra.mxu0 0.0
  %761 = vmatprep.subr.mxu0 0.0
  %762 = vmatpush1.msra.mxu0 0.0
  %763 = vmatprep.subr.mxu0 0.0
  %764 = vmatpush1.msra.mxu0 0.0
  %765 = vmatprep.subr.mxu0 0.0
  %766 = vmatpush1.msra.mxu0 0.0
  %767 = vmatprep.subr.mxu0 0.0
  %768 = vmatpush1.msra.mxu0 0.0
  %769 = vmatprep.subr.mxu0 0.0
  %770 = vmatpush1.msra.mxu0 0.0
  %771 = vmatprep.subr.mxu0 0.0
  %772 = vmatpush1.msra.mxu0 0.0
  %773 = vmatprep.subr.mxu0 0.0
  %v774 = vand.u32 %v74, 4294901760
  %775 = vmatpush1.msra.mxu0 %v774
  %776 = vmatprep.subr.mxu0 0.0
  %v777 = vand.u32 %v73, 4294901760
  %778 = vmatpush1.msra.mxu0 %v777
  %779 = vmatprep.subr.mxu0 0.0
  %780 = vmatpush2.msra.mxu0 0.0
  %781 = vmatprep.subr.mxu0 0.0
  %782 = vmatpush2.msra.mxu0 0.0
  %783 = vmatprep.subr.mxu0 0.0
  %784 = vmatpush2.msra.mxu0 0.0
  %785 = vmatprep.subr.mxu0 0.0
  %786 = vmatpush2.msra.mxu0 0.0
  %787 = vmatprep.subr.mxu0 0.0
  %788 = vmatpush2.msra.mxu0 0.0
  %789 = vmatprep.subr.mxu0 0.0
  %790 = vmatpush2.msra.mxu0 0.0
  %791 = vmatprep.subr.mxu0 0.0
  %792 = vmatpush2.msra.mxu0 0.0
  %793 = vmatprep.subr.mxu0 0.0
  %794 = vmatpush2.msra.mxu0 0.0
  %795 = vmatprep.subr.mxu0 0.0
  %796 = vmatpush2.msra.mxu0 0.0
  %797 = vmatprep.subr.mxu0 0.0
  %798 = vmatpush2.msra.mxu0 0.0
  %799 = vmatprep.subr.mxu0 0.0
  %800 = vmatpush2.msra.mxu0 0.0
  %801 = vmatprep.subr.mxu0 0.0
  %802 = vmatpush2.msra.mxu0 0.0
  %803 = vmatprep.subr.mxu0 0.0
  %804 = vmatpush2.msra.mxu0 0.0
  %805 = vmatprep.subr.mxu0 0.0
  %806 = vmatpush2.msra.mxu0 0.0
  %807 = vmatprep.subr.mxu0 0.0
  %808 = vmatpush2.msra.mxu0 0.0
  %809 = vmatprep.subr.mxu0 0.0
  %810 = vmatpush2.msra.mxu0 0.0
  %811 = vmatprep.mubr.f32.mxu0 0.0
  %v812 = vand.u32 %v77, 4294901760
  %813 = vmatmul.mubr.f32.gmra.mxu0 %v812
  %v814 = vpop.f32.mrf.mxu0
  %v815 = vadd.f32 %v700, %v814
  %v816 = vpop.f32.mrf.mxu0
  %817 = vmatprep.mubr.f32.mxu0 0.0
  %v818 = vand.u32 %v80, 4294901760
  %819 = vmatmul.mubr.f32.gmra.mxu0 %v818
  %v820 = vpop.f32.mrf.mxu0
  %v821 = vadd.f32 %v706, %v820
  %v822 = vpop.f32.mrf.mxu0
  %823 = vmatprep.mubr.f32.mxu0 0.0
  %v824 = vand.u32 %v83, 4294901760
  %825 = vmatmul.mubr.f32.gmra.mxu0 %v824
  %v826 = vpop.f32.mrf.mxu0
  %v827 = vadd.f32 %v712, %v826
  %v828 = vpop.f32.mrf.mxu0
  %829 = vmatprep.mubr.f32.mxu0 0.0
  %v830 = vand.u32 %v86, 4294901760
  %831 = vmatmul.mubr.f32.gmra.mxu0 %v830
  %v832 = vpop.f32.mrf.mxu0
  %v833 = vadd.f32 %v718, %v832
  %v834 = vpop.f32.mrf.mxu0
  %835 = vmatprep.mubr.f32.mxu0 0.0
  %v836 = vand.u32 %v89, 4294901760
  %837 = vmatmul.mubr.f32.gmra.mxu0 %v836
  %v838 = vpop.f32.mrf.mxu0
  %v839 = vadd.f32 %v724, %v838
  %v840 = vpop.f32.mrf.mxu0
  %841 = vmatprep.mubr.f32.mxu0 0.0
  %v842 = vand.u32 %v92, 4294901760
  %843 = vmatmul.mubr.f32.gmra.mxu0 %v842
  %v844 = vpop.f32.mrf.mxu0
  %v845 = vadd.f32 %v730, %v844
  %v846 = vpop.f32.mrf.mxu0
  %847 = vmatprep.mubr.f32.mxu0 0.0
  %v848 = vand.u32 %v95, 4294901760
  %849 = vmatmul.mubr.f32.gmra.mxu0 %v848
  %v850 = vpop.f32.mrf.mxu0
  %v851 = vadd.f32 %v736, %v850
  %v852 = vpop.f32.mrf.mxu0
  %853 = vmatprep.mubr.f32.mxu0 0.0
  %v854 = vand.u32 %v98, 4294901760
  %855 = vmatmul.mubr.f32.gmra.mxu0 %v854
  %v856 = vpop.f32.mrf.mxu0
  %v857 = vadd.f32 %v742, %v856
  %v858 = vpop.f32.mrf.mxu0
  %859 = vdwg.mxu0
  %v860 = vadd.f32 %v815, %v41
  %v861 = vadd.f32 %v821, %v41
  %v862 = vadd.f32 %v827, %v41
  %v863 = vadd.f32 %v833, %v41
  %v864 = vadd.f32 %v839, %v41
  %v865 = vadd.f32 %v845, %v41
  %v866 = vadd.f32 %v851, %v41
  %v867 = vadd.f32 %v857, %v41
  %v868 = vmul.f32 %v39, 0.0
  %v869 = vadd.f32 %v868, %v860
  %vm870 = vcmp.gt.f32.partialorder %v869, 1.0
  %v871 = vsel %vm870, 1, 0
  %v872 = vcvt.s32.f32 %v871
  %v873 = vmul.f32 %v39, %v869
  %v874 = vsub.f32 1.0, %v872
  %v875 = vmul.f32 %v873, %v874
  %v876 = vadd.f32 %v875, %v861
  %vm877 = vcmp.gt.f32.partialorder %v876, 1.0
  %v878 = vsel %vm877, 1, 0
  %v879 = vcvt.s32.f32 %v878
  %v880 = vmul.f32 %v39, %v876
  %v881 = vsub.f32 1.0, %v879
  %v882 = vmul.f32 %v880, %v881
  %v883 = vadd.f32 %v882, %v862
  %vm884 = vcmp.gt.f32.partialorder %v883, 1.0
  %v885 = vsel %vm884, 1, 0
  %v886 = vcvt.s32.f32 %v885
  %v887 = vmul.f32 %v39, %v883
  %v888 = vsub.f32 1.0, %v886
  %v889 = vmul.f32 %v887, %v888
  %v890 = vadd.f32 %v889, %v863
  %vm891 = vcmp.gt.f32.partialorder %v890, 1.0
  %v892 = vsel %vm891, 1, 0
  %v893 = vcvt.s32.f32 %v892
  %v894 = vmul.f32 %v39, %v890
  %v895 = vsub.f32 1.0, %v893
  %v896 = vmul.f32 %v894, %v895
  %v897 = vadd.f32 %v896, %v864
  %vm898 = vcmp.gt.f32.partialorder %v897, 1.0
  %v899 = vsel %vm898, 1, 0
  %v900 = vcvt.s32.f32 %v899
  %v901 = vmul.f32 %v39, %v897
  %v902 = vsub.f32 1.0, %v900
  %v903 = vmul.f32 %v901, %v902
  %v904 = vadd.f32 %v903, %v865
  %vm905 = vcmp.gt.f32.partialorder %v904, 1.0
  %v906 = vsel %vm905, 1, 0
  %v907 = vcvt.s32.f32 %v906
  %v908 = vmul.f32 %v39, %v904
  %v909 = vsub.f32 1.0, %v907
  %v910 = vmul.f32 %v908, %v909
  %v911 = vadd.f32 %v910, %v866
  %vm912 = vcmp.gt.f32.partialorder %v911, 1.0
  %v913 = vsel %vm912, 1, 0
  %v914 = vcvt.s32.f32 %v913
  %v915 = vmul.f32 %v39, %v911
  %v916 = vsub.f32 1.0, %v914
  %v917 = vmul.f32 %v915, %v916
  %v918 = vadd.f32 %v917, %v867
  %vm919 = vcmp.gt.f32.partialorder %v918, 1.0
  %v920 = vsel %vm919, 1, 0
  %v921 = vcvt.s32.f32 %v920
  %s922 = scalar_lea.vmem %s1, 32
  %v923 = vld [vmem:[%s922] sm:$0xff]
  %s924 = scalar_lea.vmem %s1, 40
  %v925 = vld [vmem:[%s924] sm:$0xff]
  %s926 = scalar_lea.vmem %s1, 48
  %v927 = vld [vmem:[%s926] sm:$0xff]
  %s928 = scalar_lea.vmem %s1, 56
  %v929 = vld [vmem:[%s928] sm:$0xff]
  %v930 = vmul.f32 %v923, 0.0
  %v931 = vmul.f32 %v925, 0.0
  %v932 = vadd.f32 %v930, %v931
  %v933 = vadd.f32 %v932, %v872
  %v934 = vmul.f32 %v923, %v933
  %v935 = vadd.f32 %v934, %v931
  %v936 = vadd.f32 %v935, %v879
  %v937 = vmul.f32 %v923, %v936
  %v938 = vmul.f32 %v925, %v933
  %v939 = vadd.f32 %v937, %v938
  %v940 = vadd.f32 %v939, %v886
  %v941 = vmul.f32 %v923, %v940
  %v942 = vmul.f32 %v925, %v936
  %v943 = vadd.f32 %v941, %v942
  %v944 = vadd.f32 %v943, %v893
  %v945 = vmul.f32 %v923, %v944
  %v946 = vmul.f32 %v925, %v940
  %v947 = vadd.f32 %v945, %v946
  %v948 = vadd.f32 %v947, %v900
  %v949 = vmul.f32 %v923, %v948
  %v950 = vmul.f32 %v925, %v944
  %v951 = vadd.f32 %v949, %v950
  %v952 = vadd.f32 %v951, %v907
  %v953 = vmul.f32 %v923, %v952
  %v954 = vmul.f32 %v925, %v948
  %v955 = vadd.f32 %v953, %v954
  %v956 = vadd.f32 %v955, %v914
  %v957 = vmul.f32 %v923, %v956
  %v958 = vmul.f32 %v925, %v952
  %v959 = vadd.f32 %v957, %v958
  %v960 = vadd.f32 %v959, %v921
  %v961 = vld [vmem:[%s3] sm:$0xff]
  %v962 = vld [vmem:[%s3 + $0x8] sm:$0xff]
  %v963 = vld [vmem:[%s3 + $0x10] sm:$0xff]
  %v964 = vld [vmem:[%s3 + $0x18] sm:$0xff]
  %vm965 = vcmask 261120
  %v967 = vsel %vm965, %v933, 0
  %v970 = vsel %vm965, %v936, 0
  %v973 = vsel %vm965, %v940, 0
  %v976 = vsel %vm965, %v944, 0
  %v979 = vsel %vm965, %v948, 0
  %v982 = vsel %vm965, %v952, 0
  %v985 = vsel %vm965, %v956, 0
  %v988 = vsel %vm965, %v960, 0
  %990 = vmatprep.subr.mxu0 0.0
  %991 = vmatpush1.msra.mxu0 0.0
  %992 = vmatprep.subr.mxu0 0.0
  %993 = vmatpush1.msra.mxu0 0.0
  %994 = vmatprep.subr.mxu0 0.0
  %995 = vmatpush1.msra.mxu0 0.0
  %996 = vmatprep.subr.mxu0 0.0
  %997 = vmatpush1.msra.mxu0 0.0
  %998 = vmatprep.subr.mxu0 0.0
  %999 = vmatpush1.msra.mxu0 0.0
  %1000 = vmatprep.subr.mxu0 0.0
  %1001 = vmatpush1.msra.mxu0 0.0
  %1002 = vmatprep.subr.mxu0 0.0
  %1003 = vmatpush1.msra.mxu0 0.0
  %1004 = vmatprep.subr.mxu0 0.0
  %1005 = vmatpush1.msra.mxu0 0.0
  %1006 = vmatprep.subr.mxu0 0.0
  %1007 = vmatpush1.msra.mxu0 0.0
  %1008 = vmatprep.subr.mxu0 0.0
  %1009 = vmatpush1.msra.mxu0 0.0
  %1010 = vmatprep.subr.mxu0 0.0
  %1011 = vmatpush1.msra.mxu0 0.0
  %1012 = vmatprep.subr.mxu0 0.0
  %1013 = vmatpush1.msra.mxu0 0.0
  %1014 = vmatprep.subr.mxu0 0.0
  %v1015 = vand.u32 %v964, 4294901760
  %1016 = vmatpush1.msra.mxu0 %v1015
  %1017 = vmatprep.subr.mxu0 0.0
  %v1018 = vand.u32 %v963, 4294901760
  %1019 = vmatpush1.msra.mxu0 %v1018
  %1020 = vmatprep.subr.mxu0 0.0
  %v1021 = vand.u32 %v962, 4294901760
  %1022 = vmatpush1.msra.mxu0 %v1021
  %1023 = vmatprep.subr.mxu0 0.0
  %v1024 = vand.u32 %v961, 4294901760
  %1025 = vmatpush1.msra.mxu0 %v1024
  %1026 = vmatprep.subr.mxu0 0.0
  %1027 = vmatpush2.msra.mxu0 0.0
  %1028 = vmatprep.subr.mxu0 0.0
  %1029 = vmatpush2.msra.mxu0 0.0
  %1030 = vmatprep.subr.mxu0 0.0
  %1031 = vmatpush2.msra.mxu0 0.0
  %1032 = vmatprep.subr.mxu0 0.0
  %1033 = vmatpush2.msra.mxu0 0.0
  %1034 = vmatprep.subr.mxu0 0.0
  %1035 = vmatpush2.msra.mxu0 0.0
  %1036 = vmatprep.subr.mxu0 0.0
  %1037 = vmatpush2.msra.mxu0 0.0
  %1038 = vmatprep.subr.mxu0 0.0
  %1039 = vmatpush2.msra.mxu0 0.0
  %1040 = vmatprep.subr.mxu0 0.0
  %1041 = vmatpush2.msra.mxu0 0.0
  %1042 = vmatprep.subr.mxu0 0.0
  %1043 = vmatpush2.msra.mxu0 0.0
  %1044 = vmatprep.subr.mxu0 0.0
  %1045 = vmatpush2.msra.mxu0 0.0
  %1046 = vmatprep.subr.mxu0 0.0
  %1047 = vmatpush2.msra.mxu0 0.0
  %1048 = vmatprep.subr.mxu0 0.0
  %1049 = vmatpush2.msra.mxu0 0.0
  %1050 = vmatprep.subr.mxu0 0.0
  %1051 = vmatpush2.msra.mxu0 0.0
  %1052 = vmatprep.subr.mxu0 0.0
  %1053 = vmatpush2.msra.mxu0 0.0
  %1054 = vmatprep.subr.mxu0 0.0
  %1055 = vmatpush2.msra.mxu0 0.0
  %1056 = vmatprep.subr.mxu0 0.0
  %1057 = vmatpush2.msra.mxu0 0.0
  %1058 = vmatprep.mubr.f32.mxu0 0.0
  %v1059 = vand.u32 %v967, 4294901760
  %v1060 = vsub.f32 %v967, %v1059
  %v1061 = vand.u32 %v1060, 4294901760
  %v1062 = vsub.f32 %v1060, %v1061
  %v1063 = vand.u32 %v1062, 4294901760
  %1064 = vmatmul.mubr.f32.gmra.mxu0 %v1063
  %v1065 = vpop.f32.mrf.mxu0
  %v1066 = vadd.f32 0.0, %v1065
  %v1067 = vpop.f32.mrf.mxu0
  %1068 = vmatprep.mubr.f32.mxu0 0.0
  %v1069 = vand.u32 %v970, 4294901760
  %v1070 = vsub.f32 %v970, %v1069
  %v1071 = vand.u32 %v1070, 4294901760
  %v1072 = vsub.f32 %v1070, %v1071
  %v1073 = vand.u32 %v1072, 4294901760
  %1074 = vmatmul.mubr.f32.gmra.mxu0 %v1073
  %v1075 = vpop.f32.mrf.mxu0
  %v1076 = vadd.f32 0.0, %v1075
  %v1077 = vpop.f32.mrf.mxu0
  %1078 = vmatprep.mubr.f32.mxu0 0.0
  %v1079 = vand.u32 %v973, 4294901760
  %v1080 = vsub.f32 %v973, %v1079
  %v1081 = vand.u32 %v1080, 4294901760
  %v1082 = vsub.f32 %v1080, %v1081
  %v1083 = vand.u32 %v1082, 4294901760
  %1084 = vmatmul.mubr.f32.gmra.mxu0 %v1083
  %v1085 = vpop.f32.mrf.mxu0
  %v1086 = vadd.f32 0.0, %v1085
  %v1087 = vpop.f32.mrf.mxu0
  %1088 = vmatprep.mubr.f32.mxu0 0.0
  %v1089 = vand.u32 %v976, 4294901760
  %v1090 = vsub.f32 %v976, %v1089
  %v1091 = vand.u32 %v1090, 4294901760
  %v1092 = vsub.f32 %v1090, %v1091
  %v1093 = vand.u32 %v1092, 4294901760
  %1094 = vmatmul.mubr.f32.gmra.mxu0 %v1093
  %v1095 = vpop.f32.mrf.mxu0
  %v1096 = vadd.f32 0.0, %v1095
  %v1097 = vpop.f32.mrf.mxu0
  %1098 = vmatprep.mubr.f32.mxu0 0.0
  %v1099 = vand.u32 %v979, 4294901760
  %v1100 = vsub.f32 %v979, %v1099
  %v1101 = vand.u32 %v1100, 4294901760
  %v1102 = vsub.f32 %v1100, %v1101
  %v1103 = vand.u32 %v1102, 4294901760
  %1104 = vmatmul.mubr.f32.gmra.mxu0 %v1103
  %v1105 = vpop.f32.mrf.mxu0
  %v1106 = vadd.f32 0.0, %v1105
  %v1107 = vpop.f32.mrf.mxu0
  %1108 = vmatprep.mubr.f32.mxu0 0.0
  %v1109 = vand.u32 %v982, 4294901760
  %v1110 = vsub.f32 %v982, %v1109
  %v1111 = vand.u32 %v1110, 4294901760
  %v1112 = vsub.f32 %v1110, %v1111
  %v1113 = vand.u32 %v1112, 4294901760
  %1114 = vmatmul.mubr.f32.gmra.mxu0 %v1113
  %v1115 = vpop.f32.mrf.mxu0
  %v1116 = vadd.f32 0.0, %v1115
  %v1117 = vpop.f32.mrf.mxu0
  %1118 = vmatprep.mubr.f32.mxu0 0.0
  %v1119 = vand.u32 %v985, 4294901760
  %v1120 = vsub.f32 %v985, %v1119
  %v1121 = vand.u32 %v1120, 4294901760
  %v1122 = vsub.f32 %v1120, %v1121
  %v1123 = vand.u32 %v1122, 4294901760
  %1124 = vmatmul.mubr.f32.gmra.mxu0 %v1123
  %v1125 = vpop.f32.mrf.mxu0
  %v1126 = vadd.f32 0.0, %v1125
  %v1127 = vpop.f32.mrf.mxu0
  %1128 = vmatprep.mubr.f32.mxu0 0.0
  %v1129 = vand.u32 %v988, 4294901760
  %v1130 = vsub.f32 %v988, %v1129
  %v1131 = vand.u32 %v1130, 4294901760
  %v1132 = vsub.f32 %v1130, %v1131
  %v1133 = vand.u32 %v1132, 4294901760
  %1134 = vmatmul.mubr.f32.gmra.mxu0 %v1133
  %v1135 = vpop.f32.mrf.mxu0
  %v1136 = vadd.f32 0.0, %v1135
  %v1137 = vpop.f32.mrf.mxu0
  %1138 = vdwg.mxu0
  %1139 = vmatprep.subr.mxu0 0.0
  %1140 = vmatpush1.msra.mxu0 0.0
  %1141 = vmatprep.subr.mxu0 0.0
  %1142 = vmatpush1.msra.mxu0 0.0
  %1143 = vmatprep.subr.mxu0 0.0
  %1144 = vmatpush1.msra.mxu0 0.0
  %1145 = vmatprep.subr.mxu0 0.0
  %1146 = vmatpush1.msra.mxu0 0.0
  %1147 = vmatprep.subr.mxu0 0.0
  %1148 = vmatpush1.msra.mxu0 0.0
  %1149 = vmatprep.subr.mxu0 0.0
  %1150 = vmatpush1.msra.mxu0 0.0
  %1151 = vmatprep.subr.mxu0 0.0
  %1152 = vmatpush1.msra.mxu0 0.0
  %1153 = vmatprep.subr.mxu0 0.0
  %1154 = vmatpush1.msra.mxu0 0.0
  %1155 = vmatprep.subr.mxu0 0.0
  %1156 = vmatpush1.msra.mxu0 0.0
  %1157 = vmatprep.subr.mxu0 0.0
  %1158 = vmatpush1.msra.mxu0 0.0
  %1159 = vmatprep.subr.mxu0 0.0
  %1160 = vmatpush1.msra.mxu0 0.0
  %1161 = vmatprep.subr.mxu0 0.0
  %1162 = vmatpush1.msra.mxu0 0.0
  %1163 = vmatprep.subr.mxu0 0.0
  %v1164 = vand.u32 %v964, 4294901760
  %v1165 = vsub.f32 %v964, %v1164
  %v1166 = vand.u32 %v1165, 4294901760
  %v1167 = vsub.f32 %v1165, %v1166
  %v1168 = vand.u32 %v1167, 4294901760
  %1169 = vmatpush1.msra.mxu0 %v1168
  %1170 = vmatprep.subr.mxu0 0.0
  %v1171 = vand.u32 %v963, 4294901760
  %v1172 = vsub.f32 %v963, %v1171
  %v1173 = vand.u32 %v1172, 4294901760
  %v1174 = vsub.f32 %v1172, %v1173
  %v1175 = vand.u32 %v1174, 4294901760
  %1176 = vmatpush1.msra.mxu0 %v1175
  %1177 = vmatprep.subr.mxu0 0.0
  %v1178 = vand.u32 %v962, 4294901760
  %v1179 = vsub.f32 %v962, %v1178
  %v1180 = vand.u32 %v1179, 4294901760
  %v1181 = vsub.f32 %v1179, %v1180
  %v1182 = vand.u32 %v1181, 4294901760
  %1183 = vmatpush1.msra.mxu0 %v1182
  %1184 = vmatprep.subr.mxu0 0.0
  %v1185 = vand.u32 %v961, 4294901760
  %v1186 = vsub.f32 %v961, %v1185
  %v1187 = vand.u32 %v1186, 4294901760
  %v1188 = vsub.f32 %v1186, %v1187
  %v1189 = vand.u32 %v1188, 4294901760
  %1190 = vmatpush1.msra.mxu0 %v1189
  %1191 = vmatprep.subr.mxu0 0.0
  %1192 = vmatpush2.msra.mxu0 0.0
  %1193 = vmatprep.subr.mxu0 0.0
  %1194 = vmatpush2.msra.mxu0 0.0
  %1195 = vmatprep.subr.mxu0 0.0
  %1196 = vmatpush2.msra.mxu0 0.0
  %1197 = vmatprep.subr.mxu0 0.0
  %1198 = vmatpush2.msra.mxu0 0.0
  %1199 = vmatprep.subr.mxu0 0.0
  %1200 = vmatpush2.msra.mxu0 0.0
  %1201 = vmatprep.subr.mxu0 0.0
  %1202 = vmatpush2.msra.mxu0 0.0
  %1203 = vmatprep.subr.mxu0 0.0
  %1204 = vmatpush2.msra.mxu0 0.0
  %1205 = vmatprep.subr.mxu0 0.0
  %1206 = vmatpush2.msra.mxu0 0.0
  %1207 = vmatprep.subr.mxu0 0.0
  %1208 = vmatpush2.msra.mxu0 0.0
  %1209 = vmatprep.subr.mxu0 0.0
  %1210 = vmatpush2.msra.mxu0 0.0
  %1211 = vmatprep.subr.mxu0 0.0
  %1212 = vmatpush2.msra.mxu0 0.0
  %1213 = vmatprep.subr.mxu0 0.0
  %1214 = vmatpush2.msra.mxu0 0.0
  %1215 = vmatprep.subr.mxu0 0.0
  %1216 = vmatpush2.msra.mxu0 0.0
  %1217 = vmatprep.subr.mxu0 0.0
  %1218 = vmatpush2.msra.mxu0 0.0
  %1219 = vmatprep.subr.mxu0 0.0
  %1220 = vmatpush2.msra.mxu0 0.0
  %1221 = vmatprep.subr.mxu0 0.0
  %1222 = vmatpush2.msra.mxu0 0.0
  %1223 = vmatprep.mubr.f32.mxu0 0.0
  %v1224 = vand.u32 %v967, 4294901760
  %1225 = vmatmul.mubr.f32.gmra.mxu0 %v1224
  %v1226 = vpop.f32.mrf.mxu0
  %v1227 = vadd.f32 %v1066, %v1226
  %v1228 = vpop.f32.mrf.mxu0
  %1229 = vmatprep.mubr.f32.mxu0 0.0
  %v1230 = vand.u32 %v970, 4294901760
  %1231 = vmatmul.mubr.f32.gmra.mxu0 %v1230
  %v1232 = vpop.f32.mrf.mxu0
  %v1233 = vadd.f32 %v1076, %v1232
  %v1234 = vpop.f32.mrf.mxu0
  %1235 = vmatprep.mubr.f32.mxu0 0.0
  %v1236 = vand.u32 %v973, 4294901760
  %1237 = vmatmul.mubr.f32.gmra.mxu0 %v1236
  %v1238 = vpop.f32.mrf.mxu0
  %v1239 = vadd.f32 %v1086, %v1238
  %v1240 = vpop.f32.mrf.mxu0
  %1241 = vmatprep.mubr.f32.mxu0 0.0
  %v1242 = vand.u32 %v976, 4294901760
  %1243 = vmatmul.mubr.f32.gmra.mxu0 %v1242
  %v1244 = vpop.f32.mrf.mxu0
  %v1245 = vadd.f32 %v1096, %v1244
  %v1246 = vpop.f32.mrf.mxu0
  %1247 = vmatprep.mubr.f32.mxu0 0.0
  %v1248 = vand.u32 %v979, 4294901760
  %1249 = vmatmul.mubr.f32.gmra.mxu0 %v1248
  %v1250 = vpop.f32.mrf.mxu0
  %v1251 = vadd.f32 %v1106, %v1250
  %v1252 = vpop.f32.mrf.mxu0
  %1253 = vmatprep.mubr.f32.mxu0 0.0
  %v1254 = vand.u32 %v982, 4294901760
  %1255 = vmatmul.mubr.f32.gmra.mxu0 %v1254
  %v1256 = vpop.f32.mrf.mxu0
  %v1257 = vadd.f32 %v1116, %v1256
  %v1258 = vpop.f32.mrf.mxu0
  %1259 = vmatprep.mubr.f32.mxu0 0.0
  %v1260 = vand.u32 %v985, 4294901760
  %1261 = vmatmul.mubr.f32.gmra.mxu0 %v1260
  %v1262 = vpop.f32.mrf.mxu0
  %v1263 = vadd.f32 %v1126, %v1262
  %v1264 = vpop.f32.mrf.mxu0
  %1265 = vmatprep.mubr.f32.mxu0 0.0
  %v1266 = vand.u32 %v988, 4294901760
  %1267 = vmatmul.mubr.f32.gmra.mxu0 %v1266
  %v1268 = vpop.f32.mrf.mxu0
  %v1269 = vadd.f32 %v1136, %v1268
  %v1270 = vpop.f32.mrf.mxu0
  %1271 = vdwg.mxu0
  %1272 = vmatprep.subr.mxu0 0.0
  %1273 = vmatpush1.msra.mxu0 0.0
  %1274 = vmatprep.subr.mxu0 0.0
  %1275 = vmatpush1.msra.mxu0 0.0
  %1276 = vmatprep.subr.mxu0 0.0
  %1277 = vmatpush1.msra.mxu0 0.0
  %1278 = vmatprep.subr.mxu0 0.0
  %1279 = vmatpush1.msra.mxu0 0.0
  %1280 = vmatprep.subr.mxu0 0.0
  %1281 = vmatpush1.msra.mxu0 0.0
  %1282 = vmatprep.subr.mxu0 0.0
  %1283 = vmatpush1.msra.mxu0 0.0
  %1284 = vmatprep.subr.mxu0 0.0
  %1285 = vmatpush1.msra.mxu0 0.0
  %1286 = vmatprep.subr.mxu0 0.0
  %1287 = vmatpush1.msra.mxu0 0.0
  %1288 = vmatprep.subr.mxu0 0.0
  %1289 = vmatpush1.msra.mxu0 0.0
  %1290 = vmatprep.subr.mxu0 0.0
  %1291 = vmatpush1.msra.mxu0 0.0
  %1292 = vmatprep.subr.mxu0 0.0
  %1293 = vmatpush1.msra.mxu0 0.0
  %1294 = vmatprep.subr.mxu0 0.0
  %1295 = vmatpush1.msra.mxu0 0.0
  %1296 = vmatprep.subr.mxu0 0.0
  %v1297 = vand.u32 %v964, 4294901760
  %v1298 = vsub.f32 %v964, %v1297
  %1299 = vmatpush1.msra.mxu0 %v1298
  %1300 = vmatprep.subr.mxu0 0.0
  %v1301 = vand.u32 %v963, 4294901760
  %v1302 = vsub.f32 %v963, %v1301
  %1303 = vmatpush1.msra.mxu0 %v1302
  %1304 = vmatprep.subr.mxu0 0.0
  %v1305 = vand.u32 %v962, 4294901760
  %v1306 = vsub.f32 %v962, %v1305
  %1307 = vmatpush1.msra.mxu0 %v1306
  %1308 = vmatprep.subr.mxu0 0.0
  %v1309 = vand.u32 %v961, 4294901760
  %v1310 = vsub.f32 %v961, %v1309
  %1311 = vmatpush1.msra.mxu0 %v1310
  %1312 = vmatprep.subr.mxu0 0.0
  %1313 = vmatpush2.msra.mxu0 0.0
  %1314 = vmatprep.subr.mxu0 0.0
  %1315 = vmatpush2.msra.mxu0 0.0
  %1316 = vmatprep.subr.mxu0 0.0
  %1317 = vmatpush2.msra.mxu0 0.0
  %1318 = vmatprep.subr.mxu0 0.0
  %1319 = vmatpush2.msra.mxu0 0.0
  %1320 = vmatprep.subr.mxu0 0.0
  %1321 = vmatpush2.msra.mxu0 0.0
  %1322 = vmatprep.subr.mxu0 0.0
  %1323 = vmatpush2.msra.mxu0 0.0
  %1324 = vmatprep.subr.mxu0 0.0
  %1325 = vmatpush2.msra.mxu0 0.0
  %1326 = vmatprep.subr.mxu0 0.0
  %1327 = vmatpush2.msra.mxu0 0.0
  %1328 = vmatprep.subr.mxu0 0.0
  %1329 = vmatpush2.msra.mxu0 0.0
  %1330 = vmatprep.subr.mxu0 0.0
  %1331 = vmatpush2.msra.mxu0 0.0
  %1332 = vmatprep.subr.mxu0 0.0
  %1333 = vmatpush2.msra.mxu0 0.0
  %1334 = vmatprep.subr.mxu0 0.0
  %1335 = vmatpush2.msra.mxu0 0.0
  %1336 = vmatprep.subr.mxu0 0.0
  %1337 = vmatpush2.msra.mxu0 0.0
  %1338 = vmatprep.subr.mxu0 0.0
  %1339 = vmatpush2.msra.mxu0 0.0
  %1340 = vmatprep.subr.mxu0 0.0
  %1341 = vmatpush2.msra.mxu0 0.0
  %1342 = vmatprep.subr.mxu0 0.0
  %1343 = vmatpush2.msra.mxu0 0.0
  %1344 = vmatprep.mubr.f32.mxu0 0.0
  %v1345 = vand.u32 %v967, 4294901760
  %v1346 = vsub.f32 %v967, %v1345
  %1347 = vmatmul.mubr.f32.gmra.mxu0 %v1346
  %v1348 = vpop.f32.mrf.mxu0
  %v1349 = vadd.f32 %v1227, %v1348
  %v1350 = vpop.f32.mrf.mxu0
  %1351 = vmatprep.mubr.f32.mxu0 0.0
  %v1352 = vand.u32 %v970, 4294901760
  %v1353 = vsub.f32 %v970, %v1352
  %1354 = vmatmul.mubr.f32.gmra.mxu0 %v1353
  %v1355 = vpop.f32.mrf.mxu0
  %v1356 = vadd.f32 %v1233, %v1355
  %v1357 = vpop.f32.mrf.mxu0
  %1358 = vmatprep.mubr.f32.mxu0 0.0
  %v1359 = vand.u32 %v973, 4294901760
  %v1360 = vsub.f32 %v973, %v1359
  %1361 = vmatmul.mubr.f32.gmra.mxu0 %v1360
  %v1362 = vpop.f32.mrf.mxu0
  %v1363 = vadd.f32 %v1239, %v1362
  %v1364 = vpop.f32.mrf.mxu0
  %1365 = vmatprep.mubr.f32.mxu0 0.0
  %v1366 = vand.u32 %v976, 4294901760
  %v1367 = vsub.f32 %v976, %v1366
  %1368 = vmatmul.mubr.f32.gmra.mxu0 %v1367
  %v1369 = vpop.f32.mrf.mxu0
  %v1370 = vadd.f32 %v1245, %v1369
  %v1371 = vpop.f32.mrf.mxu0
  %1372 = vmatprep.mubr.f32.mxu0 0.0
  %v1373 = vand.u32 %v979, 4294901760
  %v1374 = vsub.f32 %v979, %v1373
  %1375 = vmatmul.mubr.f32.gmra.mxu0 %v1374
  %v1376 = vpop.f32.mrf.mxu0
  %v1377 = vadd.f32 %v1251, %v1376
  %v1378 = vpop.f32.mrf.mxu0
  %1379 = vmatprep.mubr.f32.mxu0 0.0
  %v1380 = vand.u32 %v982, 4294901760
  %v1381 = vsub.f32 %v982, %v1380
  %1382 = vmatmul.mubr.f32.gmra.mxu0 %v1381
  %v1383 = vpop.f32.mrf.mxu0
  %v1384 = vadd.f32 %v1257, %v1383
  %v1385 = vpop.f32.mrf.mxu0
  %1386 = vmatprep.mubr.f32.mxu0 0.0
  %v1387 = vand.u32 %v985, 4294901760
  %v1388 = vsub.f32 %v985, %v1387
  %1389 = vmatmul.mubr.f32.gmra.mxu0 %v1388
  %v1390 = vpop.f32.mrf.mxu0
  %v1391 = vadd.f32 %v1263, %v1390
  %v1392 = vpop.f32.mrf.mxu0
  %1393 = vmatprep.mubr.f32.mxu0 0.0
  %v1394 = vand.u32 %v988, 4294901760
  %v1395 = vsub.f32 %v988, %v1394
  %1396 = vmatmul.mubr.f32.gmra.mxu0 %v1395
  %v1397 = vpop.f32.mrf.mxu0
  %v1398 = vadd.f32 %v1269, %v1397
  %v1399 = vpop.f32.mrf.mxu0
  %1400 = vdwg.mxu0
  %1401 = vmatprep.subr.mxu0 0.0
  %1402 = vmatpush1.msra.mxu0 0.0
  %1403 = vmatprep.subr.mxu0 0.0
  %1404 = vmatpush1.msra.mxu0 0.0
  %1405 = vmatprep.subr.mxu0 0.0
  %1406 = vmatpush1.msra.mxu0 0.0
  %1407 = vmatprep.subr.mxu0 0.0
  %1408 = vmatpush1.msra.mxu0 0.0
  %1409 = vmatprep.subr.mxu0 0.0
  %1410 = vmatpush1.msra.mxu0 0.0
  %1411 = vmatprep.subr.mxu0 0.0
  %1412 = vmatpush1.msra.mxu0 0.0
  %1413 = vmatprep.subr.mxu0 0.0
  %1414 = vmatpush1.msra.mxu0 0.0
  %1415 = vmatprep.subr.mxu0 0.0
  %1416 = vmatpush1.msra.mxu0 0.0
  %1417 = vmatprep.subr.mxu0 0.0
  %1418 = vmatpush1.msra.mxu0 0.0
  %1419 = vmatprep.subr.mxu0 0.0
  %1420 = vmatpush1.msra.mxu0 0.0
  %1421 = vmatprep.subr.mxu0 0.0
  %1422 = vmatpush1.msra.mxu0 0.0
  %1423 = vmatprep.subr.mxu0 0.0
  %1424 = vmatpush1.msra.mxu0 0.0
  %1425 = vmatprep.subr.mxu0 0.0
  %v1426 = vand.u32 %v964, 4294901760
  %1427 = vmatpush1.msra.mxu0 %v1426
  %1428 = vmatprep.subr.mxu0 0.0
  %v1429 = vand.u32 %v963, 4294901760
  %1430 = vmatpush1.msra.mxu0 %v1429
  %1431 = vmatprep.subr.mxu0 0.0
  %v1432 = vand.u32 %v962, 4294901760
  %1433 = vmatpush1.msra.mxu0 %v1432
  %1434 = vmatprep.subr.mxu0 0.0
  %v1435 = vand.u32 %v961, 4294901760
  %1436 = vmatpush1.msra.mxu0 %v1435
  %1437 = vmatprep.subr.mxu0 0.0
  %1438 = vmatpush2.msra.mxu0 0.0
  %1439 = vmatprep.subr.mxu0 0.0
  %1440 = vmatpush2.msra.mxu0 0.0
  %1441 = vmatprep.subr.mxu0 0.0
  %1442 = vmatpush2.msra.mxu0 0.0
  %1443 = vmatprep.subr.mxu0 0.0
  %1444 = vmatpush2.msra.mxu0 0.0
  %1445 = vmatprep.subr.mxu0 0.0
  %1446 = vmatpush2.msra.mxu0 0.0
  %1447 = vmatprep.subr.mxu0 0.0
  %1448 = vmatpush2.msra.mxu0 0.0
  %1449 = vmatprep.subr.mxu0 0.0
  %1450 = vmatpush2.msra.mxu0 0.0
  %1451 = vmatprep.subr.mxu0 0.0
  %1452 = vmatpush2.msra.mxu0 0.0
  %1453 = vmatprep.subr.mxu0 0.0
  %1454 = vmatpush2.msra.mxu0 0.0
  %1455 = vmatprep.subr.mxu0 0.0
  %1456 = vmatpush2.msra.mxu0 0.0
  %1457 = vmatprep.subr.mxu0 0.0
  %1458 = vmatpush2.msra.mxu0 0.0
  %1459 = vmatprep.subr.mxu0 0.0
  %1460 = vmatpush2.msra.mxu0 0.0
  %1461 = vmatprep.subr.mxu0 0.0
  %1462 = vmatpush2.msra.mxu0 0.0
  %1463 = vmatprep.subr.mxu0 0.0
  %1464 = vmatpush2.msra.mxu0 0.0
  %1465 = vmatprep.subr.mxu0 0.0
  %1466 = vmatpush2.msra.mxu0 0.0
  %1467 = vmatprep.subr.mxu0 0.0
  %1468 = vmatpush2.msra.mxu0 0.0
  %1469 = vmatprep.mubr.f32.mxu0 0.0
  %v1470 = vand.u32 %v967, 4294901760
  %v1471 = vsub.f32 %v967, %v1470
  %v1472 = vand.u32 %v1471, 4294901760
  %1473 = vmatmul.mubr.f32.gmra.mxu0 %v1472
  %v1474 = vpop.f32.mrf.mxu0
  %v1475 = vadd.f32 %v1349, %v1474
  %v1476 = vpop.f32.mrf.mxu0
  %1477 = vmatprep.mubr.f32.mxu0 0.0
  %v1478 = vand.u32 %v970, 4294901760
  %v1479 = vsub.f32 %v970, %v1478
  %v1480 = vand.u32 %v1479, 4294901760
  %1481 = vmatmul.mubr.f32.gmra.mxu0 %v1480
  %v1482 = vpop.f32.mrf.mxu0
  %v1483 = vadd.f32 %v1356, %v1482
  %v1484 = vpop.f32.mrf.mxu0
  %1485 = vmatprep.mubr.f32.mxu0 0.0
  %v1486 = vand.u32 %v973, 4294901760
  %v1487 = vsub.f32 %v973, %v1486
  %v1488 = vand.u32 %v1487, 4294901760
  %1489 = vmatmul.mubr.f32.gmra.mxu0 %v1488
  %v1490 = vpop.f32.mrf.mxu0
  %v1491 = vadd.f32 %v1363, %v1490
  %v1492 = vpop.f32.mrf.mxu0
  %1493 = vmatprep.mubr.f32.mxu0 0.0
  %v1494 = vand.u32 %v976, 4294901760
  %v1495 = vsub.f32 %v976, %v1494
  %v1496 = vand.u32 %v1495, 4294901760
  %1497 = vmatmul.mubr.f32.gmra.mxu0 %v1496
  %v1498 = vpop.f32.mrf.mxu0
  %v1499 = vadd.f32 %v1370, %v1498
  %v1500 = vpop.f32.mrf.mxu0
  %1501 = vmatprep.mubr.f32.mxu0 0.0
  %v1502 = vand.u32 %v979, 4294901760
  %v1503 = vsub.f32 %v979, %v1502
  %v1504 = vand.u32 %v1503, 4294901760
  %1505 = vmatmul.mubr.f32.gmra.mxu0 %v1504
  %v1506 = vpop.f32.mrf.mxu0
  %v1507 = vadd.f32 %v1377, %v1506
  %v1508 = vpop.f32.mrf.mxu0
  %1509 = vmatprep.mubr.f32.mxu0 0.0
  %v1510 = vand.u32 %v982, 4294901760
  %v1511 = vsub.f32 %v982, %v1510
  %v1512 = vand.u32 %v1511, 4294901760
  %1513 = vmatmul.mubr.f32.gmra.mxu0 %v1512
  %v1514 = vpop.f32.mrf.mxu0
  %v1515 = vadd.f32 %v1384, %v1514
  %v1516 = vpop.f32.mrf.mxu0
  %1517 = vmatprep.mubr.f32.mxu0 0.0
  %v1518 = vand.u32 %v985, 4294901760
  %v1519 = vsub.f32 %v985, %v1518
  %v1520 = vand.u32 %v1519, 4294901760
  %1521 = vmatmul.mubr.f32.gmra.mxu0 %v1520
  %v1522 = vpop.f32.mrf.mxu0
  %v1523 = vadd.f32 %v1391, %v1522
  %v1524 = vpop.f32.mrf.mxu0
  %1525 = vmatprep.mubr.f32.mxu0 0.0
  %v1526 = vand.u32 %v988, 4294901760
  %v1527 = vsub.f32 %v988, %v1526
  %v1528 = vand.u32 %v1527, 4294901760
  %1529 = vmatmul.mubr.f32.gmra.mxu0 %v1528
  %v1530 = vpop.f32.mrf.mxu0
  %v1531 = vadd.f32 %v1398, %v1530
  %v1532 = vpop.f32.mrf.mxu0
  %1533 = vdwg.mxu0
  %1534 = vmatprep.subr.mxu0 0.0
  %1535 = vmatpush1.msra.mxu0 0.0
  %1536 = vmatprep.subr.mxu0 0.0
  %1537 = vmatpush1.msra.mxu0 0.0
  %1538 = vmatprep.subr.mxu0 0.0
  %1539 = vmatpush1.msra.mxu0 0.0
  %1540 = vmatprep.subr.mxu0 0.0
  %1541 = vmatpush1.msra.mxu0 0.0
  %1542 = vmatprep.subr.mxu0 0.0
  %1543 = vmatpush1.msra.mxu0 0.0
  %1544 = vmatprep.subr.mxu0 0.0
  %1545 = vmatpush1.msra.mxu0 0.0
  %1546 = vmatprep.subr.mxu0 0.0
  %1547 = vmatpush1.msra.mxu0 0.0
  %1548 = vmatprep.subr.mxu0 0.0
  %1549 = vmatpush1.msra.mxu0 0.0
  %1550 = vmatprep.subr.mxu0 0.0
  %1551 = vmatpush1.msra.mxu0 0.0
  %1552 = vmatprep.subr.mxu0 0.0
  %1553 = vmatpush1.msra.mxu0 0.0
  %1554 = vmatprep.subr.mxu0 0.0
  %1555 = vmatpush1.msra.mxu0 0.0
  %1556 = vmatprep.subr.mxu0 0.0
  %1557 = vmatpush1.msra.mxu0 0.0
  %1558 = vmatprep.subr.mxu0 0.0
  %v1559 = vand.u32 %v964, 4294901760
  %v1560 = vsub.f32 %v964, %v1559
  %v1561 = vand.u32 %v1560, 4294901760
  %1562 = vmatpush1.msra.mxu0 %v1561
  %1563 = vmatprep.subr.mxu0 0.0
  %v1564 = vand.u32 %v963, 4294901760
  %v1565 = vsub.f32 %v963, %v1564
  %v1566 = vand.u32 %v1565, 4294901760
  %1567 = vmatpush1.msra.mxu0 %v1566
  %1568 = vmatprep.subr.mxu0 0.0
  %v1569 = vand.u32 %v962, 4294901760
  %v1570 = vsub.f32 %v962, %v1569
  %v1571 = vand.u32 %v1570, 4294901760
  %1572 = vmatpush1.msra.mxu0 %v1571
  %1573 = vmatprep.subr.mxu0 0.0
  %v1574 = vand.u32 %v961, 4294901760
  %v1575 = vsub.f32 %v961, %v1574
  %v1576 = vand.u32 %v1575, 4294901760
  %1577 = vmatpush1.msra.mxu0 %v1576
  %1578 = vmatprep.subr.mxu0 0.0
  %1579 = vmatpush2.msra.mxu0 0.0
  %1580 = vmatprep.subr.mxu0 0.0
  %1581 = vmatpush2.msra.mxu0 0.0
  %1582 = vmatprep.subr.mxu0 0.0
  %1583 = vmatpush2.msra.mxu0 0.0
  %1584 = vmatprep.subr.mxu0 0.0
  %1585 = vmatpush2.msra.mxu0 0.0
  %1586 = vmatprep.subr.mxu0 0.0
  %1587 = vmatpush2.msra.mxu0 0.0
  %1588 = vmatprep.subr.mxu0 0.0
  %1589 = vmatpush2.msra.mxu0 0.0
  %1590 = vmatprep.subr.mxu0 0.0
  %1591 = vmatpush2.msra.mxu0 0.0
  %1592 = vmatprep.subr.mxu0 0.0
  %1593 = vmatpush2.msra.mxu0 0.0
  %1594 = vmatprep.subr.mxu0 0.0
  %1595 = vmatpush2.msra.mxu0 0.0
  %1596 = vmatprep.subr.mxu0 0.0
  %1597 = vmatpush2.msra.mxu0 0.0
  %1598 = vmatprep.subr.mxu0 0.0
  %1599 = vmatpush2.msra.mxu0 0.0
  %1600 = vmatprep.subr.mxu0 0.0
  %1601 = vmatpush2.msra.mxu0 0.0
  %1602 = vmatprep.subr.mxu0 0.0
  %1603 = vmatpush2.msra.mxu0 0.0
  %1604 = vmatprep.subr.mxu0 0.0
  %1605 = vmatpush2.msra.mxu0 0.0
  %1606 = vmatprep.subr.mxu0 0.0
  %1607 = vmatpush2.msra.mxu0 0.0
  %1608 = vmatprep.subr.mxu0 0.0
  %1609 = vmatpush2.msra.mxu0 0.0
  %1610 = vmatprep.mubr.f32.mxu0 0.0
  %v1611 = vand.u32 %v967, 4294901760
  %1612 = vmatmul.mubr.f32.gmra.mxu0 %v1611
  %v1613 = vpop.f32.mrf.mxu0
  %v1614 = vadd.f32 %v1475, %v1613
  %v1615 = vpop.f32.mrf.mxu0
  %1616 = vmatprep.mubr.f32.mxu0 0.0
  %v1617 = vand.u32 %v970, 4294901760
  %1618 = vmatmul.mubr.f32.gmra.mxu0 %v1617
  %v1619 = vpop.f32.mrf.mxu0
  %v1620 = vadd.f32 %v1483, %v1619
  %v1621 = vpop.f32.mrf.mxu0
  %1622 = vmatprep.mubr.f32.mxu0 0.0
  %v1623 = vand.u32 %v973, 4294901760
  %1624 = vmatmul.mubr.f32.gmra.mxu0 %v1623
  %v1625 = vpop.f32.mrf.mxu0
  %v1626 = vadd.f32 %v1491, %v1625
  %v1627 = vpop.f32.mrf.mxu0
  %1628 = vmatprep.mubr.f32.mxu0 0.0
  %v1629 = vand.u32 %v976, 4294901760
  %1630 = vmatmul.mubr.f32.gmra.mxu0 %v1629
  %v1631 = vpop.f32.mrf.mxu0
  %v1632 = vadd.f32 %v1499, %v1631
  %v1633 = vpop.f32.mrf.mxu0
  %1634 = vmatprep.mubr.f32.mxu0 0.0
  %v1635 = vand.u32 %v979, 4294901760
  %1636 = vmatmul.mubr.f32.gmra.mxu0 %v1635
  %v1637 = vpop.f32.mrf.mxu0
  %v1638 = vadd.f32 %v1507, %v1637
  %v1639 = vpop.f32.mrf.mxu0
  %1640 = vmatprep.mubr.f32.mxu0 0.0
  %v1641 = vand.u32 %v982, 4294901760
  %1642 = vmatmul.mubr.f32.gmra.mxu0 %v1641
  %v1643 = vpop.f32.mrf.mxu0
  %v1644 = vadd.f32 %v1515, %v1643
  %v1645 = vpop.f32.mrf.mxu0
  %1646 = vmatprep.mubr.f32.mxu0 0.0
  %v1647 = vand.u32 %v985, 4294901760
  %1648 = vmatmul.mubr.f32.gmra.mxu0 %v1647
  %v1649 = vpop.f32.mrf.mxu0
  %v1650 = vadd.f32 %v1523, %v1649
  %v1651 = vpop.f32.mrf.mxu0
  %1652 = vmatprep.mubr.f32.mxu0 0.0
  %v1653 = vand.u32 %v988, 4294901760
  %1654 = vmatmul.mubr.f32.gmra.mxu0 %v1653
  %v1655 = vpop.f32.mrf.mxu0
  %v1656 = vadd.f32 %v1531, %v1655
  %v1657 = vpop.f32.mrf.mxu0
  %1658 = vdwg.mxu0
  %1659 = vmatprep.subr.mxu0 0.0
  %1660 = vmatpush1.msra.mxu0 0.0
  %1661 = vmatprep.subr.mxu0 0.0
  %1662 = vmatpush1.msra.mxu0 0.0
  %1663 = vmatprep.subr.mxu0 0.0
  %1664 = vmatpush1.msra.mxu0 0.0
  %1665 = vmatprep.subr.mxu0 0.0
  %1666 = vmatpush1.msra.mxu0 0.0
  %1667 = vmatprep.subr.mxu0 0.0
  %1668 = vmatpush1.msra.mxu0 0.0
  %1669 = vmatprep.subr.mxu0 0.0
  %1670 = vmatpush1.msra.mxu0 0.0
  %1671 = vmatprep.subr.mxu0 0.0
  %1672 = vmatpush1.msra.mxu0 0.0
  %1673 = vmatprep.subr.mxu0 0.0
  %1674 = vmatpush1.msra.mxu0 0.0
  %1675 = vmatprep.subr.mxu0 0.0
  %1676 = vmatpush1.msra.mxu0 0.0
  %1677 = vmatprep.subr.mxu0 0.0
  %1678 = vmatpush1.msra.mxu0 0.0
  %1679 = vmatprep.subr.mxu0 0.0
  %1680 = vmatpush1.msra.mxu0 0.0
  %1681 = vmatprep.subr.mxu0 0.0
  %1682 = vmatpush1.msra.mxu0 0.0
  %1683 = vmatprep.subr.mxu0 0.0
  %v1684 = vand.u32 %v964, 4294901760
  %1685 = vmatpush1.msra.mxu0 %v1684
  %1686 = vmatprep.subr.mxu0 0.0
  %v1687 = vand.u32 %v963, 4294901760
  %1688 = vmatpush1.msra.mxu0 %v1687
  %1689 = vmatprep.subr.mxu0 0.0
  %v1690 = vand.u32 %v962, 4294901760
  %1691 = vmatpush1.msra.mxu0 %v1690
  %1692 = vmatprep.subr.mxu0 0.0
  %v1693 = vand.u32 %v961, 4294901760
  %1694 = vmatpush1.msra.mxu0 %v1693
  %1695 = vmatprep.subr.mxu0 0.0
  %1696 = vmatpush2.msra.mxu0 0.0
  %1697 = vmatprep.subr.mxu0 0.0
  %1698 = vmatpush2.msra.mxu0 0.0
  %1699 = vmatprep.subr.mxu0 0.0
  %1700 = vmatpush2.msra.mxu0 0.0
  %1701 = vmatprep.subr.mxu0 0.0
  %1702 = vmatpush2.msra.mxu0 0.0
  %1703 = vmatprep.subr.mxu0 0.0
  %1704 = vmatpush2.msra.mxu0 0.0
  %1705 = vmatprep.subr.mxu0 0.0
  %1706 = vmatpush2.msra.mxu0 0.0
  %1707 = vmatprep.subr.mxu0 0.0
  %1708 = vmatpush2.msra.mxu0 0.0
  %1709 = vmatprep.subr.mxu0 0.0
  %1710 = vmatpush2.msra.mxu0 0.0
  %1711 = vmatprep.subr.mxu0 0.0
  %1712 = vmatpush2.msra.mxu0 0.0
  %1713 = vmatprep.subr.mxu0 0.0
  %1714 = vmatpush2.msra.mxu0 0.0
  %1715 = vmatprep.subr.mxu0 0.0
  %1716 = vmatpush2.msra.mxu0 0.0
  %1717 = vmatprep.subr.mxu0 0.0
  %1718 = vmatpush2.msra.mxu0 0.0
  %1719 = vmatprep.subr.mxu0 0.0
  %1720 = vmatpush2.msra.mxu0 0.0
  %1721 = vmatprep.subr.mxu0 0.0
  %1722 = vmatpush2.msra.mxu0 0.0
  %1723 = vmatprep.subr.mxu0 0.0
  %1724 = vmatpush2.msra.mxu0 0.0
  %1725 = vmatprep.subr.mxu0 0.0
  %1726 = vmatpush2.msra.mxu0 0.0
  %1727 = vmatprep.mubr.f32.mxu0 0.0
  %v1728 = vand.u32 %v967, 4294901760
  %1729 = vmatmul.mubr.f32.gmra.mxu0 %v1728
  %v1730 = vpop.f32.mrf.mxu0
  %v1731 = vadd.f32 %v1614, %v1730
  %v1732 = vpop.f32.mrf.mxu0
  %1733 = vmatprep.mubr.f32.mxu0 0.0
  %v1734 = vand.u32 %v970, 4294901760
  %1735 = vmatmul.mubr.f32.gmra.mxu0 %v1734
  %v1736 = vpop.f32.mrf.mxu0
  %v1737 = vadd.f32 %v1620, %v1736
  %v1738 = vpop.f32.mrf.mxu0
  %1739 = vmatprep.mubr.f32.mxu0 0.0
  %v1740 = vand.u32 %v973, 4294901760
  %1741 = vmatmul.mubr.f32.gmra.mxu0 %v1740
  %v1742 = vpop.f32.mrf.mxu0
  %v1743 = vadd.f32 %v1626, %v1742
  %v1744 = vpop.f32.mrf.mxu0
  %1745 = vmatprep.mubr.f32.mxu0 0.0
  %v1746 = vand.u32 %v976, 4294901760
  %1747 = vmatmul.mubr.f32.gmra.mxu0 %v1746
  %v1748 = vpop.f32.mrf.mxu0
  %v1749 = vadd.f32 %v1632, %v1748
  %v1750 = vpop.f32.mrf.mxu0
  %1751 = vmatprep.mubr.f32.mxu0 0.0
  %v1752 = vand.u32 %v979, 4294901760
  %1753 = vmatmul.mubr.f32.gmra.mxu0 %v1752
  %v1754 = vpop.f32.mrf.mxu0
  %v1755 = vadd.f32 %v1638, %v1754
  %v1756 = vpop.f32.mrf.mxu0
  %1757 = vmatprep.mubr.f32.mxu0 0.0
  %v1758 = vand.u32 %v982, 4294901760
  %1759 = vmatmul.mubr.f32.gmra.mxu0 %v1758
  %v1760 = vpop.f32.mrf.mxu0
  %v1761 = vadd.f32 %v1644, %v1760
  %v1762 = vpop.f32.mrf.mxu0
  %1763 = vmatprep.mubr.f32.mxu0 0.0
  %v1764 = vand.u32 %v985, 4294901760
  %1765 = vmatmul.mubr.f32.gmra.mxu0 %v1764
  %v1766 = vpop.f32.mrf.mxu0
  %v1767 = vadd.f32 %v1650, %v1766
  %v1768 = vpop.f32.mrf.mxu0
  %1769 = vmatprep.mubr.f32.mxu0 0.0
  %v1770 = vand.u32 %v988, 4294901760
  %1771 = vmatmul.mubr.f32.gmra.mxu0 %v1770
  %v1772 = vpop.f32.mrf.mxu0
  %v1773 = vadd.f32 %v1656, %v1772
  %v1774 = vpop.f32.mrf.mxu0
  %1775 = vdwg.mxu0
  %v1776 = vadd.f32 %v1731, %v929
  %v1777 = vadd.f32 %v1737, %v929
  %v1778 = vadd.f32 %v1743, %v929
  %v1779 = vadd.f32 %v1749, %v929
  %v1780 = vadd.f32 %v1755, %v929
  %v1781 = vadd.f32 %v1761, %v929
  %v1782 = vadd.f32 %v1767, %v929
  %v1783 = vadd.f32 %v1773, %v929
  %v1784 = vmul.f32 %v927, 0.0
  %v1785 = vadd.f32 %v1784, %v1776
  %vm1786 = vcmp.gt.f32.partialorder %v1785, 1.0
  %v1787 = vsel %vm1786, 1, 0
  %v1788 = vcvt.s32.f32 %v1787
  %v1789 = vmul.f32 %v927, %v1785
  %v1790 = vsub.f32 1.0, %v1788
  %v1791 = vmul.f32 %v1789, %v1790
  %v1792 = vadd.f32 %v1791, %v1777
  %vm1793 = vcmp.gt.f32.partialorder %v1792, 1.0
  %v1794 = vsel %vm1793, 1, 0
  %v1795 = vcvt.s32.f32 %v1794
  %v1796 = vmul.f32 %v927, %v1792
  %v1797 = vsub.f32 1.0, %v1795
  %v1798 = vmul.f32 %v1796, %v1797
  %v1799 = vadd.f32 %v1798, %v1778
  %vm1800 = vcmp.gt.f32.partialorder %v1799, 1.0
  %v1801 = vsel %vm1800, 1, 0
  %v1802 = vcvt.s32.f32 %v1801
  %v1803 = vmul.f32 %v927, %v1799
  %v1804 = vsub.f32 1.0, %v1802
  %v1805 = vmul.f32 %v1803, %v1804
  %v1806 = vadd.f32 %v1805, %v1779
  %vm1807 = vcmp.gt.f32.partialorder %v1806, 1.0
  %v1808 = vsel %vm1807, 1, 0
  %v1809 = vcvt.s32.f32 %v1808
  %v1810 = vmul.f32 %v927, %v1806
  %v1811 = vsub.f32 1.0, %v1809
  %v1812 = vmul.f32 %v1810, %v1811
  %v1813 = vadd.f32 %v1812, %v1780
  %vm1814 = vcmp.gt.f32.partialorder %v1813, 1.0
  %v1815 = vsel %vm1814, 1, 0
  %v1816 = vcvt.s32.f32 %v1815
  %v1817 = vmul.f32 %v927, %v1813
  %v1818 = vsub.f32 1.0, %v1816
  %v1819 = vmul.f32 %v1817, %v1818
  %v1820 = vadd.f32 %v1819, %v1781
  %vm1821 = vcmp.gt.f32.partialorder %v1820, 1.0
  %v1822 = vsel %vm1821, 1, 0
  %v1823 = vcvt.s32.f32 %v1822
  %v1824 = vmul.f32 %v927, %v1820
  %v1825 = vsub.f32 1.0, %v1823
  %v1826 = vmul.f32 %v1824, %v1825
  %v1827 = vadd.f32 %v1826, %v1782
  %vm1828 = vcmp.gt.f32.partialorder %v1827, 1.0
  %v1829 = vsel %vm1828, 1, 0
  %v1830 = vcvt.s32.f32 %v1829
  %v1831 = vmul.f32 %v927, %v1827
  %v1832 = vsub.f32 1.0, %v1830
  %v1833 = vmul.f32 %v1831, %v1832
  %v1834 = vadd.f32 %v1833, %v1783
  %vm1835 = vcmp.gt.f32.partialorder %v1834, 1.0
  %v1836 = vsel %vm1835, 1, 0
  %v1837 = vcvt.s32.f32 %v1836
  %s1838 = scalar_lea.vmem %s1, 64
  %v1839 = vld [vmem:[%s1838] sm:$0xff]
  %s1840 = scalar_lea.vmem %s1, 72
  %v1841 = vld [vmem:[%s1840] sm:$0xff]
  %s1842 = scalar_lea.vmem %s1, 80
  %v1843 = vld [vmem:[%s1842] sm:$0xff]
  %s1844 = scalar_lea.vmem %s1, 88
  %v1845 = vld [vmem:[%s1844] sm:$0xff]
  %v1846 = vmul.f32 %v1839, 0.0
  %v1847 = vmul.f32 %v1841, 0.0
  %v1848 = vadd.f32 %v1846, %v1847
  %v1849 = vadd.f32 %v1848, %v1788
  %v1850 = vmul.f32 %v1839, %v1849
  %v1851 = vadd.f32 %v1850, %v1847
  %v1852 = vadd.f32 %v1851, %v1795
  %v1853 = vmul.f32 %v1839, %v1852
  %v1854 = vmul.f32 %v1841, %v1849
  %v1855 = vadd.f32 %v1853, %v1854
  %v1856 = vadd.f32 %v1855, %v1802
  %v1857 = vmul.f32 %v1839, %v1856
  %v1858 = vmul.f32 %v1841, %v1852
  %v1859 = vadd.f32 %v1857, %v1858
  %v1860 = vadd.f32 %v1859, %v1809
  %v1861 = vmul.f32 %v1839, %v1860
  %v1862 = vmul.f32 %v1841, %v1856
  %v1863 = vadd.f32 %v1861, %v1862
  %v1864 = vadd.f32 %v1863, %v1816
  %v1865 = vmul.f32 %v1839, %v1864
  %v1866 = vmul.f32 %v1841, %v1860
  %v1867 = vadd.f32 %v1865, %v1866
  %v1868 = vadd.f32 %v1867, %v1823
  %v1869 = vmul.f32 %v1839, %v1868
  %v1870 = vmul.f32 %v1841, %v1864
  %v1871 = vadd.f32 %v1869, %v1870
  %v1872 = vadd.f32 %v1871, %v1830
  %v1873 = vmul.f32 %v1839, %v1872
  %v1874 = vmul.f32 %v1841, %v1868
  %v1875 = vadd.f32 %v1873, %v1874
  %v1876 = vadd.f32 %v1875, %v1837
  %v1877 = vld [vmem:[%s4] sm:$0xff]
  %v1878 = vld [vmem:[%s4 + $0x8] sm:$0xff]
  %v1879 = vld [vmem:[%s4 + $0x10] sm:$0xff]
  %v1880 = vld [vmem:[%s4 + $0x18] sm:$0xff]
  %v1882 = vsel %vm965, %v1849, 0
  %v1885 = vsel %vm965, %v1852, 0
  %v1888 = vsel %vm965, %v1856, 0
  %v1891 = vsel %vm965, %v1860, 0
  %v1894 = vsel %vm965, %v1864, 0
  %v1897 = vsel %vm965, %v1868, 0
  %v1900 = vsel %vm965, %v1872, 0
  %v1903 = vsel %vm965, %v1876, 0
  %1905 = vmatprep.subr.mxu0 0.0
  %1906 = vmatpush1.msra.mxu0 0.0
  %1907 = vmatprep.subr.mxu0 0.0
  %1908 = vmatpush1.msra.mxu0 0.0
  %1909 = vmatprep.subr.mxu0 0.0
  %1910 = vmatpush1.msra.mxu0 0.0
  %1911 = vmatprep.subr.mxu0 0.0
  %1912 = vmatpush1.msra.mxu0 0.0
  %1913 = vmatprep.subr.mxu0 0.0
  %1914 = vmatpush1.msra.mxu0 0.0
  %1915 = vmatprep.subr.mxu0 0.0
  %1916 = vmatpush1.msra.mxu0 0.0
  %1917 = vmatprep.subr.mxu0 0.0
  %1918 = vmatpush1.msra.mxu0 0.0
  %1919 = vmatprep.subr.mxu0 0.0
  %1920 = vmatpush1.msra.mxu0 0.0
  %1921 = vmatprep.subr.mxu0 0.0
  %1922 = vmatpush1.msra.mxu0 0.0
  %1923 = vmatprep.subr.mxu0 0.0
  %1924 = vmatpush1.msra.mxu0 0.0
  %1925 = vmatprep.subr.mxu0 0.0
  %1926 = vmatpush1.msra.mxu0 0.0
  %1927 = vmatprep.subr.mxu0 0.0
  %1928 = vmatpush1.msra.mxu0 0.0
  %1929 = vmatprep.subr.mxu0 0.0
  %v1930 = vand.u32 %v1880, 4294901760
  %1931 = vmatpush1.msra.mxu0 %v1930
  %1932 = vmatprep.subr.mxu0 0.0
  %v1933 = vand.u32 %v1879, 4294901760
  %1934 = vmatpush1.msra.mxu0 %v1933
  %1935 = vmatprep.subr.mxu0 0.0
  %v1936 = vand.u32 %v1878, 4294901760
  %1937 = vmatpush1.msra.mxu0 %v1936
  %1938 = vmatprep.subr.mxu0 0.0
  %v1939 = vand.u32 %v1877, 4294901760
  %1940 = vmatpush1.msra.mxu0 %v1939
  %1941 = vmatprep.subr.mxu0 0.0
  %1942 = vmatpush2.msra.mxu0 0.0
  %1943 = vmatprep.subr.mxu0 0.0
  %1944 = vmatpush2.msra.mxu0 0.0
  %1945 = vmatprep.subr.mxu0 0.0
  %1946 = vmatpush2.msra.mxu0 0.0
  %1947 = vmatprep.subr.mxu0 0.0
  %1948 = vmatpush2.msra.mxu0 0.0
  %1949 = vmatprep.subr.mxu0 0.0
  %1950 = vmatpush2.msra.mxu0 0.0
  %1951 = vmatprep.subr.mxu0 0.0
  %1952 = vmatpush2.msra.mxu0 0.0
  %1953 = vmatprep.subr.mxu0 0.0
  %1954 = vmatpush2.msra.mxu0 0.0
  %1955 = vmatprep.subr.mxu0 0.0
  %1956 = vmatpush2.msra.mxu0 0.0
  %1957 = vmatprep.subr.mxu0 0.0
  %1958 = vmatpush2.msra.mxu0 0.0
  %1959 = vmatprep.subr.mxu0 0.0
  %1960 = vmatpush2.msra.mxu0 0.0
  %1961 = vmatprep.subr.mxu0 0.0
  %1962 = vmatpush2.msra.mxu0 0.0
  %1963 = vmatprep.subr.mxu0 0.0
  %1964 = vmatpush2.msra.mxu0 0.0
  %1965 = vmatprep.subr.mxu0 0.0
  %1966 = vmatpush2.msra.mxu0 0.0
  %1967 = vmatprep.subr.mxu0 0.0
  %1968 = vmatpush2.msra.mxu0 0.0
  %1969 = vmatprep.subr.mxu0 0.0
  %1970 = vmatpush2.msra.mxu0 0.0
  %1971 = vmatprep.subr.mxu0 0.0
  %1972 = vmatpush2.msra.mxu0 0.0
  %1973 = vmatprep.mubr.f32.mxu0 0.0
  %v1974 = vand.u32 %v1882, 4294901760
  %v1975 = vsub.f32 %v1882, %v1974
  %v1976 = vand.u32 %v1975, 4294901760
  %v1977 = vsub.f32 %v1975, %v1976
  %v1978 = vand.u32 %v1977, 4294901760
  %1979 = vmatmul.mubr.f32.gmra.mxu0 %v1978
  %v1980 = vpop.f32.mrf.mxu0
  %v1981 = vadd.f32 0.0, %v1980
  %v1982 = vpop.f32.mrf.mxu0
  %1983 = vmatprep.mubr.f32.mxu0 0.0
  %v1984 = vand.u32 %v1885, 4294901760
  %v1985 = vsub.f32 %v1885, %v1984
  %v1986 = vand.u32 %v1985, 4294901760
  %v1987 = vsub.f32 %v1985, %v1986
  %v1988 = vand.u32 %v1987, 4294901760
  %1989 = vmatmul.mubr.f32.gmra.mxu0 %v1988
  %v1990 = vpop.f32.mrf.mxu0
  %v1991 = vadd.f32 0.0, %v1990
  %v1992 = vpop.f32.mrf.mxu0
  %1993 = vmatprep.mubr.f32.mxu0 0.0
  %v1994 = vand.u32 %v1888, 4294901760
  %v1995 = vsub.f32 %v1888, %v1994
  %v1996 = vand.u32 %v1995, 4294901760
  %v1997 = vsub.f32 %v1995, %v1996
  %v1998 = vand.u32 %v1997, 4294901760
  %1999 = vmatmul.mubr.f32.gmra.mxu0 %v1998
  %v2000 = vpop.f32.mrf.mxu0
  %v2001 = vadd.f32 0.0, %v2000
  %v2002 = vpop.f32.mrf.mxu0
  %2003 = vmatprep.mubr.f32.mxu0 0.0
  %v2004 = vand.u32 %v1891, 4294901760
  %v2005 = vsub.f32 %v1891, %v2004
  %v2006 = vand.u32 %v2005, 4294901760
  %v2007 = vsub.f32 %v2005, %v2006
  %v2008 = vand.u32 %v2007, 4294901760
  %2009 = vmatmul.mubr.f32.gmra.mxu0 %v2008
  %v2010 = vpop.f32.mrf.mxu0
  %v2011 = vadd.f32 0.0, %v2010
  %v2012 = vpop.f32.mrf.mxu0
  %2013 = vmatprep.mubr.f32.mxu0 0.0
  %v2014 = vand.u32 %v1894, 4294901760
  %v2015 = vsub.f32 %v1894, %v2014
  %v2016 = vand.u32 %v2015, 4294901760
  %v2017 = vsub.f32 %v2015, %v2016
  %v2018 = vand.u32 %v2017, 4294901760
  %2019 = vmatmul.mubr.f32.gmra.mxu0 %v2018
  %v2020 = vpop.f32.mrf.mxu0
  %v2021 = vadd.f32 0.0, %v2020
  %v2022 = vpop.f32.mrf.mxu0
  %2023 = vmatprep.mubr.f32.mxu0 0.0
  %v2024 = vand.u32 %v1897, 4294901760
  %v2025 = vsub.f32 %v1897, %v2024
  %v2026 = vand.u32 %v2025, 4294901760
  %v2027 = vsub.f32 %v2025, %v2026
  %v2028 = vand.u32 %v2027, 4294901760
  %2029 = vmatmul.mubr.f32.gmra.mxu0 %v2028
  %v2030 = vpop.f32.mrf.mxu0
  %v2031 = vadd.f32 0.0, %v2030
  %v2032 = vpop.f32.mrf.mxu0
  %2033 = vmatprep.mubr.f32.mxu0 0.0
  %v2034 = vand.u32 %v1900, 4294901760
  %v2035 = vsub.f32 %v1900, %v2034
  %v2036 = vand.u32 %v2035, 4294901760
  %v2037 = vsub.f32 %v2035, %v2036
  %v2038 = vand.u32 %v2037, 4294901760
  %2039 = vmatmul.mubr.f32.gmra.mxu0 %v2038
  %v2040 = vpop.f32.mrf.mxu0
  %v2041 = vadd.f32 0.0, %v2040
  %v2042 = vpop.f32.mrf.mxu0
  %2043 = vmatprep.mubr.f32.mxu0 0.0
  %v2044 = vand.u32 %v1903, 4294901760
  %v2045 = vsub.f32 %v1903, %v2044
  %v2046 = vand.u32 %v2045, 4294901760
  %v2047 = vsub.f32 %v2045, %v2046
  %v2048 = vand.u32 %v2047, 4294901760
  %2049 = vmatmul.mubr.f32.gmra.mxu0 %v2048
  %v2050 = vpop.f32.mrf.mxu0
  %v2051 = vadd.f32 0.0, %v2050
  %v2052 = vpop.f32.mrf.mxu0
  %2053 = vdwg.mxu0
  %2054 = vmatprep.subr.mxu0 0.0
  %2055 = vmatpush1.msra.mxu0 0.0
  %2056 = vmatprep.subr.mxu0 0.0
  %2057 = vmatpush1.msra.mxu0 0.0
  %2058 = vmatprep.subr.mxu0 0.0
  %2059 = vmatpush1.msra.mxu0 0.0
  %2060 = vmatprep.subr.mxu0 0.0
  %2061 = vmatpush1.msra.mxu0 0.0
  %2062 = vmatprep.subr.mxu0 0.0
  %2063 = vmatpush1.msra.mxu0 0.0
  %2064 = vmatprep.subr.mxu0 0.0
  %2065 = vmatpush1.msra.mxu0 0.0
  %2066 = vmatprep.subr.mxu0 0.0
  %2067 = vmatpush1.msra.mxu0 0.0
  %2068 = vmatprep.subr.mxu0 0.0
  %2069 = vmatpush1.msra.mxu0 0.0
  %2070 = vmatprep.subr.mxu0 0.0
  %2071 = vmatpush1.msra.mxu0 0.0
  %2072 = vmatprep.subr.mxu0 0.0
  %2073 = vmatpush1.msra.mxu0 0.0
  %2074 = vmatprep.subr.mxu0 0.0
  %2075 = vmatpush1.msra.mxu0 0.0
  %2076 = vmatprep.subr.mxu0 0.0
  %2077 = vmatpush1.msra.mxu0 0.0
  %2078 = vmatprep.subr.mxu0 0.0
  %v2079 = vand.u32 %v1880, 4294901760
  %v2080 = vsub.f32 %v1880, %v2079
  %v2081 = vand.u32 %v2080, 4294901760
  %v2082 = vsub.f32 %v2080, %v2081
  %v2083 = vand.u32 %v2082, 4294901760
  %2084 = vmatpush1.msra.mxu0 %v2083
  %2085 = vmatprep.subr.mxu0 0.0
  %v2086 = vand.u32 %v1879, 4294901760
  %v2087 = vsub.f32 %v1879, %v2086
  %v2088 = vand.u32 %v2087, 4294901760
  %v2089 = vsub.f32 %v2087, %v2088
  %v2090 = vand.u32 %v2089, 4294901760
  %2091 = vmatpush1.msra.mxu0 %v2090
  %2092 = vmatprep.subr.mxu0 0.0
  %v2093 = vand.u32 %v1878, 4294901760
  %v2094 = vsub.f32 %v1878, %v2093
  %v2095 = vand.u32 %v2094, 4294901760
  %v2096 = vsub.f32 %v2094, %v2095
  %v2097 = vand.u32 %v2096, 4294901760
  %2098 = vmatpush1.msra.mxu0 %v2097
  %2099 = vmatprep.subr.mxu0 0.0
  %v2100 = vand.u32 %v1877, 4294901760
  %v2101 = vsub.f32 %v1877, %v2100
  %v2102 = vand.u32 %v2101, 4294901760
  %v2103 = vsub.f32 %v2101, %v2102
  %v2104 = vand.u32 %v2103, 4294901760
  %2105 = vmatpush1.msra.mxu0 %v2104
  %2106 = vmatprep.subr.mxu0 0.0
  %2107 = vmatpush2.msra.mxu0 0.0
  %2108 = vmatprep.subr.mxu0 0.0
  %2109 = vmatpush2.msra.mxu0 0.0
  %2110 = vmatprep.subr.mxu0 0.0
  %2111 = vmatpush2.msra.mxu0 0.0
  %2112 = vmatprep.subr.mxu0 0.0
  %2113 = vmatpush2.msra.mxu0 0.0
  %2114 = vmatprep.subr.mxu0 0.0
  %2115 = vmatpush2.msra.mxu0 0.0
  %2116 = vmatprep.subr.mxu0 0.0
  %2117 = vmatpush2.msra.mxu0 0.0
  %2118 = vmatprep.subr.mxu0 0.0
  %2119 = vmatpush2.msra.mxu0 0.0
  %2120 = vmatprep.subr.mxu0 0.0
  %2121 = vmatpush2.msra.mxu0 0.0
  %2122 = vmatprep.subr.mxu0 0.0
  %2123 = vmatpush2.msra.mxu0 0.0
  %2124 = vmatprep.subr.mxu0 0.0
  %2125 = vmatpush2.msra.mxu0 0.0
  %2126 = vmatprep.subr.mxu0 0.0
  %2127 = vmatpush2.msra.mxu0 0.0
  %2128 = vmatprep.subr.mxu0 0.0
  %2129 = vmatpush2.msra.mxu0 0.0
  %2130 = vmatprep.subr.mxu0 0.0
  %2131 = vmatpush2.msra.mxu0 0.0
  %2132 = vmatprep.subr.mxu0 0.0
  %2133 = vmatpush2.msra.mxu0 0.0
  %2134 = vmatprep.subr.mxu0 0.0
  %2135 = vmatpush2.msra.mxu0 0.0
  %2136 = vmatprep.subr.mxu0 0.0
  %2137 = vmatpush2.msra.mxu0 0.0
  %2138 = vmatprep.mubr.f32.mxu0 0.0
  %v2139 = vand.u32 %v1882, 4294901760
  %2140 = vmatmul.mubr.f32.gmra.mxu0 %v2139
  %v2141 = vpop.f32.mrf.mxu0
  %v2142 = vadd.f32 %v1981, %v2141
  %v2143 = vpop.f32.mrf.mxu0
  %2144 = vmatprep.mubr.f32.mxu0 0.0
  %v2145 = vand.u32 %v1885, 4294901760
  %2146 = vmatmul.mubr.f32.gmra.mxu0 %v2145
  %v2147 = vpop.f32.mrf.mxu0
  %v2148 = vadd.f32 %v1991, %v2147
  %v2149 = vpop.f32.mrf.mxu0
  %2150 = vmatprep.mubr.f32.mxu0 0.0
  %v2151 = vand.u32 %v1888, 4294901760
  %2152 = vmatmul.mubr.f32.gmra.mxu0 %v2151
  %v2153 = vpop.f32.mrf.mxu0
  %v2154 = vadd.f32 %v2001, %v2153
  %v2155 = vpop.f32.mrf.mxu0
  %2156 = vmatprep.mubr.f32.mxu0 0.0
  %v2157 = vand.u32 %v1891, 4294901760
  %2158 = vmatmul.mubr.f32.gmra.mxu0 %v2157
  %v2159 = vpop.f32.mrf.mxu0
  %v2160 = vadd.f32 %v2011, %v2159
  %v2161 = vpop.f32.mrf.mxu0
  %2162 = vmatprep.mubr.f32.mxu0 0.0
  %v2163 = vand.u32 %v1894, 4294901760
  %2164 = vmatmul.mubr.f32.gmra.mxu0 %v2163
  %v2165 = vpop.f32.mrf.mxu0
  %v2166 = vadd.f32 %v2021, %v2165
  %v2167 = vpop.f32.mrf.mxu0
  %2168 = vmatprep.mubr.f32.mxu0 0.0
  %v2169 = vand.u32 %v1897, 4294901760
  %2170 = vmatmul.mubr.f32.gmra.mxu0 %v2169
  %v2171 = vpop.f32.mrf.mxu0
  %v2172 = vadd.f32 %v2031, %v2171
  %v2173 = vpop.f32.mrf.mxu0
  %2174 = vmatprep.mubr.f32.mxu0 0.0
  %v2175 = vand.u32 %v1900, 4294901760
  %2176 = vmatmul.mubr.f32.gmra.mxu0 %v2175
  %v2177 = vpop.f32.mrf.mxu0
  %v2178 = vadd.f32 %v2041, %v2177
  %v2179 = vpop.f32.mrf.mxu0
  %2180 = vmatprep.mubr.f32.mxu0 0.0
  %v2181 = vand.u32 %v1903, 4294901760
  %2182 = vmatmul.mubr.f32.gmra.mxu0 %v2181
  %v2183 = vpop.f32.mrf.mxu0
  %v2184 = vadd.f32 %v2051, %v2183
  %v2185 = vpop.f32.mrf.mxu0
  %2186 = vdwg.mxu0
  %2187 = vmatprep.subr.mxu0 0.0
  %2188 = vmatpush1.msra.mxu0 0.0
  %2189 = vmatprep.subr.mxu0 0.0
  %2190 = vmatpush1.msra.mxu0 0.0
  %2191 = vmatprep.subr.mxu0 0.0
  %2192 = vmatpush1.msra.mxu0 0.0
  %2193 = vmatprep.subr.mxu0 0.0
  %2194 = vmatpush1.msra.mxu0 0.0
  %2195 = vmatprep.subr.mxu0 0.0
  %2196 = vmatpush1.msra.mxu0 0.0
  %2197 = vmatprep.subr.mxu0 0.0
  %2198 = vmatpush1.msra.mxu0 0.0
  %2199 = vmatprep.subr.mxu0 0.0
  %2200 = vmatpush1.msra.mxu0 0.0
  %2201 = vmatprep.subr.mxu0 0.0
  %2202 = vmatpush1.msra.mxu0 0.0
  %2203 = vmatprep.subr.mxu0 0.0
  %2204 = vmatpush1.msra.mxu0 0.0
  %2205 = vmatprep.subr.mxu0 0.0
  %2206 = vmatpush1.msra.mxu0 0.0
  %2207 = vmatprep.subr.mxu0 0.0
  %2208 = vmatpush1.msra.mxu0 0.0
  %2209 = vmatprep.subr.mxu0 0.0
  %2210 = vmatpush1.msra.mxu0 0.0
  %2211 = vmatprep.subr.mxu0 0.0
  %v2212 = vand.u32 %v1880, 4294901760
  %v2213 = vsub.f32 %v1880, %v2212
  %2214 = vmatpush1.msra.mxu0 %v2213
  %2215 = vmatprep.subr.mxu0 0.0
  %v2216 = vand.u32 %v1879, 4294901760
  %v2217 = vsub.f32 %v1879, %v2216
  %2218 = vmatpush1.msra.mxu0 %v2217
  %2219 = vmatprep.subr.mxu0 0.0
  %v2220 = vand.u32 %v1878, 4294901760
  %v2221 = vsub.f32 %v1878, %v2220
  %2222 = vmatpush1.msra.mxu0 %v2221
  %2223 = vmatprep.subr.mxu0 0.0
  %v2224 = vand.u32 %v1877, 4294901760
  %v2225 = vsub.f32 %v1877, %v2224
  %2226 = vmatpush1.msra.mxu0 %v2225
  %2227 = vmatprep.subr.mxu0 0.0
  %2228 = vmatpush2.msra.mxu0 0.0
  %2229 = vmatprep.subr.mxu0 0.0
  %2230 = vmatpush2.msra.mxu0 0.0
  %2231 = vmatprep.subr.mxu0 0.0
  %2232 = vmatpush2.msra.mxu0 0.0
  %2233 = vmatprep.subr.mxu0 0.0
  %2234 = vmatpush2.msra.mxu0 0.0
  %2235 = vmatprep.subr.mxu0 0.0
  %2236 = vmatpush2.msra.mxu0 0.0
  %2237 = vmatprep.subr.mxu0 0.0
  %2238 = vmatpush2.msra.mxu0 0.0
  %2239 = vmatprep.subr.mxu0 0.0
  %2240 = vmatpush2.msra.mxu0 0.0
  %2241 = vmatprep.subr.mxu0 0.0
  %2242 = vmatpush2.msra.mxu0 0.0
  %2243 = vmatprep.subr.mxu0 0.0
  %2244 = vmatpush2.msra.mxu0 0.0
  %2245 = vmatprep.subr.mxu0 0.0
  %2246 = vmatpush2.msra.mxu0 0.0
  %2247 = vmatprep.subr.mxu0 0.0
  %2248 = vmatpush2.msra.mxu0 0.0
  %2249 = vmatprep.subr.mxu0 0.0
  %2250 = vmatpush2.msra.mxu0 0.0
  %2251 = vmatprep.subr.mxu0 0.0
  %2252 = vmatpush2.msra.mxu0 0.0
  %2253 = vmatprep.subr.mxu0 0.0
  %2254 = vmatpush2.msra.mxu0 0.0
  %2255 = vmatprep.subr.mxu0 0.0
  %2256 = vmatpush2.msra.mxu0 0.0
  %2257 = vmatprep.subr.mxu0 0.0
  %2258 = vmatpush2.msra.mxu0 0.0
  %2259 = vmatprep.mubr.f32.mxu0 0.0
  %v2260 = vand.u32 %v1882, 4294901760
  %v2261 = vsub.f32 %v1882, %v2260
  %2262 = vmatmul.mubr.f32.gmra.mxu0 %v2261
  %v2263 = vpop.f32.mrf.mxu0
  %v2264 = vadd.f32 %v2142, %v2263
  %v2265 = vpop.f32.mrf.mxu0
  %2266 = vmatprep.mubr.f32.mxu0 0.0
  %v2267 = vand.u32 %v1885, 4294901760
  %v2268 = vsub.f32 %v1885, %v2267
  %2269 = vmatmul.mubr.f32.gmra.mxu0 %v2268
  %v2270 = vpop.f32.mrf.mxu0
  %v2271 = vadd.f32 %v2148, %v2270
  %v2272 = vpop.f32.mrf.mxu0
  %2273 = vmatprep.mubr.f32.mxu0 0.0
  %v2274 = vand.u32 %v1888, 4294901760
  %v2275 = vsub.f32 %v1888, %v2274
  %2276 = vmatmul.mubr.f32.gmra.mxu0 %v2275
  %v2277 = vpop.f32.mrf.mxu0
  %v2278 = vadd.f32 %v2154, %v2277
  %v2279 = vpop.f32.mrf.mxu0
  %2280 = vmatprep.mubr.f32.mxu0 0.0
  %v2281 = vand.u32 %v1891, 4294901760
  %v2282 = vsub.f32 %v1891, %v2281
  %2283 = vmatmul.mubr.f32.gmra.mxu0 %v2282
  %v2284 = vpop.f32.mrf.mxu0
  %v2285 = vadd.f32 %v2160, %v2284
  %v2286 = vpop.f32.mrf.mxu0
  %2287 = vmatprep.mubr.f32.mxu0 0.0
  %v2288 = vand.u32 %v1894, 4294901760
  %v2289 = vsub.f32 %v1894, %v2288
  %2290 = vmatmul.mubr.f32.gmra.mxu0 %v2289
  %v2291 = vpop.f32.mrf.mxu0
  %v2292 = vadd.f32 %v2166, %v2291
  %v2293 = vpop.f32.mrf.mxu0
  %2294 = vmatprep.mubr.f32.mxu0 0.0
  %v2295 = vand.u32 %v1897, 4294901760
  %v2296 = vsub.f32 %v1897, %v2295
  %2297 = vmatmul.mubr.f32.gmra.mxu0 %v2296
  %v2298 = vpop.f32.mrf.mxu0
  %v2299 = vadd.f32 %v2172, %v2298
  %v2300 = vpop.f32.mrf.mxu0
  %2301 = vmatprep.mubr.f32.mxu0 0.0
  %v2302 = vand.u32 %v1900, 4294901760
  %v2303 = vsub.f32 %v1900, %v2302
  %2304 = vmatmul.mubr.f32.gmra.mxu0 %v2303
  %v2305 = vpop.f32.mrf.mxu0
  %v2306 = vadd.f32 %v2178, %v2305
  %v2307 = vpop.f32.mrf.mxu0
  %2308 = vmatprep.mubr.f32.mxu0 0.0
  %v2309 = vand.u32 %v1903, 4294901760
  %v2310 = vsub.f32 %v1903, %v2309
  %2311 = vmatmul.mubr.f32.gmra.mxu0 %v2310
  %v2312 = vpop.f32.mrf.mxu0
  %v2313 = vadd.f32 %v2184, %v2312
  %v2314 = vpop.f32.mrf.mxu0
  %2315 = vdwg.mxu0
  %2316 = vmatprep.subr.mxu0 0.0
  %2317 = vmatpush1.msra.mxu0 0.0
  %2318 = vmatprep.subr.mxu0 0.0
  %2319 = vmatpush1.msra.mxu0 0.0
  %2320 = vmatprep.subr.mxu0 0.0
  %2321 = vmatpush1.msra.mxu0 0.0
  %2322 = vmatprep.subr.mxu0 0.0
  %2323 = vmatpush1.msra.mxu0 0.0
  %2324 = vmatprep.subr.mxu0 0.0
  %2325 = vmatpush1.msra.mxu0 0.0
  %2326 = vmatprep.subr.mxu0 0.0
  %2327 = vmatpush1.msra.mxu0 0.0
  %2328 = vmatprep.subr.mxu0 0.0
  %2329 = vmatpush1.msra.mxu0 0.0
  %2330 = vmatprep.subr.mxu0 0.0
  %2331 = vmatpush1.msra.mxu0 0.0
  %2332 = vmatprep.subr.mxu0 0.0
  %2333 = vmatpush1.msra.mxu0 0.0
  %2334 = vmatprep.subr.mxu0 0.0
  %2335 = vmatpush1.msra.mxu0 0.0
  %2336 = vmatprep.subr.mxu0 0.0
  %2337 = vmatpush1.msra.mxu0 0.0
  %2338 = vmatprep.subr.mxu0 0.0
  %2339 = vmatpush1.msra.mxu0 0.0
  %2340 = vmatprep.subr.mxu0 0.0
  %v2341 = vand.u32 %v1880, 4294901760
  %2342 = vmatpush1.msra.mxu0 %v2341
  %2343 = vmatprep.subr.mxu0 0.0
  %v2344 = vand.u32 %v1879, 4294901760
  %2345 = vmatpush1.msra.mxu0 %v2344
  %2346 = vmatprep.subr.mxu0 0.0
  %v2347 = vand.u32 %v1878, 4294901760
  %2348 = vmatpush1.msra.mxu0 %v2347
  %2349 = vmatprep.subr.mxu0 0.0
  %v2350 = vand.u32 %v1877, 4294901760
  %2351 = vmatpush1.msra.mxu0 %v2350
  %2352 = vmatprep.subr.mxu0 0.0
  %2353 = vmatpush2.msra.mxu0 0.0
  %2354 = vmatprep.subr.mxu0 0.0
  %2355 = vmatpush2.msra.mxu0 0.0
  %2356 = vmatprep.subr.mxu0 0.0
  %2357 = vmatpush2.msra.mxu0 0.0
  %2358 = vmatprep.subr.mxu0 0.0
  %2359 = vmatpush2.msra.mxu0 0.0
  %2360 = vmatprep.subr.mxu0 0.0
  %2361 = vmatpush2.msra.mxu0 0.0
  %2362 = vmatprep.subr.mxu0 0.0
  %2363 = vmatpush2.msra.mxu0 0.0
  %2364 = vmatprep.subr.mxu0 0.0
  %2365 = vmatpush2.msra.mxu0 0.0
  %2366 = vmatprep.subr.mxu0 0.0
  %2367 = vmatpush2.msra.mxu0 0.0
  %2368 = vmatprep.subr.mxu0 0.0
  %2369 = vmatpush2.msra.mxu0 0.0
  %2370 = vmatprep.subr.mxu0 0.0
  %2371 = vmatpush2.msra.mxu0 0.0
  %2372 = vmatprep.subr.mxu0 0.0
  %2373 = vmatpush2.msra.mxu0 0.0
  %2374 = vmatprep.subr.mxu0 0.0
  %2375 = vmatpush2.msra.mxu0 0.0
  %2376 = vmatprep.subr.mxu0 0.0
  %2377 = vmatpush2.msra.mxu0 0.0
  %2378 = vmatprep.subr.mxu0 0.0
  %2379 = vmatpush2.msra.mxu0 0.0
  %2380 = vmatprep.subr.mxu0 0.0
  %2381 = vmatpush2.msra.mxu0 0.0
  %2382 = vmatprep.subr.mxu0 0.0
  %2383 = vmatpush2.msra.mxu0 0.0
  %2384 = vmatprep.mubr.f32.mxu0 0.0
  %v2385 = vand.u32 %v1882, 4294901760
  %v2386 = vsub.f32 %v1882, %v2385
  %v2387 = vand.u32 %v2386, 4294901760
  %2388 = vmatmul.mubr.f32.gmra.mxu0 %v2387
  %v2389 = vpop.f32.mrf.mxu0
  %v2390 = vadd.f32 %v2264, %v2389
  %v2391 = vpop.f32.mrf.mxu0
  %2392 = vmatprep.mubr.f32.mxu0 0.0
  %v2393 = vand.u32 %v1885, 4294901760
  %v2394 = vsub.f32 %v1885, %v2393
  %v2395 = vand.u32 %v2394, 4294901760
  %2396 = vmatmul.mubr.f32.gmra.mxu0 %v2395
  %v2397 = vpop.f32.mrf.mxu0
  %v2398 = vadd.f32 %v2271, %v2397
  %v2399 = vpop.f32.mrf.mxu0
  %2400 = vmatprep.mubr.f32.mxu0 0.0
  %v2401 = vand.u32 %v1888, 4294901760
  %v2402 = vsub.f32 %v1888, %v2401
  %v2403 = vand.u32 %v2402, 4294901760
  %2404 = vmatmul.mubr.f32.gmra.mxu0 %v2403
  %v2405 = vpop.f32.mrf.mxu0
  %v2406 = vadd.f32 %v2278, %v2405
  %v2407 = vpop.f32.mrf.mxu0
  %2408 = vmatprep.mubr.f32.mxu0 0.0
  %v2409 = vand.u32 %v1891, 4294901760
  %v2410 = vsub.f32 %v1891, %v2409
  %v2411 = vand.u32 %v2410, 4294901760
  %2412 = vmatmul.mubr.f32.gmra.mxu0 %v2411
  %v2413 = vpop.f32.mrf.mxu0
  %v2414 = vadd.f32 %v2285, %v2413
  %v2415 = vpop.f32.mrf.mxu0
  %2416 = vmatprep.mubr.f32.mxu0 0.0
  %v2417 = vand.u32 %v1894, 4294901760
  %v2418 = vsub.f32 %v1894, %v2417
  %v2419 = vand.u32 %v2418, 4294901760
  %2420 = vmatmul.mubr.f32.gmra.mxu0 %v2419
  %v2421 = vpop.f32.mrf.mxu0
  %v2422 = vadd.f32 %v2292, %v2421
  %v2423 = vpop.f32.mrf.mxu0
  %2424 = vmatprep.mubr.f32.mxu0 0.0
  %v2425 = vand.u32 %v1897, 4294901760
  %v2426 = vsub.f32 %v1897, %v2425
  %v2427 = vand.u32 %v2426, 4294901760
  %2428 = vmatmul.mubr.f32.gmra.mxu0 %v2427
  %v2429 = vpop.f32.mrf.mxu0
  %v2430 = vadd.f32 %v2299, %v2429
  %v2431 = vpop.f32.mrf.mxu0
  %2432 = vmatprep.mubr.f32.mxu0 0.0
  %v2433 = vand.u32 %v1900, 4294901760
  %v2434 = vsub.f32 %v1900, %v2433
  %v2435 = vand.u32 %v2434, 4294901760
  %2436 = vmatmul.mubr.f32.gmra.mxu0 %v2435
  %v2437 = vpop.f32.mrf.mxu0
  %v2438 = vadd.f32 %v2306, %v2437
  %v2439 = vpop.f32.mrf.mxu0
  %2440 = vmatprep.mubr.f32.mxu0 0.0
  %v2441 = vand.u32 %v1903, 4294901760
  %v2442 = vsub.f32 %v1903, %v2441
  %v2443 = vand.u32 %v2442, 4294901760
  %2444 = vmatmul.mubr.f32.gmra.mxu0 %v2443
  %v2445 = vpop.f32.mrf.mxu0
  %v2446 = vadd.f32 %v2313, %v2445
  %v2447 = vpop.f32.mrf.mxu0
  %2448 = vdwg.mxu0
  %2449 = vmatprep.subr.mxu0 0.0
  %2450 = vmatpush1.msra.mxu0 0.0
  %2451 = vmatprep.subr.mxu0 0.0
  %2452 = vmatpush1.msra.mxu0 0.0
  %2453 = vmatprep.subr.mxu0 0.0
  %2454 = vmatpush1.msra.mxu0 0.0
  %2455 = vmatprep.subr.mxu0 0.0
  %2456 = vmatpush1.msra.mxu0 0.0
  %2457 = vmatprep.subr.mxu0 0.0
  %2458 = vmatpush1.msra.mxu0 0.0
  %2459 = vmatprep.subr.mxu0 0.0
  %2460 = vmatpush1.msra.mxu0 0.0
  %2461 = vmatprep.subr.mxu0 0.0
  %2462 = vmatpush1.msra.mxu0 0.0
  %2463 = vmatprep.subr.mxu0 0.0
  %2464 = vmatpush1.msra.mxu0 0.0
  %2465 = vmatprep.subr.mxu0 0.0
  %2466 = vmatpush1.msra.mxu0 0.0
  %2467 = vmatprep.subr.mxu0 0.0
  %2468 = vmatpush1.msra.mxu0 0.0
  %2469 = vmatprep.subr.mxu0 0.0
  %2470 = vmatpush1.msra.mxu0 0.0
  %2471 = vmatprep.subr.mxu0 0.0
  %2472 = vmatpush1.msra.mxu0 0.0
  %2473 = vmatprep.subr.mxu0 0.0
  %v2474 = vand.u32 %v1880, 4294901760
  %v2475 = vsub.f32 %v1880, %v2474
  %v2476 = vand.u32 %v2475, 4294901760
  %2477 = vmatpush1.msra.mxu0 %v2476
  %2478 = vmatprep.subr.mxu0 0.0
  %v2479 = vand.u32 %v1879, 4294901760
  %v2480 = vsub.f32 %v1879, %v2479
  %v2481 = vand.u32 %v2480, 4294901760
  %2482 = vmatpush1.msra.mxu0 %v2481
  %2483 = vmatprep.subr.mxu0 0.0
  %v2484 = vand.u32 %v1878, 4294901760
  %v2485 = vsub.f32 %v1878, %v2484
  %v2486 = vand.u32 %v2485, 4294901760
  %2487 = vmatpush1.msra.mxu0 %v2486
  %2488 = vmatprep.subr.mxu0 0.0
  %v2489 = vand.u32 %v1877, 4294901760
  %v2490 = vsub.f32 %v1877, %v2489
  %v2491 = vand.u32 %v2490, 4294901760
  %2492 = vmatpush1.msra.mxu0 %v2491
  %2493 = vmatprep.subr.mxu0 0.0
  %2494 = vmatpush2.msra.mxu0 0.0
  %2495 = vmatprep.subr.mxu0 0.0
  %2496 = vmatpush2.msra.mxu0 0.0
  %2497 = vmatprep.subr.mxu0 0.0
  %2498 = vmatpush2.msra.mxu0 0.0
  %2499 = vmatprep.subr.mxu0 0.0
  %2500 = vmatpush2.msra.mxu0 0.0
  %2501 = vmatprep.subr.mxu0 0.0
  %2502 = vmatpush2.msra.mxu0 0.0
  %2503 = vmatprep.subr.mxu0 0.0
  %2504 = vmatpush2.msra.mxu0 0.0
  %2505 = vmatprep.subr.mxu0 0.0
  %2506 = vmatpush2.msra.mxu0 0.0
  %2507 = vmatprep.subr.mxu0 0.0
  %2508 = vmatpush2.msra.mxu0 0.0
  %2509 = vmatprep.subr.mxu0 0.0
  %2510 = vmatpush2.msra.mxu0 0.0
  %2511 = vmatprep.subr.mxu0 0.0
  %2512 = vmatpush2.msra.mxu0 0.0
  %2513 = vmatprep.subr.mxu0 0.0
  %2514 = vmatpush2.msra.mxu0 0.0
  %2515 = vmatprep.subr.mxu0 0.0
  %2516 = vmatpush2.msra.mxu0 0.0
  %2517 = vmatprep.subr.mxu0 0.0
  %2518 = vmatpush2.msra.mxu0 0.0
  %2519 = vmatprep.subr.mxu0 0.0
  %2520 = vmatpush2.msra.mxu0 0.0
  %2521 = vmatprep.subr.mxu0 0.0
  %2522 = vmatpush2.msra.mxu0 0.0
  %2523 = vmatprep.subr.mxu0 0.0
  %2524 = vmatpush2.msra.mxu0 0.0
  %2525 = vmatprep.mubr.f32.mxu0 0.0
  %v2526 = vand.u32 %v1882, 4294901760
  %2527 = vmatmul.mubr.f32.gmra.mxu0 %v2526
  %v2528 = vpop.f32.mrf.mxu0
  %v2529 = vadd.f32 %v2390, %v2528
  %v2530 = vpop.f32.mrf.mxu0
  %2531 = vmatprep.mubr.f32.mxu0 0.0
  %v2532 = vand.u32 %v1885, 4294901760
  %2533 = vmatmul.mubr.f32.gmra.mxu0 %v2532
  %v2534 = vpop.f32.mrf.mxu0
  %v2535 = vadd.f32 %v2398, %v2534
  %v2536 = vpop.f32.mrf.mxu0
  %2537 = vmatprep.mubr.f32.mxu0 0.0
  %v2538 = vand.u32 %v1888, 4294901760
  %2539 = vmatmul.mubr.f32.gmra.mxu0 %v2538
  %v2540 = vpop.f32.mrf.mxu0
  %v2541 = vadd.f32 %v2406, %v2540
  %v2542 = vpop.f32.mrf.mxu0
  %2543 = vmatprep.mubr.f32.mxu0 0.0
  %v2544 = vand.u32 %v1891, 4294901760
  %2545 = vmatmul.mubr.f32.gmra.mxu0 %v2544
  %v2546 = vpop.f32.mrf.mxu0
  %v2547 = vadd.f32 %v2414, %v2546
  %v2548 = vpop.f32.mrf.mxu0
  %2549 = vmatprep.mubr.f32.mxu0 0.0
  %v2550 = vand.u32 %v1894, 4294901760
  %2551 = vmatmul.mubr.f32.gmra.mxu0 %v2550
  %v2552 = vpop.f32.mrf.mxu0
  %v2553 = vadd.f32 %v2422, %v2552
  %v2554 = vpop.f32.mrf.mxu0
  %2555 = vmatprep.mubr.f32.mxu0 0.0
  %v2556 = vand.u32 %v1897, 4294901760
  %2557 = vmatmul.mubr.f32.gmra.mxu0 %v2556
  %v2558 = vpop.f32.mrf.mxu0
  %v2559 = vadd.f32 %v2430, %v2558
  %v2560 = vpop.f32.mrf.mxu0
  %2561 = vmatprep.mubr.f32.mxu0 0.0
  %v2562 = vand.u32 %v1900, 4294901760
  %2563 = vmatmul.mubr.f32.gmra.mxu0 %v2562
  %v2564 = vpop.f32.mrf.mxu0
  %v2565 = vadd.f32 %v2438, %v2564
  %v2566 = vpop.f32.mrf.mxu0
  %2567 = vmatprep.mubr.f32.mxu0 0.0
  %v2568 = vand.u32 %v1903, 4294901760
  %2569 = vmatmul.mubr.f32.gmra.mxu0 %v2568
  %v2570 = vpop.f32.mrf.mxu0
  %v2571 = vadd.f32 %v2446, %v2570
  %v2572 = vpop.f32.mrf.mxu0
  %2573 = vdwg.mxu0
  %2574 = vmatprep.subr.mxu0 0.0
  %2575 = vmatpush1.msra.mxu0 0.0
  %2576 = vmatprep.subr.mxu0 0.0
  %2577 = vmatpush1.msra.mxu0 0.0
  %2578 = vmatprep.subr.mxu0 0.0
  %2579 = vmatpush1.msra.mxu0 0.0
  %2580 = vmatprep.subr.mxu0 0.0
  %2581 = vmatpush1.msra.mxu0 0.0
  %2582 = vmatprep.subr.mxu0 0.0
  %2583 = vmatpush1.msra.mxu0 0.0
  %2584 = vmatprep.subr.mxu0 0.0
  %2585 = vmatpush1.msra.mxu0 0.0
  %2586 = vmatprep.subr.mxu0 0.0
  %2587 = vmatpush1.msra.mxu0 0.0
  %2588 = vmatprep.subr.mxu0 0.0
  %2589 = vmatpush1.msra.mxu0 0.0
  %2590 = vmatprep.subr.mxu0 0.0
  %2591 = vmatpush1.msra.mxu0 0.0
  %2592 = vmatprep.subr.mxu0 0.0
  %2593 = vmatpush1.msra.mxu0 0.0
  %2594 = vmatprep.subr.mxu0 0.0
  %2595 = vmatpush1.msra.mxu0 0.0
  %2596 = vmatprep.subr.mxu0 0.0
  %2597 = vmatpush1.msra.mxu0 0.0
  %2598 = vmatprep.subr.mxu0 0.0
  %v2599 = vand.u32 %v1880, 4294901760
  %2600 = vmatpush1.msra.mxu0 %v2599
  %2601 = vmatprep.subr.mxu0 0.0
  %v2602 = vand.u32 %v1879, 4294901760
  %2603 = vmatpush1.msra.mxu0 %v2602
  %2604 = vmatprep.subr.mxu0 0.0
  %v2605 = vand.u32 %v1878, 4294901760
  %2606 = vmatpush1.msra.mxu0 %v2605
  %2607 = vmatprep.subr.mxu0 0.0
  %v2608 = vand.u32 %v1877, 4294901760
  %2609 = vmatpush1.msra.mxu0 %v2608
  %2610 = vmatprep.subr.mxu0 0.0
  %2611 = vmatpush2.msra.mxu0 0.0
  %2612 = vmatprep.subr.mxu0 0.0
  %2613 = vmatpush2.msra.mxu0 0.0
  %2614 = vmatprep.subr.mxu0 0.0
  %2615 = vmatpush2.msra.mxu0 0.0
  %2616 = vmatprep.subr.mxu0 0.0
  %2617 = vmatpush2.msra.mxu0 0.0
  %2618 = vmatprep.subr.mxu0 0.0
  %2619 = vmatpush2.msra.mxu0 0.0
  %2620 = vmatprep.subr.mxu0 0.0
  %2621 = vmatpush2.msra.mxu0 0.0
  %2622 = vmatprep.subr.mxu0 0.0
  %2623 = vmatpush2.msra.mxu0 0.0
  %2624 = vmatprep.subr.mxu0 0.0
  %2625 = vmatpush2.msra.mxu0 0.0
  %2626 = vmatprep.subr.mxu0 0.0
  %2627 = vmatpush2.msra.mxu0 0.0
  %2628 = vmatprep.subr.mxu0 0.0
  %2629 = vmatpush2.msra.mxu0 0.0
  %2630 = vmatprep.subr.mxu0 0.0
  %2631 = vmatpush2.msra.mxu0 0.0
  %2632 = vmatprep.subr.mxu0 0.0
  %2633 = vmatpush2.msra.mxu0 0.0
  %2634 = vmatprep.subr.mxu0 0.0
  %2635 = vmatpush2.msra.mxu0 0.0
  %2636 = vmatprep.subr.mxu0 0.0
  %2637 = vmatpush2.msra.mxu0 0.0
  %2638 = vmatprep.subr.mxu0 0.0
  %2639 = vmatpush2.msra.mxu0 0.0
  %2640 = vmatprep.subr.mxu0 0.0
  %2641 = vmatpush2.msra.mxu0 0.0
  %2642 = vmatprep.mubr.f32.mxu0 0.0
  %v2643 = vand.u32 %v1882, 4294901760
  %2644 = vmatmul.mubr.f32.gmra.mxu0 %v2643
  %v2645 = vpop.f32.mrf.mxu0
  %v2646 = vadd.f32 %v2529, %v2645
  %v2647 = vpop.f32.mrf.mxu0
  %2648 = vmatprep.mubr.f32.mxu0 0.0
  %v2649 = vand.u32 %v1885, 4294901760
  %2650 = vmatmul.mubr.f32.gmra.mxu0 %v2649
  %v2651 = vpop.f32.mrf.mxu0
  %v2652 = vadd.f32 %v2535, %v2651
  %v2653 = vpop.f32.mrf.mxu0
  %2654 = vmatprep.mubr.f32.mxu0 0.0
  %v2655 = vand.u32 %v1888, 4294901760
  %2656 = vmatmul.mubr.f32.gmra.mxu0 %v2655
  %v2657 = vpop.f32.mrf.mxu0
  %v2658 = vadd.f32 %v2541, %v2657
  %v2659 = vpop.f32.mrf.mxu0
  %2660 = vmatprep.mubr.f32.mxu0 0.0
  %v2661 = vand.u32 %v1891, 4294901760
  %2662 = vmatmul.mubr.f32.gmra.mxu0 %v2661
  %v2663 = vpop.f32.mrf.mxu0
  %v2664 = vadd.f32 %v2547, %v2663
  %v2665 = vpop.f32.mrf.mxu0
  %2666 = vmatprep.mubr.f32.mxu0 0.0
  %v2667 = vand.u32 %v1894, 4294901760
  %2668 = vmatmul.mubr.f32.gmra.mxu0 %v2667
  %v2669 = vpop.f32.mrf.mxu0
  %v2670 = vadd.f32 %v2553, %v2669
  %v2671 = vpop.f32.mrf.mxu0
  %2672 = vmatprep.mubr.f32.mxu0 0.0
  %v2673 = vand.u32 %v1897, 4294901760
  %2674 = vmatmul.mubr.f32.gmra.mxu0 %v2673
  %v2675 = vpop.f32.mrf.mxu0
  %v2676 = vadd.f32 %v2559, %v2675
  %v2677 = vpop.f32.mrf.mxu0
  %2678 = vmatprep.mubr.f32.mxu0 0.0
  %v2679 = vand.u32 %v1900, 4294901760
  %2680 = vmatmul.mubr.f32.gmra.mxu0 %v2679
  %v2681 = vpop.f32.mrf.mxu0
  %v2682 = vadd.f32 %v2565, %v2681
  %v2683 = vpop.f32.mrf.mxu0
  %2684 = vmatprep.mubr.f32.mxu0 0.0
  %v2685 = vand.u32 %v1903, 4294901760
  %2686 = vmatmul.mubr.f32.gmra.mxu0 %v2685
  %v2687 = vpop.f32.mrf.mxu0
  %v2688 = vadd.f32 %v2571, %v2687
  %v2689 = vpop.f32.mrf.mxu0
  %2690 = vdwg.mxu0
  %v2691 = vadd.f32 %v2646, %v1845
  %v2692 = vadd.f32 %v2652, %v1845
  %v2693 = vadd.f32 %v2658, %v1845
  %v2694 = vadd.f32 %v2664, %v1845
  %v2695 = vadd.f32 %v2670, %v1845
  %v2696 = vadd.f32 %v2676, %v1845
  %v2697 = vadd.f32 %v2682, %v1845
  %v2698 = vadd.f32 %v2688, %v1845
  %v2699 = vmul.f32 %v1843, 0.0
  %v2700 = vadd.f32 %v2699, %v2691
  %vm2701 = vcmp.gt.f32.partialorder %v2700, 1.0
  %v2702 = vsel %vm2701, 1, 0
  %v2703 = vcvt.s32.f32 %v2702
  %v2704 = vmul.f32 %v1843, %v2700
  %v2705 = vsub.f32 1.0, %v2703
  %v2706 = vmul.f32 %v2704, %v2705
  %v2707 = vadd.f32 %v2706, %v2692
  %vm2708 = vcmp.gt.f32.partialorder %v2707, 1.0
  %v2709 = vsel %vm2708, 1, 0
  %v2710 = vcvt.s32.f32 %v2709
  %v2711 = vmul.f32 %v1843, %v2707
  %v2712 = vsub.f32 1.0, %v2710
  %v2713 = vmul.f32 %v2711, %v2712
  %v2714 = vadd.f32 %v2713, %v2693
  %vm2715 = vcmp.gt.f32.partialorder %v2714, 1.0
  %v2716 = vsel %vm2715, 1, 0
  %v2717 = vcvt.s32.f32 %v2716
  %v2718 = vmul.f32 %v1843, %v2714
  %v2719 = vsub.f32 1.0, %v2717
  %v2720 = vmul.f32 %v2718, %v2719
  %v2721 = vadd.f32 %v2720, %v2694
  %vm2722 = vcmp.gt.f32.partialorder %v2721, 1.0
  %v2723 = vsel %vm2722, 1, 0
  %v2724 = vcvt.s32.f32 %v2723
  %v2725 = vmul.f32 %v1843, %v2721
  %v2726 = vsub.f32 1.0, %v2724
  %v2727 = vmul.f32 %v2725, %v2726
  %v2728 = vadd.f32 %v2727, %v2695
  %vm2729 = vcmp.gt.f32.partialorder %v2728, 1.0
  %v2730 = vsel %vm2729, 1, 0
  %v2731 = vcvt.s32.f32 %v2730
  %v2732 = vmul.f32 %v1843, %v2728
  %v2733 = vsub.f32 1.0, %v2731
  %v2734 = vmul.f32 %v2732, %v2733
  %v2735 = vadd.f32 %v2734, %v2696
  %vm2736 = vcmp.gt.f32.partialorder %v2735, 1.0
  %v2737 = vsel %vm2736, 1, 0
  %v2738 = vcvt.s32.f32 %v2737
  %v2739 = vmul.f32 %v1843, %v2735
  %v2740 = vsub.f32 1.0, %v2738
  %v2741 = vmul.f32 %v2739, %v2740
  %v2742 = vadd.f32 %v2741, %v2697
  %vm2743 = vcmp.gt.f32.partialorder %v2742, 1.0
  %v2744 = vsel %vm2743, 1, 0
  %v2745 = vcvt.s32.f32 %v2744
  %v2746 = vmul.f32 %v1843, %v2742
  %v2747 = vsub.f32 1.0, %v2745
  %v2748 = vmul.f32 %v2746, %v2747
  %v2749 = vadd.f32 %v2748, %v2698
  %vm2750 = vcmp.gt.f32.partialorder %v2749, 1.0
  %v2751 = vsel %vm2750, 1, 0
  %v2752 = vcvt.s32.f32 %v2751
  %vm2753 = vcmask 64512
  %2754 = vst.msk [vmem:[%s5] sm:$0xff] %vm2753, %v2703
  %2755 = vst.msk [vmem:[%s5 + $0x8] sm:$0xff] %vm2753, %v2710
  %2756 = vst.msk [vmem:[%s5 + $0x10] sm:$0xff] %vm2753, %v2717
  %2757 = vst.msk [vmem:[%s5 + $0x18] sm:$0xff] %vm2753, %v2724
  %2758 = vst.msk [vmem:[%s5 + $0x20] sm:$0xff] %vm2753, %v2731
  %2759 = vst.msk [vmem:[%s5 + $0x28] sm:$0xff] %vm2753, %v2738
  %2760 = vst.msk [vmem:[%s5 + $0x30] sm:$0xff] %vm2753, %v2745
  %2761 = vst.msk [vmem:[%s5 + $0x38] sm:$0xff] %vm2753, %v2752
  // Predicated region
  $region22: #{synthetic_snn_forward.1} parent=0 // pred_check
    _
  $region23: #{synthetic_snn_forward.1} parent=0 // pred_check_branch
    %2763 = sbr.rel (0) target = $region25
  $region24: #{synthetic_snn_forward.1} parent=0 // pred_region
    _
  $region25: #{synthetic_snn_forward.1} parent=0 // pred_fallthru
    _
  // Predicated region
  $region26: #{synthetic_snn_forward.1} parent=0 // pred_check
    _
  $region27: #{synthetic_snn_forward.1} parent=0 // pred_check_branch
    %2765 = sbr.rel (0) target = $region29
  $region28: #{synthetic_snn_forward.1} parent=0 // pred_region
    _
  $region29: #{synthetic_snn_forward.1} parent=0 // pred_fallthru
    _

</llo_original>
